<compile_context>
chip_gen: v7x
topology: tpu7x:2x2x1
jax: 0.10.0
libtpu: 0.0.40
codegen_flags: <defaults>
</compile_context>

<pallas_src>
import functools
import math

import jax
import jax.numpy as jnp
from jax import lax
from jax.experimental import pallas as pl
from jax.experimental.pallas import tpu as pltpu

RMS_EPS = 1e-07          # RMS_norm.variance_epsilon
LN_EPS = 1e-05           # nn.LayerNorm default eps
_NEG = -1e30             # finite "-inf": masked keys underflow to 0; fully
                         # masked rows stay finite instead of NaN.
_INV_SQRT2 = 0.7071067811865476


# ----------------------------------------------------------------------------
# Hardware-aware budgets / tiling helpers
# ----------------------------------------------------------------------------
@functools.lru_cache(maxsize=None)
def _vmem_capacity_bytes():
    try:
        info = pltpu.get_tpu_info()
        for attr in ("vmem_capacity_bytes", "vmem_size_bytes", "vmem_bytes"):
            v = getattr(info, attr, None)
            if v:
                return int(v)
    except Exception:
        pass
    return 64 << 20      # assume the tightest generation (v7x: 64 MiB / TC)


def _tile_budget():
    # ~5/8 of physical VMEM for the double-buffered blocks: ~80 MiB on 128 MiB
    # parts (v5e/v6e), ~40 MiB on v7x.
    return (_vmem_capacity_bytes() * 5) // 8


def _compiler_params(semantics, working_set_bytes):
    cap = _vmem_capacity_bytes()
    kwargs = {}
    # Only override the scoped-VMEM default (16 MiB on v5e) when the working
    # set actually needs it; never approach physical VMEM.
    if working_set_bytes > (8 << 20):
        kwargs["vmem_limit_bytes"] = int(
            min(working_set_bytes * 3 // 2 + (4 << 20), cap * 3 // 4))
    return pltpu.CompilerParams(dimension_semantics=tuple(semantics), **kwargs)


def _round_up(x, m):
    return ((x + m - 1) // m) * m


def _pick_row_tile(rows, per_row_bytes, fixed_bytes, sublane, budget,
                   max_rows=2048):
    """Largest sublane-aligned row tile whose double-buffered row-proportional
    blocks plus the (already x2) resident weight blocks fit `budget`, capped so
    the row grid has >= 2 steps when possible (v7x has two TensorCores)."""
    rows_al = _round_up(max(rows, 1), sublane)
    tm = min(_round_up(max_rows, sublane), rows_al)
    if rows_al > sublane:
        tm = min(tm, _round_up((rows_al + 1) // 2, sublane))
    while tm > sublane and 2 * tm * per_row_bytes + fixed_bytes > budget:
        tm = _round_up(tm // 2, sublane)
    return tm


def _pick_n_tile(k_in, n_out, w_bpe, budget):
    """Output-column tile for the linear path: whole-N resident weight when it
    fits comfortably, otherwise MXU-friendly multiples."""
    if n_out % 128 != 0:
        return n_out
    if 2 * k_in * n_out * w_bpe <= budget // 2:
        return n_out
    # TODO(synk): prefer 128-multiples on v5e (4x128^2 MXU) vs 256 on v6e/v7x.
    for tn in (4096, 2048, 1024, 512, 256, 128):
        if n_out % tn == 0 and 2 * k_in * tn * w_bpe <= budget // 2:
            return tn
    return 128


@functools.lru_cache(maxsize=None)
def _erf_lowers_in_mosaic():
    """Probe whether lax.erf lowers inside a Pallas TPU kernel; if not, GELU
    falls back to XLA so the script still runs."""
    def _probe(x_ref, o_ref):
        o_ref[...] = lax.erf(x_ref[...])
    try:
        x = jnp.zeros((8, 128), jnp.float32)
        jax.block_until_ready(
            pl.pallas_call(
                _probe,
                out_shape=jax.ShapeDtypeStruct((8, 128), jnp.float32))(x))
        return True
    except Exception:
        return False


# ----------------------------------------------------------------------------
# Kernels
# ----------------------------------------------------------------------------
def _layer_norm_kernel(x_ref, w_ref, b_ref, o_ref):
    x = x_ref[...].astype(jnp.float32)
    mu = jnp.mean(x, axis=-1, keepdims=True)
    xc = x - mu
    var = jnp.mean(xc * xc, axis=-1, keepdims=True)
    o_ref[...] = (xc * lax.rsqrt(var + LN_EPS) * w_ref[...]
                  + b_ref[...]).astype(o_ref.dtype)


def _q_chain_kernel(x_ref, wd_ref, g_ref, wu_ref, o_ref):
    # q_down -> RMS_norm -> q_up, narrow intermediate kept in VMEM/regs.
    cq = jnp.dot(x_ref[...], wd_ref[...], preferred_element_type=jnp.float32)
    if x_ref.dtype != jnp.float32:
        cq = cq.astype(x_ref.dtype).astype(jnp.float32)   # torch dtype parity
    var = jnp.mean(cq * cq, axis=-1, keepdims=True)
    y = g_ref[...] * (cq * lax.rsqrt(var + RMS_EPS))
    y = y.astype(x_ref.dtype)                              # native dtype -> MXU
    o_ref[...] = jnp.dot(y, wu_ref[...],
                         preferred_element_type=jnp.float32).astype(o_ref.dtype)


def _kv_chain_kernel(x_ref, wc_ref, wr_ref, g_ref, wu_ref, kv_ref, rope_ref):
    # kv_down -> split (done by splitting the weight columns) -> RMS -> kv_up.
    x = x_ref[...]
    rope_ref[...] = jnp.dot(
        x, wr_ref[...], preferred_element_type=jnp.float32).astype(rope_ref.dtype)
    ckv = jnp.dot(x, wc_ref[...], preferred_element_type=jnp.float32)
    if x_ref.dtype != jnp.float32:
        ckv = ckv.astype(x_ref.dtype).astype(jnp.float32)  # torch dtype parity
    var = jnp.mean(ckv * ckv, axis=-1, keepdims=True)
    y = (g_ref[...] * (ckv * lax.rsqrt(var + RMS_EPS))).astype(x_ref.dtype)
    kv_ref[...] = jnp.dot(y, wu_ref[...],
                          preferred_element_type=jnp.float32).astype(kv_ref.dtype)


def _make_matmul_kernel(has_bias, has_residual, activation):
    """x @ w (+ bias) (-> exact-erf GELU) (+ residual), f32 epilogue."""
    def kernel(*refs):
        x_ref, w_ref = refs[0], refs[1]
        idx = 2
        b_ref = r_ref = None
        if has_bias:
            b_ref = refs[idx]; idx += 1
        if has_residual:
            r_ref = refs[idx]; idx += 1
        o_ref = refs[idx]
        # Operands go to the MXU in their native dtype; accumulate in f32.
        y = jnp.dot(x_ref[...], w_ref[...], preferred_element_type=jnp.float32)
        if has_bias:
            y = y + b_ref[...]
        if activation == "gelu":
            y = 0.5 * y * (1.0 + lax.erf(y * _INV_SQRT2))  # exact nn.GELU()
        if has_residual:
            y = y + r_ref[...].astype(jnp.float32)
        o_ref[...] = y.astype(o_ref.dtype)
    return kernel


def _mla_attention_kernel(q_ref, k_ref, v_ref, bias_ref, o_ref,
                          m_sc, l_sc, acc_sc):
    """One (batch, head) pair, online softmax over KV chunks (last grid axis)."""
    ki = pl.program_id(2)

    @pl.when(ki == 0)
    def _():
        m_sc[...] = jnp.full_like(m_sc, _NEG)
        l_sc[...] = jnp.zeros_like(l_sc)
        acc_sc[...] = jnp.zeros_like(acc_sc)

    q = q_ref[0, 0]                               # (s_pad, dq_pad)  (pre-scaled)
    k = k_ref[0, 0]                               # (kv_t, dq_pad)
    v = v_ref[0, 0]                               # (kv_t, dv_pad)
    scores = lax.dot_general(q, k, (((1,), (1,)), ((), ())),
                             preferred_element_type=jnp.float32)
    scores = scores + bias_ref[0]                 # (1, kv_t) additive key bias

    m_prev = m_sc[...]
    m_new = jnp.maximum(m_prev, jnp.max(scores, axis=-1, keepdims=True))
    alpha = jnp.exp(m_prev - m_new)
    p = jnp.exp(scores - m_new)
    l_sc[...] = alpha * l_sc[...] + jnp.sum(p, axis=-1, keepdims=True)
    acc_sc[...] = alpha * acc_sc[...] + jnp.dot(
        p.astype(v.dtype), v, preferred_element_type=jnp.float32)
    m_sc[...] = m_new

    @pl.when(ki == pl.num_programs(2) - 1)
    def _():
        inv_l = pl.reciprocal(l_sc[...], approx=True)     # EUP slot, off VALU
        o_ref[0] = (acc_sc[...] * inv_l).astype(o_ref.dtype)


# ----------------------------------------------------------------------------
# Row-tiled pallas_call wrapper (layernorm / fused MLA chains)
# ----------------------------------------------------------------------------
def _row_tiled_call(kernel, x, aux, out_dims, out_dtypes):
    """Run `kernel(x_tile, *aux, *out_tiles)` over row tiles of x. aux arrays
    are fully resident (constant index_map); outputs are row-aligned."""
    *lead, k_in = x.shape
    rows = math.prod(lead)
    x2 = x.reshape(rows, k_in)

    budget = _tile_budget()
    sublane = 16 if x.dtype == jnp.bfloat16 else 8
    in_bpe = jnp.dtype(x.dtype).itemsize
    per_row = k_in * in_bpe + sum(
        d * jnp.dtype(t).itemsize for d, t in zip(out_dims, out_dtypes))
    fixed = 2 * sum(a.size * jnp.dtype(a.dtype).itemsize for a in aux)
    tm = _pick_row_tile(rows, per_row, fixed, sublane, budget)
    rows_p = _round_up(rows, tm)
    if rows_p != rows:
        x2 = jnp.pad(x2, ((0, rows_p - rows), (0, 0)))

    in_specs = [pl.BlockSpec((tm, k_in), lambda i: (i, 0))]
    for a in aux:
        in_specs.append(pl.BlockSpec(a.shape, lambda i, _nd=a.ndim: (0,) * _nd))
    out_specs = [pl.BlockSpec((tm, d), lambda i: (i, 0)) for d in out_dims]
    out_shape = [jax.ShapeDtypeStruct((rows_p, d), t)
                 for d, t in zip(out_dims, out_dtypes)]
    multi = len(out_dims) > 1
    ws = 2 * tm * per_row + fixed

    outs = pl.pallas_call(
        kernel,
        out_shape=tuple(out_shape) if multi else out_shape[0],
        grid=(rows_p // tm,),
        in_specs=in_specs,
        out_specs=tuple(out_specs) if multi else out_specs[0],
        compiler_params=_compiler_params(("parallel",), ws),
    )(x2, *aux)
    if not multi:
        outs = (outs,)
    outs = tuple(o[:rows].reshape(*lead, d) for o, d in zip(outs, out_dims))
    return outs if multi else outs[0]


def layer_norm(x, weight, bias):
    d = x.shape[-1]
    return _row_tiled_call(
        _layer_norm_kernel, x,
        [weight.reshape(1, d).astype(jnp.float32),
         bias.reshape(1, d).astype(jnp.float32)],
        [d], [x.dtype])


def mla_q_chain(xn, w_down, gain, w_up):
    return _row_tiled_call(
        _q_chain_kernel, xn,
        [w_down, gain.reshape(1, -1).astype(jnp.float32), w_up],
        [w_up.shape[-1]], [xn.dtype])


def mla_kv_chain(xn, w_down_c, w_down_rope, gain, w_up):
    return _row_tiled_call(
        _kv_chain_kernel, xn,
        [w_down_c, w_down_rope, gain.reshape(1, -1).astype(jnp.float32), w_up],
        [w_up.shape[-1], w_down_rope.shape[-1]], [xn.dtype, xn.dtype])


# ----------------------------------------------------------------------------
# Row + N tiled fused linear (bias / GELU / residual epilogues)
# ----------------------------------------------------------------------------
def fused_linear(x, w, *, bias=None, residual=None, activation=None,
                 out_dtype=None):
    *lead, k_in = x.shape
    rows = math.prod(lead)
    n_out = w.shape[-1]
    out_dtype = out_dtype if out_dtype is not None else x.dtype

    act_in_kernel = activation
    if activation == "gelu" and not _erf_lowers_in_mosaic():
        act_in_kernel = None          # graceful fallback: GELU applied in XLA

    budget = _tile_budget()
    sublane = 16 if x.dtype == jnp.bfloat16 else 8
    in_bpe = jnp.dtype(x.dtype).itemsize
    out_bpe = jnp.dtype(out_dtype).itemsize
    w_bpe = jnp.dtype(w.dtype).itemsize

    tn = _pick_n_tile(k_in, n_out, w_bpe, budget)
    fixed = 2 * k_in * tn * w_bpe                         # resident weight (x2)
    per_row = k_in * in_bpe + tn * out_bpe
    if bias is not None:
        fixed += 2 * tn * 4
    if residual is not None:
        per_row += tn * jnp.dtype(residual.dtype).itemsize
    tm = _pick_row_tile(rows, per_row, fixed, sublane, budget)

    rows_p = _round_up(rows, tm)
    x2 = x.reshape(rows, k_in)
    if rows_p != rows:
        x2 = jnp.pad(x2, ((0, rows_p - rows), (0, 0)))

    args = [x2, w]
    in_specs = [pl.BlockSpec((tm, k_in), lambda i, j: (i, 0)),
                pl.BlockSpec((k_in, tn), lambda i, j: (0, j))]
    if bias is not None:
        args.append(bias.reshape(1, n_out).astype(jnp.float32))
        in_specs.append(pl.BlockSpec((1, tn), lambda i, j: (0, j)))
    if residual is not None:
        r2 = residual.reshape(rows, n_out)
        if rows_p != rows:
            r2 = jnp.pad(r2, ((0, rows_p - rows), (0, 0)))
        args.append(r2)
        in_specs.append(pl.BlockSpec((tm, tn), lambda i, j: (i, j)))

    kernel = _make_matmul_kernel(bias is not None, residual is not None,
                                 act_in_kernel)
    ws = 2 * tm * per_row + fixed
    out = pl.pallas_call(
        kernel,
        out_shape=jax.ShapeDtypeStruct((rows_p, n_out), out_dtype),
        grid=(rows_p // tm, n_out // tn),
        in_specs=in_specs,
        out_specs=pl.BlockSpec((tm, tn), lambda i, j: (i, j)),
        compiler_params=_compiler_params(("parallel", "parallel"), ws),
    )(*args)

    if activation == "gelu" and act_in_kernel is None:
        out = jax.nn.gelu(out, approximate=False)   # fallback path (no residual
                                                    # is ever combined with gelu)
    return out[:rows].reshape(*lead, n_out)


# ----------------------------------------------------------------------------
# Flash-style MLA attention
# ----------------------------------------------------------------------------
def mla_attention(query, key, value, patch_mask):
    """query/key: (b, h, s, dq), value: (b, h, s, dv), patch_mask: (b, s).
    Returns lane-dense (b, s, h * round_up(dv, 128)); padded value lanes are
    exactly zero."""
    b, h, s, dq = query.shape
    dv = value.shape[-1]
    dqp = _round_up(dq, 128)
    dvp = _round_up(dv, 128)
    s8 = _round_up(s, 8)
    kv_t = min(512, s8)
    s_pad = _round_up(s8, kv_t)

    def pad4(x, sp, dp):
        _, _, s0, d0 = x.shape
        if sp != s0 or dp != d0:
            x = jnp.pad(x, ((0, 0), (0, 0), (0, sp - s0), (0, dp - d0)))
        return x

    qp = pad4(query, s_pad, dqp)
    kp = pad4(key, s_pad, dqp)
    vp = pad4(value, s_pad, dvp)
    bias = jnp.where(patch_mask == 0, _NEG, 0.0).astype(jnp.float32)   # (b, s)
    if s_pad != s:
        bias = jnp.pad(bias, ((0, 0), (0, s_pad - s)), constant_values=_NEG)
    bias = bias.reshape(b, 1, s_pad)

    ws = 2 * 4 * (s_pad * dqp + kv_t * dqp + kv_t * dvp + kv_t + s_pad * dvp) \
        + 4 * s_pad * (dvp + 2)
    out = pl.pallas_call(
        _mla_attention_kernel,
        out_shape=jax.ShapeDtypeStruct((b, s_pad, h * dvp), query.dtype),
        grid=(b, h, s_pad // kv_t),
        in_specs=[
            pl.BlockSpec((1, 1, s_pad, dqp), lambda bi, hi, ki: (bi, hi, 0, 0)),
            pl.BlockSpec((1, 1, kv_t, dqp), lambda bi, hi, ki: (bi, hi, ki, 0)),
            pl.BlockSpec((1, 1, kv_t, dvp), lambda bi, hi, ki: (bi, hi, ki, 0)),
            pl.BlockSpec((1, 1, kv_t), lambda bi, hi, ki: (bi, 0, ki)),
        ],
        out_specs=pl.BlockSpec((1, s_pad, dvp), lambda bi, hi, ki: (bi, 0, hi)),
        scratch_shapes=[
            pltpu.VMEM((s_pad, 1), jnp.float32),      # running max
            pltpu.VMEM((s_pad, 1), jnp.float32),      # running denom
            pltpu.VMEM((s_pad, dvp), jnp.float32),    # running accumulator
        ],
        compiler_params=_compiler_params(("parallel", "parallel", "arbitrary"),
                                         ws),
    )(qp, kp, vp, bias)
    return out[:, :s]


# ----------------------------------------------------------------------------
# RoPE (tiny elementwise glue; left to XLA on purpose)
# ----------------------------------------------------------------------------
def _rope_tables(d_rope, length):
    inv_freq = 1.0 / (10000.0 ** (jnp.arange(0, d_rope, 2, dtype=jnp.float32)
                                  / d_rope))
    freqs = jnp.outer(jnp.arange(length, dtype=jnp.float32), inv_freq)
    emb = jnp.concatenate([freqs, freqs], axis=-1)
    return jnp.cos(emb), jnp.sin(emb)


def _rope_reshape(x):
    b, h, s, d = x.shape
    return x.reshape(b, h, s, d // 2, 2).transpose(0, 1, 2, 4, 3).reshape(
        b, h, s, d)


def _rope_rotate(x):
    half = x.shape[-1] // 2
    return jnp.concatenate([-x[..., half:], x[..., :half]], axis=-1)


def _rope_apply(q, k, cos, sin, pos_ids):
    cos_p = cos[pos_ids][:, None]
    sin_p = sin[pos_ids][:, None]
    q = _rope_reshape(q)
    k = _rope_reshape(k)
    q_emb = q * cos_p + _rope_rotate(q) * sin_p
    k_emb = k * cos_p + _rope_rotate(k) * sin_p
    return q_emb, k_emb


# ----------------------------------------------------------------------------
# VisionEncoder forward (Pallas path)
# ----------------------------------------------------------------------------
def vision_encoder_forward(params, imgs, patch_mask, *, head_num, dk):
    b, s, d = imgs.shape
    d_rope = dk // 2
    dc_kv = dk // 8
    q_head_dim = dk + d_rope
    dvp = _round_up(dk, 128)
    attn_scale = q_head_dim ** (-0.5)

    residual = imgs
    xn = layer_norm(imgs, params["attn_norm_w"], params["attn_norm_b"])
    pos_ids = jnp.broadcast_to(jnp.arange(s)[None, :], (b, s))

    # ---- Vit_MLA: fused low-rank chains. The 1/sqrt(q_head_dim) scale is
    # folded into the q_up weight (RoPE is linear, so this is exactly the same
    # as scaling the attention scores).
    q = mla_q_chain(xn, params["q_down_w"], params["q_down_norm_g"],
                    params["q_up_w"] * attn_scale)
    q = q.reshape(b, s, head_num, q_head_dim).transpose(0, 2, 1, 3)
    q_nope, q_rope = q[..., :dk], q[..., dk:]

    kv, k_rope_flat = mla_kv_chain(
        xn, params["kv_down_w"][:, :dc_kv], params["kv_down_w"][:, dc_kv:],
        params["kv_norm_g"], params["kv_up_w"])
    kv = kv.reshape(b, s, head_num, 2 * dk).transpose(0, 2, 1, 3)
    k_nope, value = kv[..., :dk], kv[..., dk:]
    k_rope = k_rope_flat.reshape(b, s, 1, d_rope).transpose(0, 2, 1, 3)

    cos, sin = _rope_tables(d_rope, s)
    q_rope, k_rope = _rope_apply(q_rope, k_rope, cos, sin, pos_ids)
    query = jnp.concatenate([q_nope, q_rope], axis=-1)
    key = jnp.concatenate(
        [k_nope, jnp.broadcast_to(k_rope, (b, head_num, s, d_rope))], axis=-1)

    attn = mla_attention(query, key, value, patch_mask)   # (b, s, h*dvp)

    # out_proj: the value-lane padding is absorbed by zero rows of the weight,
    # and the residual add is fused into the same kernel.
    w_out = params["out_proj_w"].reshape(head_num, dk, d)
    w_out = jnp.pad(w_out, ((0, 0), (0, dvp - dk), (0, 0))).reshape(
        head_num * dvp, d)
    x = fused_linear(attn, w_out, residual=residual)

    # ---- FFN block: bias + exact-erf GELU fused into ffn_w1, bias + residual
    # fused into ffn_w2.
    xn2 = layer_norm(x, params["ffn_norm_w"], params["ffn_norm_b"])
    hdn = fused_linear(xn2, params["ffn_w1"], bias=params["ffn_b1"],
                       activation="gelu")
    out = fused_linear(hdn, params["ffn_w2"], bias=params["ffn_b2"], residual=x)
    return out


# ----------------------------------------------------------------------------
# Parameters + pure-JAX reference (in-script correctness check)
# ----------------------------------------------------------------------------
def init_params(key, d, dk, head_num):
    d_rope = dk // 2
    dc_kv = dk // 8
    dc_q = d // 4
    q_head_dim = dk + d_rope
    meg_d = 2 * dk
    dff = 4 * d
    ks = jax.random.split(key, 7)

    def w(k, fan_in, fan_out):
        scale = 1.0 / math.sqrt(fan_in)
        return jax.random.uniform(k, (fan_in, fan_out), jnp.float32,
                                  -scale, scale)

    return {
        "attn_norm_w": jnp.ones((1, d), jnp.float32),
        "attn_norm_b": jnp.zeros((1, d), jnp.float32),
        "q_down_w": w(ks[0], d, dc_q),
        "q_down_norm_g": jnp.ones((1, dc_q), jnp.float32),
        "q_up_w": w(ks[1], dc_q, head_num * q_head_dim),
        "kv_down_w": w(ks[2], d, dc_kv + d_rope),
        "kv_norm_g": jnp.ones((1, dc_kv), jnp.float32),
        "kv_up_w": w(ks[3], dc_kv, head_num * meg_d),
        "out_proj_w": w(ks[4], head_num * dk, d),
        "ffn_norm_w": jnp.ones((1, d), jnp.float32),
        "ffn_norm_b": jnp.zeros((1, d), jnp.float32),
        "ffn_w1": w(ks[5], d, dff),
        "ffn_b1": jnp.zeros((1, dff), jnp.float32),
        "ffn_w2": w(ks[6], dff, d),
        "ffn_b2": jnp.zeros((1, d), jnp.float32),
    }


def _reference_forward(params, imgs, patch_mask, *, head_num, dk):
    def ln(x, w, b):
        xf = x.astype(jnp.float32)
        mu = xf.mean(-1, keepdims=True)
        var = ((xf - mu) ** 2).mean(-1, keepdims=True)
        return (xf - mu) * lax.rsqrt(var + LN_EPS) * w.reshape(-1) + b.reshape(-1)

    def rms(x, g):
        xf = x.astype(jnp.float32)
        var = (xf * xf).mean(-1, keepdims=True)
        return g.reshape(-1) * (xf * lax.rsqrt(var + RMS_EPS)).astype(x.dtype)

    b, s, d = imgs.shape
    d_rope = dk // 2
    dc_kv = dk // 8
    q_head_dim = dk + d_rope

    residual = imgs
    xn = ln(imgs, params["attn_norm_w"], params["attn_norm_b"])
    pos_ids = jnp.broadcast_to(jnp.arange(s)[None, :], (b, s))
    mask = jnp.where(patch_mask == 0, -jnp.inf, 0.0)[:, None, None, :]

    cq = xn @ params["q_down_w"]
    q = rms(cq, params["q_down_norm_g"]) @ params["q_up_w"]
    q = q.reshape(b, s, head_num, q_head_dim).transpose(0, 2, 1, 3)
    q_nope, q_rope = q[..., :dk], q[..., dk:]

    ckv = xn @ params["kv_down_w"]
    c_kv, k_rope = ckv[..., :dc_kv], ckv[..., dc_kv:]
    kv = rms(c_kv, params["kv_norm_g"]) @ params["kv_up_w"]
    kv = kv.reshape(b, s, head_num, 2 * dk).transpose(0, 2, 1, 3)
    k_nope, value = kv[..., :dk], kv[..., dk:]
    k_rope = k_rope.reshape(b, s, 1, d_rope).transpose(0, 2, 1, 3)

    cos, sin = _rope_tables(d_rope, s)
    q_rope, k_rope = _rope_apply(q_rope, k_rope, cos, sin, pos_ids)
    query = jnp.concatenate([q_nope, q_rope], axis=-1)
    key = jnp.concatenate(
        [k_nope, jnp.broadcast_to(k_rope, (b, head_num, s, d_rope))], axis=-1)

    scores = jnp.einsum("bhqd,bhkd->bhqk", query, key) / math.sqrt(q_head_dim)
    probs = jax.nn.softmax(scores + mask, axis=-1)
    attn = jnp.einsum("bhqk,bhkd->bhqd", probs, value)
    attn = attn.transpose(0, 2, 1, 3).reshape(b, s, head_num * dk)
    attn_out = attn @ params["out_proj_w"]

    x = residual + attn_out
    xn2 = ln(x, params["ffn_norm_w"], params["ffn_norm_b"])
    hdn = jax.nn.gelu(xn2 @ params["ffn_w1"] + params["ffn_b1"].reshape(-1),
                      approximate=False)
    ffn = hdn @ params["ffn_w2"] + params["ffn_b2"].reshape(-1)
    return x + ffn


# ----------------------------------------------------------------------------
if __name__ == "__main__":
    # Small shapes consistent with the module: imgs [batch, num_patches, d].
    batch, seq, d, dk, head_num = 2, 16, 128, 64, 2

    key = jax.random.PRNGKey(0)
    k_img, k_par = jax.random.split(key)
    imgs = jax.random.normal(k_img, (batch, seq, d), dtype=jnp.float32)
    # patch_mask: last 3 patches of every image are masked out.
    patch_mask = jnp.ones((batch, seq), jnp.float32).at[:, -3:].set(0.0)
    params = init_params(k_par, d, dk, head_num)

    fwd = jax.jit(functools.partial(vision_encoder_forward,
                                    head_num=head_num, dk=dk))
    out = jax.block_until_ready(fwd(params, imgs, patch_mask))

    ref = _reference_forward(params, imgs, patch_mask, head_num=head_num, dk=dk)
    assert out.shape == ref.shape == (batch, seq, d)
    assert bool(jnp.all(jnp.isfinite(out)))
    max_err = float(jnp.max(jnp.abs(out - ref)))
    assert jnp.allclose(out, ref, atol=2e-3, rtol=2e-3), max_err

    print("KERNEL_OK")
</pallas_src>

<mosaic_0001>
module attributes {stable_mosaic.version = 11 : i64} {
  func.func @_layer_norm_kernel(%arg0: i32, %arg1: memref<16x128xf32, #tpu.memory_space<vmem>>, %arg2: memref<1x128xf32, #tpu.memory_space<vmem>>, %arg3: memref<1x128xf32, #tpu.memory_space<vmem>>, %arg4: memref<16x128xf32, #tpu.memory_space<vmem>>) attributes {dimension_semantics = [#tpu.dimension_semantics<parallel>], iteration_bounds = array<i64: 2>, scalar_prefetch = 0 : i64, scratch_operands = 0 : i64, tpu.core_type = #tpu.core_type<tc>, window_params = [{transform_indices = @transform_0, window_bounds = array<i64: 16, 128>}, {pipeline_mode = #tpu.pipeline_mode<synchronous>, transform_indices = @transform_1, window_bounds = array<i64: 1, 128>}, {pipeline_mode = #tpu.pipeline_mode<synchronous>, transform_indices = @transform_2, window_bounds = array<i64: 1, 128>}, {transform_indices = @transform_3, window_bounds = array<i64: 16, 128>}]} {
    %c0 = arith.constant 0 : index
    %c0_0 = arith.constant 0 : index
    %0 = vector.load %arg1[%c0, %c0_0] : memref<16x128xf32, #tpu.memory_space<vmem>>, vector<16x128xf32>
    %cst = arith.constant dense<0.000000e+00> : vector<16xf32>
    %1 = vector.multi_reduction <add>, %0, %cst [1] : vector<16x128xf32> to vector<16xf32>
    %2 = vector.shape_cast %1 : vector<16xf32> to vector<16x1xf32>
    %cst_1 = arith.constant 1.280000e+02 : f32
    %3 = vector.broadcast %cst_1 : f32 to vector<16x1xf32>
    %4 = arith.divf %2, %3 : vector<16x1xf32>
    %5 = vector.broadcast %4 : vector<16x1xf32> to vector<16x128xf32>
    %6 = arith.subf %0, %5 : vector<16x128xf32>
    %7 = arith.mulf %6, %6 : vector<16x128xf32>
    %cst_2 = arith.constant dense<0.000000e+00> : vector<16xf32>
    %8 = vector.multi_reduction <add>, %7, %cst_2 [1] : vector<16x128xf32> to vector<16xf32>
    %9 = vector.shape_cast %8 : vector<16xf32> to vector<16x1xf32>
    %cst_3 = arith.constant 1.280000e+02 : f32
    %10 = vector.broadcast %cst_3 : f32 to vector<16x1xf32>
    %11 = arith.divf %9, %10 : vector<16x1xf32>
    %cst_4 = arith.constant 9.99999974E-6 : f32
    %12 = vector.broadcast %cst_4 : f32 to vector<16x1xf32>
    %13 = arith.addf %11, %12 : vector<16x1xf32>
    %14 = math.rsqrt %13 : vector<16x1xf32>
    %15 = vector.broadcast %14 : vector<16x1xf32> to vector<16x128xf32>
    %16 = arith.mulf %6, %15 : vector<16x128xf32>
    %c0_5 = arith.constant 0 : index
    %c0_6 = arith.constant 0 : index
    %17 = vector.load %arg2[%c0_5, %c0_6] : memref<1x128xf32, #tpu.memory_space<vmem>>, vector<1x128xf32>
    %18 = vector.broadcast %17 : vector<1x128xf32> to vector<16x128xf32>
    %19 = arith.mulf %16, %18 : vector<16x128xf32>
    %c0_7 = arith.constant 0 : index
    %c0_8 = arith.constant 0 : index
    %20 = vector.load %arg3[%c0_7, %c0_8] : memref<1x128xf32, #tpu.memory_space<vmem>>, vector<1x128xf32>
    %21 = vector.broadcast %20 : vector<1x128xf32> to vector<16x128xf32>
    %22 = arith.addf %19, %21 : vector<16x128xf32>
    %c0_9 = arith.constant 0 : index
    %c0_10 = arith.constant 0 : index
    %23 = vector.load %arg4[%c0_9, %c0_10] : memref<16x128xf32, #tpu.memory_space<vmem>>, vector<16x128xf32>
    tpu.vector_store %arg4[%c0_9, %c0_10], %22 {strides = array<i32>} : memref<16x128xf32, #tpu.memory_space<vmem>>, vector<16x128xf32>,
    return
  }
  func.func @transform_0(%arg0: i32) -> (i32, i32) {
    %c0_i32 = arith.constant 0 : i32
    %c0_i32_0 = arith.constant 0 : i32
    return %arg0, %c0_i32 : i32, i32
  }
  func.func @transform_1(%arg0: i32) -> (i32, i32) {
    %c0_i32 = arith.constant 0 : i32
    %c0_i32_0 = arith.constant 0 : i32
    %c0_i32_1 = arith.constant 0 : i32
    return %c0_i32, %c0_i32_0 : i32, i32
  }
  func.func @transform_2(%arg0: i32) -> (i32, i32) {
    %c0_i32 = arith.constant 0 : i32
    %c0_i32_0 = arith.constant 0 : i32
    %c0_i32_1 = arith.constant 0 : i32
    return %c0_i32, %c0_i32_0 : i32, i32
  }
  func.func @transform_3(%arg0: i32) -> (i32, i32) {
    %c0_i32 = arith.constant 0 : i32
    %c0_i32_0 = arith.constant 0 : i32
    return %arg0, %c0_i32 : i32, i32
  }
}

module attributes {stable_mosaic.version = 11 : i64} {
  func.func @_q_chain_kernel(%arg0: i32, %arg1: memref<16x128xf32, #tpu.memory_space<vmem>>, %arg2: memref<128x32xf32, #tpu.memory_space<vmem>>, %arg3: memref<1x32xf32, #tpu.memory_space<vmem>>, %arg4: memref<32x192xf32, #tpu.memory_space<vmem>>, %arg5: memref<16x192xf32, #tpu.memory_space<vmem>>) attributes {dimension_semantics = [#tpu.dimension_semantics<parallel>], iteration_bounds = array<i64: 2>, scalar_prefetch = 0 : i64, scratch_operands = 0 : i64, tpu.core_type = #tpu.core_type<tc>, window_params = [{transform_indices = @transform_0, window_bounds = array<i64: 16, 128>}, {pipeline_mode = #tpu.pipeline_mode<synchronous>, transform_indices = @transform_1, window_bounds = array<i64: 128, 32>}, {pipeline_mode = #tpu.pipeline_mode<synchronous>, transform_indices = @transform_2, window_bounds = array<i64: 1, 32>}, {pipeline_mode = #tpu.pipeline_mode<synchronous>, transform_indices = @transform_3, window_bounds = array<i64: 32, 192>}, {transform_indices = @transform_4, window_bounds = array<i64: 16, 192>}]} {
    %c0 = arith.constant 0 : index
    %c0_0 = arith.constant 0 : index
    %0 = vector.load %arg1[%c0, %c0_0] : memref<16x128xf32, #tpu.memory_space<vmem>>, vector<16x128xf32>
    %c0_1 = arith.constant 0 : index
    %c0_2 = arith.constant 0 : index
    %1 = vector.load %arg2[%c0_1, %c0_2] : memref<128x32xf32, #tpu.memory_space<vmem>>, vector<128x32xf32>
    %cst = arith.constant dense<0.000000e+00> : vector<16x32xf32>
    %2 = tpu.matmul %0, %1, %cst {dimension_numbers = #tpu.dot_dimension_numbers<[1], [0], [0], [1], [0, 0, 1, 1], [], []>} : vector<16x128xf32>, vector<128x32xf32>, vector<16x32xf32> -> vector<16x32xf32>
    %3 = arith.mulf %2, %2 : vector<16x32xf32>
    %cst_3 = arith.constant dense<0.000000e+00> : vector<16xf32>
    %4 = vector.multi_reduction <add>, %3, %cst_3 [1] : vector<16x32xf32> to vector<16xf32>
    %5 = vector.shape_cast %4 : vector<16xf32> to vector<16x1xf32>
    %cst_4 = arith.constant 3.200000e+01 : f32
    %6 = vector.broadcast %cst_4 : f32 to vector<16x1xf32>
    %7 = arith.divf %5, %6 : vector<16x1xf32>
    %c0_5 = arith.constant 0 : index
    %c0_6 = arith.constant 0 : index
    %8 = vector.load %arg3[%c0_5, %c0_6] : memref<1x32xf32, #tpu.memory_space<vmem>>, vector<1x32xf32>
    %cst_7 = arith.constant 1.000000e-07 : f32
    %9 = vector.broadcast %cst_7 : f32 to vector<16x1xf32>
    %10 = arith.addf %7, %9 : vector<16x1xf32>
    %11 = math.rsqrt %10 : vector<16x1xf32>
    %12 = vector.broadcast %11 : vector<16x1xf32> to vector<16x32xf32>
    %13 = arith.mulf %2, %12 : vector<16x32xf32>
    %14 = vector.broadcast %8 : vector<1x32xf32> to vector<16x32xf32>
    %15 = arith.mulf %14, %13 : vector<16x32xf32>
    %c0_8 = arith.constant 0 : index
    %c0_9 = arith.constant 0 : index
    %16 = vector.load %arg4[%c0_8, %c0_9] : memref<32x192xf32, #tpu.memory_space<vmem>>, vector<32x192xf32>
    %cst_10 = arith.constant dense<0.000000e+00> : vector<16x192xf32>
    %17 = tpu.matmul %15, %16, %cst_10 {dimension_numbers = #tpu.dot_dimension_numbers<[1], [0], [0], [1], [0, 0, 1, 1], [], []>} : vector<16x32xf32>, vector<32x192xf32>, vector<16x192xf32> -> vector<16x192xf32>
    %c0_11 = arith.constant 0 : index
    %c0_12 = arith.constant 0 : index
    %18 = vector.load %arg5[%c0_11, %c0_12] : memref<16x192xf32, #tpu.memory_space<vmem>>, vector<16x192xf32>
    tpu.vector_store %arg5[%c0_11, %c0_12], %17 {strides = array<i32>} : memref<16x192xf32, #tpu.memory_space<vmem>>, vector<16x192xf32>,
    return
  }
  func.func @transform_0(%arg0: i32) -> (i32, i32) {
    %c0_i32 = arith.constant 0 : i32
    %c0_i32_0 = arith.constant 0 : i32
    return %arg0, %c0_i32 : i32, i32
  }
  func.func @transform_1(%arg0: i32) -> (i32, i32) {
    %c0_i32 = arith.constant 0 : i32
    %c0_i32_0 = arith.constant 0 : i32
    %c0_i32_1 = arith.constant 0 : i32
    return %c0_i32, %c0_i32_0 : i32, i32
  }
  func.func @transform_2(%arg0: i32) -> (i32, i32) {
    %c0_i32 = arith.constant 0 : i32
    %c0_i32_0 = arith.constant 0 : i32
    %c0_i32_1 = arith.constant 0 : i32
    return %c0_i32, %c0_i32_0 : i32, i32
  }
  func.func @transform_3(%arg0: i32) -> (i32, i32) {
    %c0_i32 = arith.constant 0 : i32
    %c0_i32_0 = arith.constant 0 : i32
    %c0_i32_1 = arith.constant 0 : i32
    return %c0_i32, %c0_i32_0 : i32, i32
  }
  func.func @transform_4(%arg0: i32) -> (i32, i32) {
    %c0_i32 = arith.constant 0 : i32
    %c0_i32_0 = arith.constant 0 : i32
    return %arg0, %c0_i32 : i32, i32
  }
}

module attributes {stable_mosaic.version = 11 : i64} {
  func.func @_kv_chain_kernel(%arg0: i32, %arg1: memref<16x128xf32, #tpu.memory_space<vmem>>, %arg2: memref<128x8xf32, #tpu.memory_space<vmem>>, %arg3: memref<128x32xf32, #tpu.memory_space<vmem>>, %arg4: memref<1x8xf32, #tpu.memory_space<vmem>>, %arg5: memref<8x256xf32, #tpu.memory_space<vmem>>, %arg6: memref<16x256xf32, #tpu.memory_space<vmem>>, %arg7: memref<16x32xf32, #tpu.memory_space<vmem>>) attributes {dimension_semantics = [#tpu.dimension_semantics<parallel>], iteration_bounds = array<i64: 2>, scalar_prefetch = 0 : i64, scratch_operands = 0 : i64, tpu.core_type = #tpu.core_type<tc>, window_params = [{transform_indices = @transform_0, window_bounds = array<i64: 16, 128>}, {pipeline_mode = #tpu.pipeline_mode<synchronous>, transform_indices = @transform_1, window_bounds = array<i64: 128, 8>}, {pipeline_mode = #tpu.pipeline_mode<synchronous>, transform_indices = @transform_2, window_bounds = array<i64: 128, 32>}, {pipeline_mode = #tpu.pipeline_mode<synchronous>, transform_indices = @transform_3, window_bounds = array<i64: 1, 8>}, {pipeline_mode = #tpu.pipeline_mode<synchronous>, transform_indices = @transform_4, window_bounds = array<i64: 8, 256>}, {transform_indices = @transform_5, window_bounds = array<i64: 16, 256>}, {transform_indices = @transform_6, window_bounds = array<i64: 16, 32>}]} {
    %c0 = arith.constant 0 : index
    %c0_0 = arith.constant 0 : index
    %0 = vector.load %arg1[%c0, %c0_0] : memref<16x128xf32, #tpu.memory_space<vmem>>, vector<16x128xf32>
    %c0_1 = arith.constant 0 : index
    %c0_2 = arith.constant 0 : index
    %1 = vector.load %arg3[%c0_1, %c0_2] : memref<128x32xf32, #tpu.memory_space<vmem>>, vector<128x32xf32>
    %cst = arith.constant dense<0.000000e+00> : vector<16x32xf32>
    %2 = tpu.matmul %0, %1, %cst {dimension_numbers = #tpu.dot_dimension_numbers<[1], [0], [0], [1], [0, 0, 1, 1], [], []>} : vector<16x128xf32>, vector<128x32xf32>, vector<16x32xf32> -> vector<16x32xf32>
    %c0_3 = arith.constant 0 : index
    %c0_4 = arith.constant 0 : index
    %3 = vector.load %arg7[%c0_3, %c0_4] : memref<16x32xf32, #tpu.memory_space<vmem>>, vector<16x32xf32>
    tpu.vector_store %arg7[%c0_3, %c0_4], %2 {strides = array<i32>} : memref<16x32xf32, #tpu.memory_space<vmem>>, vector<16x32xf32>,
    %c0_5 = arith.constant 0 : index
    %c0_6 = arith.constant 0 : index
    %4 = vector.load %arg2[%c0_5, %c0_6] : memref<128x8xf32, #tpu.memory_space<vmem>>, vector<128x8xf32>
    %cst_7 = arith.constant dense<0.000000e+00> : vector<16x8xf32>
    %5 = tpu.matmul %0, %4, %cst_7 {dimension_numbers = #tpu.dot_dimension_numbers<[1], [0], [0], [1], [0, 0, 1, 1], [], []>} : vector<16x128xf32>, vector<128x8xf32>, vector<16x8xf32> -> vector<16x8xf32>
    %6 = arith.mulf %5, %5 : vector<16x8xf32>
    %cst_8 = arith.constant dense<0.000000e+00> : vector<16xf32>
    %7 = vector.multi_reduction <add>, %6, %cst_8 [1] : vector<16x8xf32> to vector<16xf32>
    %8 = vector.shape_cast %7 : vector<16xf32> to vector<16x1xf32>
    %cst_9 = arith.constant 8.000000e+00 : f32
    %9 = vector.broadcast %cst_9 : f32 to vector<16x1xf32>
    %10 = arith.divf %8, %9 : vector<16x1xf32>
    %c0_10 = arith.constant 0 : index
    %c0_11 = arith.constant 0 : index
    %11 = vector.load %arg4[%c0_10, %c0_11] : memref<1x8xf32, #tpu.memory_space<vmem>>, vector<1x8xf32>
    %cst_12 = arith.constant 1.000000e-07 : f32
    %12 = vector.broadcast %cst_12 : f32 to vector<16x1xf32>
    %13 = arith.addf %10, %12 : vector<16x1xf32>
    %14 = math.rsqrt %13 : vector<16x1xf32>
    %15 = vector.broadcast %14 : vector<16x1xf32> to vector<16x8xf32>
    %16 = arith.mulf %5, %15 : vector<16x8xf32>
    %17 = vector.broadcast %11 : vector<1x8xf32> to vector<16x8xf32>
    %18 = arith.mulf %17, %16 : vector<16x8xf32>
    %c0_13 = arith.constant 0 : index
    %c0_14 = arith.constant 0 : index
    %19 = vector.load %arg5[%c0_13, %c0_14] : memref<8x256xf32, #tpu.memory_space<vmem>>, vector<8x256xf32>
    %cst_15 = arith.constant dense<0.000000e+00> : vector<16x256xf32>
    %20 = tpu.matmul %18, %19, %cst_15 {dimension_numbers = #tpu.dot_dimension_numbers<[1], [0], [0], [1], [0, 0, 1, 1], [], []>} : vector<16x8xf32>, vector<8x256xf32>, vector<16x256xf32> -> vector<16x256xf32>
    %c0_16 = arith.constant 0 : index
    %c0_17 = arith.constant 0 : index
    %21 = vector.load %arg6[%c0_16, %c0_17] : memref<16x256xf32, #tpu.memory_space<vmem>>, vector<16x256xf32>
    tpu.vector_store %arg6[%c0_16, %c0_17], %20 {strides = array<i32>} : memref<16x256xf32, #tpu.memory_space<vmem>>, vector<16x256xf32>,
    return
  }
  func.func @transform_0(%arg0: i32) -> (i32, i32) {
    %c0_i32 = arith.constant 0 : i32
    %c0_i32_0 = arith.constant 0 : i32
    return %arg0, %c0_i32 : i32, i32
  }
  func.func @transform_1(%arg0: i32) -> (i32, i32) {
    %c0_i32 = arith.constant 0 : i32
    %c0_i32_0 = arith.constant 0 : i32
    %c0_i32_1 = arith.constant 0 : i32
    return %c0_i32, %c0_i32_0 : i32, i32
  }
  func.func @transform_2(%arg0: i32) -> (i32, i32) {
    %c0_i32 = arith.constant 0 : i32
    %c0_i32_0 = arith.constant 0 : i32
    %c0_i32_1 = arith.constant 0 : i32
    return %c0_i32, %c0_i32_0 : i32, i32
  }
  func.func @transform_3(%arg0: i32) -> (i32, i32) {
    %c0_i32 = arith.constant 0 : i32
    %c0_i32_0 = arith.constant 0 : i32
    %c0_i32_1 = arith.constant 0 : i32
    return %c0_i32, %c0_i32_0 : i32, i32
  }
  func.func @transform_4(%arg0: i32) -> (i32, i32) {
    %c0_i32 = arith.constant 0 : i32
    %c0_i32_0 = arith.constant 0 : i32
    %c0_i32_1 = arith.constant 0 : i32
    return %c0_i32, %c0_i32_0 : i32, i32
  }
  func.func @transform_5(%arg0: i32) -> (i32, i32) {
    %c0_i32 = arith.constant 0 : i32
    %c0_i32_0 = arith.constant 0 : i32
    return %arg0, %c0_i32 : i32, i32
  }
  func.func @transform_6(%arg0: i32) -> (i32, i32) {
    %c0_i32 = arith.constant 0 : i32
    %c0_i32_0 = arith.constant 0 : i32
    return %arg0, %c0_i32 : i32, i32
  }
}

module attributes {stable_mosaic.version = 11 : i64} {
  func.func @kernel(%arg0: i32, %arg1: i32, %arg2: memref<16x256xf32, #tpu.memory_space<vmem>>, %arg3: memref<256x128xf32, #tpu.memory_space<vmem>>, %arg4: memref<16x128xf32, #tpu.memory_space<vmem>>, %arg5: memref<16x128xf32, #tpu.memory_space<vmem>>) attributes {dimension_semantics = [#tpu.dimension_semantics<parallel>, #tpu.dimension_semantics<parallel>], iteration_bounds = array<i64: 2, 1>, scalar_prefetch = 0 : i64, scratch_operands = 0 : i64, tpu.core_type = #tpu.core_type<tc>, window_params = [{transform_indices = @transform_0, window_bounds = array<i64: 16, 256>}, {transform_indices = @transform_1, window_bounds = array<i64: 256, 128>}, {transform_indices = @transform_2, window_bounds = array<i64: 16, 128>}, {transform_indices = @transform_3, window_bounds = array<i64: 16, 128>}]} {
    %c0 = arith.constant 0 : index
    %c0_0 = arith.constant 0 : index
    %0 = vector.load %arg2[%c0, %c0_0] : memref<16x256xf32, #tpu.memory_space<vmem>>, vector<16x256xf32>
    %c0_1 = arith.constant 0 : index
    %c0_2 = arith.constant 0 : index
    %1 = vector.load %arg3[%c0_1, %c0_2] : memref<256x128xf32, #tpu.memory_space<vmem>>, vector<256x128xf32>
    %cst = arith.constant dense<0.000000e+00> : vector<16x128xf32>
    %2 = tpu.matmul %0, %1, %cst {dimension_numbers = #tpu.dot_dimension_numbers<[1], [0], [0], [1], [0, 0, 1, 1], [], []>} : vector<16x256xf32>, vector<256x128xf32>, vector<16x128xf32> -> vector<16x128xf32>
    %c0_3 = arith.constant 0 : index
    %c0_4 = arith.constant 0 : index
    %3 = vector.load %arg4[%c0_3, %c0_4] : memref<16x128xf32, #tpu.memory_space<vmem>>, vector<16x128xf32>
    %4 = arith.addf %2, %3 : vector<16x128xf32>
    %c0_5 = arith.constant 0 : index
    %c0_6 = arith.constant 0 : index
    %5 = vector.load %arg5[%c0_5, %c0_6] : memref<16x128xf32, #tpu.memory_space<vmem>>, vector<16x128xf32>
    tpu.vector_store %arg5[%c0_5, %c0_6], %4 {strides = array<i32>} : memref<16x128xf32, #tpu.memory_space<vmem>>, vector<16x128xf32>,
    return
  }
  func.func @transform_0(%arg0: i32, %arg1: i32) -> (i32, i32) {
    %c0_i32 = arith.constant 0 : i32
    %c0_i32_0 = arith.constant 0 : i32
    return %arg0, %c0_i32 : i32, i32
  }
  func.func @transform_1(%arg0: i32, %arg1: i32) -> (i32, i32) {
    %c0_i32 = arith.constant 0 : i32
    %c0_i32_0 = arith.constant 0 : i32
    return %c0_i32, %arg1 : i32, i32
  }
  func.func @transform_2(%arg0: i32, %arg1: i32) -> (i32, i32) {
    %c0_i32 = arith.constant 0 : i32
    return %arg0, %arg1 : i32, i32
  }
  func.func @transform_3(%arg0: i32, %arg1: i32) -> (i32, i32) {
    %c0_i32 = arith.constant 0 : i32
    return %arg0, %arg1 : i32, i32
  }
}

module attributes {stable_mosaic.version = 11 : i64} {
  func.func @kernel(%arg0: i32, %arg1: i32, %arg2: memref<16x128xf32, #tpu.memory_space<vmem>>, %arg3: memref<128x512xf32, #tpu.memory_space<vmem>>, %arg4: memref<1x512xf32, #tpu.memory_space<vmem>>, %arg5: memref<16x512xf32, #tpu.memory_space<vmem>>) attributes {dimension_semantics = [#tpu.dimension_semantics<parallel>, #tpu.dimension_semantics<parallel>], iteration_bounds = array<i64: 2, 1>, scalar_prefetch = 0 : i64, scratch_operands = 0 : i64, tpu.core_type = #tpu.core_type<tc>, window_params = [{transform_indices = @transform_0, window_bounds = array<i64: 16, 128>}, {transform_indices = @transform_1, window_bounds = array<i64: 128, 512>}, {transform_indices = @transform_2, window_bounds = array<i64: 1, 512>}, {transform_indices = @transform_3, window_bounds = array<i64: 16, 512>}]} {
    %c0 = arith.constant 0 : index
    %c0_0 = arith.constant 0 : index
    %0 = vector.load %arg2[%c0, %c0_0] : memref<16x128xf32, #tpu.memory_space<vmem>>, vector<16x128xf32>
    %c0_1 = arith.constant 0 : index
    %c0_2 = arith.constant 0 : index
    %1 = vector.load %arg3[%c0_1, %c0_2] : memref<128x512xf32, #tpu.memory_space<vmem>>, vector<128x512xf32>
    %cst = arith.constant dense<0.000000e+00> : vector<16x512xf32>
    %2 = tpu.matmul %0, %1, %cst {dimension_numbers = #tpu.dot_dimension_numbers<[1], [0], [0], [1], [0, 0, 1, 1], [], []>} : vector<16x128xf32>, vector<128x512xf32>, vector<16x512xf32> -> vector<16x512xf32>
    %c0_3 = arith.constant 0 : index
    %c0_4 = arith.constant 0 : index
    %3 = vector.load %arg4[%c0_3, %c0_4] : memref<1x512xf32, #tpu.memory_space<vmem>>, vector<1x512xf32>
    %4 = vector.broadcast %3 : vector<1x512xf32> to vector<16x512xf32>
    %5 = arith.addf %2, %4 : vector<16x512xf32>
    %cst_5 = arith.constant 5.000000e-01 : f32
    %6 = vector.broadcast %cst_5 : f32 to vector<16x512xf32>
    %7 = arith.mulf %6, %5 : vector<16x512xf32>
    %cst_6 = arith.constant 0.707106769 : f32
    %8 = vector.broadcast %cst_6 : f32 to vector<16x512xf32>
    %9 = arith.mulf %5, %8 : vector<16x512xf32>
    %10 = math.erf %9 : vector<16x512xf32>
    %cst_7 = arith.constant 1.000000e+00 : f32
    %11 = vector.broadcast %cst_7 : f32 to vector<16x512xf32>
    %12 = arith.addf %11, %10 : vector<16x512xf32>
    %13 = arith.mulf %7, %12 : vector<16x512xf32>
    %c0_8 = arith.constant 0 : index
    %c0_9 = arith.constant 0 : index
    %14 = vector.load %arg5[%c0_8, %c0_9] : memref<16x512xf32, #tpu.memory_space<vmem>>, vector<16x512xf32>
    tpu.vector_store %arg5[%c0_8, %c0_9], %13 {strides = array<i32>} : memref<16x512xf32, #tpu.memory_space<vmem>>, vector<16x512xf32>,
    return
  }
  func.func @transform_0(%arg0: i32, %arg1: i32) -> (i32, i32) {
    %c0_i32 = arith.constant 0 : i32
    %c0_i32_0 = arith.constant 0 : i32
    return %arg0, %c0_i32 : i32, i32
  }
  func.func @transform_1(%arg0: i32, %arg1: i32) -> (i32, i32) {
    %c0_i32 = arith.constant 0 : i32
    %c0_i32_0 = arith.constant 0 : i32
    return %c0_i32, %arg1 : i32, i32
  }
  func.func @transform_2(%arg0: i32, %arg1: i32) -> (i32, i32) {
    %c0_i32 = arith.constant 0 : i32
    %c0_i32_0 = arith.constant 0 : i32
    return %c0_i32, %arg1 : i32, i32
  }
  func.func @transform_3(%arg0: i32, %arg1: i32) -> (i32, i32) {
    %c0_i32 = arith.constant 0 : i32
    return %arg0, %arg1 : i32, i32
  }
}

module attributes {stable_mosaic.version = 11 : i64} {
  func.func @_mla_attention_kernel(%arg0: i32, %arg1: i32, %arg2: i32, %arg3: memref<1x1x16x128xf32, #tpu.memory_space<vmem>>, %arg4: memref<1x1x16x128xf32, #tpu.memory_space<vmem>>, %arg5: memref<1x1x16x128xf32, #tpu.memory_space<vmem>>, %arg6: memref<1x1x16xf32, #tpu.memory_space<vmem>>, %arg7: memref<1x16x128xf32, #tpu.memory_space<vmem>>, %arg8: memref<16x1xf32, #tpu.memory_space<vmem>>, %arg9: memref<16x1xf32, #tpu.memory_space<vmem>>, %arg10: memref<16x128xf32, #tpu.memory_space<vmem>>) attributes {dimension_semantics = [#tpu.dimension_semantics<parallel>, #tpu.dimension_semantics<parallel>, #tpu.dimension_semantics<arbitrary>], iteration_bounds = array<i64: 2, 2, 1>, scalar_prefetch = 0 : i64, scratch_operands = 3 : i64, tpu.core_type = #tpu.core_type<tc>, window_params = [{transform_indices = @transform_0, window_bounds = array<i64: 1, 1, 16, 128>}, {transform_indices = @transform_1, window_bounds = array<i64: 1, 1, 16, 128>}, {transform_indices = @transform_2, window_bounds = array<i64: 1, 1, 16, 128>}, {transform_indices = @transform_3, window_bounds = array<i64: 1, 1, 16>}, {transform_indices = @transform_4, window_bounds = array<i64: 1, 16, 128>}]} {
    %c0_i32 = arith.constant 0 : i32
    %0 = arith.cmpi eq, %arg2, %c0_i32 : i32
    %1 = arith.extui %0 : i1 to i32
    %c0_i32_0 = arith.constant 0 : i32
    %2 = arith.cmpi ne, %1, %c0_i32_0 : i32
    scf.if %2 {
      %cst_32 = arith.constant -1.000000e+30 : f32
      %39 = vector.broadcast %cst_32 : f32 to vector<16x1xf32>
      %c0_33 = arith.constant 0 : index
      %c0_34 = arith.constant 0 : index
      %40 = vector.load %arg8[%c0_33, %c0_34] : memref<16x1xf32, #tpu.memory_space<vmem>>, vector<16x1xf32>
      tpu.vector_store %arg8[%c0_33, %c0_34], %39 {strides = array<i32>} : memref<16x1xf32, #tpu.memory_space<vmem>>, vector<16x1xf32>,
      %cst_35 = arith.constant 0.000000e+00 : f32
      %41 = vector.broadcast %cst_35 : f32 to vector<16x1xf32>
      %c0_36 = arith.constant 0 : index
      %c0_37 = arith.constant 0 : index
      %42 = vector.load %arg9[%c0_36, %c0_37] : memref<16x1xf32, #tpu.memory_space<vmem>>, vector<16x1xf32>
      tpu.vector_store %arg9[%c0_36, %c0_37], %41 {strides = array<i32>} : memref<16x1xf32, #tpu.memory_space<vmem>>, vector<16x1xf32>,
      %cst_38 = arith.constant 0.000000e+00 : f32
      %43 = vector.broadcast %cst_38 : f32 to vector<16x128xf32>
      %c0_39 = arith.constant 0 : index
      %c0_40 = arith.constant 0 : index
      %44 = vector.load %arg10[%c0_39, %c0_40] : memref<16x128xf32, #tpu.memory_space<vmem>>, vector<16x128xf32>
      tpu.vector_store %arg10[%c0_39, %c0_40], %43 {strides = array<i32>} : memref<16x128xf32, #tpu.memory_space<vmem>>, vector<16x128xf32>,
    } else {
    }
    %c0 = arith.constant 0 : index
    %c0_1 = arith.constant 0 : index
    %c0_2 = arith.constant 0 : index
    %c0_3 = arith.constant 0 : index
    %3 = vector.load %arg3[%c0, %c0_1, %c0_2, %c0_3] : memref<1x1x16x128xf32, #tpu.memory_space<vmem>>, vector<1x1x16x128xf32>
    %4 = vector.shape_cast %3 : vector<1x1x16x128xf32> to vector<16x128xf32>
    %c0_4 = arith.constant 0 : index
    %c0_5 = arith.constant 0 : index
    %c0_6 = arith.constant 0 : index
    %c0_7 = arith.constant 0 : index
    %5 = vector.load %arg4[%c0_4, %c0_5, %c0_6, %c0_7] : memref<1x1x16x128xf32, #tpu.memory_space<vmem>>, vector<1x1x16x128xf32>
    %6 = vector.shape_cast %5 : vector<1x1x16x128xf32> to vector<16x128xf32>
    %c0_8 = arith.constant 0 : index
    %c0_9 = arith.constant 0 : index
    %c0_10 = arith.constant 0 : index
    %c0_11 = arith.constant 0 : index
    %7 = vector.load %arg5[%c0_8, %c0_9, %c0_10, %c0_11] : memref<1x1x16x128xf32, #tpu.memory_space<vmem>>, vector<1x1x16x128xf32>
    %8 = vector.shape_cast %7 : vector<1x1x16x128xf32> to vector<16x128xf32>
    %cst = arith.constant dense<0.000000e+00> : vector<16x16xf32>
    %9 = tpu.matmul %4, %6, %cst {dimension_numbers = #tpu.dot_dimension_numbers<[1], [1], [0], [0], [0, 0, 1, 0], [], []>} : vector<16x128xf32>, vector<16x128xf32>, vector<16x16xf32> -> vector<16x16xf32>
    %c0_12 = arith.constant 0 : index
    %c0_13 = arith.constant 0 : index
    %c0_14 = arith.constant 0 : index
    %10 = vector.load %arg6[%c0_12, %c0_13, %c0_14] : memref<1x1x16xf32, #tpu.memory_space<vmem>>, vector<1x1x16xf32>
    %11 = vector.shape_cast %10 : vector<1x1x16xf32> to vector<1x16xf32>
    %12 = vector.broadcast %11 : vector<1x16xf32> to vector<16x16xf32>
    %13 = arith.addf %9, %12 : vector<16x16xf32>
    %c0_15 = arith.constant 0 : index
    %c0_16 = arith.constant 0 : index
    %14 = vector.load %arg8[%c0_15, %c0_16] : memref<16x1xf32, #tpu.memory_space<vmem>>, vector<16x1xf32>
    %cst_17 = arith.constant dense<0xFF800000> : vector<16xf32>
    %15 = vector.multi_reduction <maximumf>, %13, %cst_17 [1] : vector<16x16xf32> to vector<16xf32>
    %16 = vector.shape_cast %15 : vector<16xf32> to vector<16x1xf32>
    %17 = arith.maximumf %14, %16 : vector<16x1xf32>
    %18 = arith.subf %14, %17 : vector<16x1xf32>
    %19 = math.exp %18 : vector<16x1xf32>
    %20 = vector.broadcast %17 : vector<16x1xf32> to vector<16x16xf32>
    %21 = arith.subf %13, %20 : vector<16x16xf32>
    %22 = math.exp %21 : vector<16x16xf32>
    %c0_18 = arith.constant 0 : index
    %c0_19 = arith.constant 0 : index
    %23 = vector.load %arg9[%c0_18, %c0_19] : memref<16x1xf32, #tpu.memory_space<vmem>>, vector<16x1xf32>
    %24 = arith.mulf %19, %23 : vector<16x1xf32>
    %cst_20 = arith.constant dense<0.000000e+00> : vector<16xf32>
    %25 = vector.multi_reduction <add>, %22, %cst_20 [1] : vector<16x16xf32> to vector<16xf32>
    %26 = vector.shape_cast %25 : vector<16xf32> to vector<16x1xf32>
    %27 = arith.addf %24, %26 : vector<16x1xf32>
    %c0_21 = arith.constant 0 : index
    %c0_22 = arith.constant 0 : index
    %28 = vector.load %arg9[%c0_21, %c0_22] : memref<16x1xf32, #tpu.memory_space<vmem>>, vector<16x1xf32>
    tpu.vector_store %arg9[%c0_21, %c0_22], %27 {strides = array<i32>} : memref<16x1xf32, #tpu.memory_space<vmem>>, vector<16x1xf32>,
    %c0_23 = arith.constant 0 : index
    %c0_24 = arith.constant 0 : index
    %29 = vector.load %arg10[%c0_23, %c0_24] : memref<16x128xf32, #tpu.memory_space<vmem>>, vector<16x128xf32>
    %30 = vector.broadcast %19 : vector<16x1xf32> to vector<16x128xf32>
    %31 = arith.mulf %30, %29 : vector<16x128xf32>
    %cst_25 = arith.constant dense<0.000000e+00> : vector<16x128xf32>
    %32 = tpu.matmul %22, %8, %cst_25 {dimension_numbers = #tpu.dot_dimension_numbers<[1], [0], [0], [1], [0, 0, 1, 1], [], []>} : vector<16x16xf32>, vector<16x128xf32>, vector<16x128xf32> -> vector<16x128xf32>
    %33 = arith.addf %31, %32 : vector<16x128xf32>
    %c0_26 = arith.constant 0 : index
    %c0_27 = arith.constant 0 : index
    %34 = vector.load %arg10[%c0_26, %c0_27] : memref<16x128xf32, #tpu.memory_space<vmem>>, vector<16x128xf32>
    tpu.vector_store %arg10[%c0_26, %c0_27], %33 {strides = array<i32>} : memref<16x128xf32, #tpu.memory_space<vmem>>, vector<16x128xf32>,
    %c0_28 = arith.constant 0 : index
    %c0_29 = arith.constant 0 : index
    %35 = vector.load %arg8[%c0_28, %c0_29] : memref<16x1xf32, #tpu.memory_space<vmem>>, vector<16x1xf32>
    tpu.vector_store %arg8[%c0_28, %c0_29], %17 {strides = array<i32>} : memref<16x1xf32, #tpu.memory_space<vmem>>, vector<16x1xf32>,
    %c0_i32_30 = arith.constant 0 : i32
    %36 = arith.cmpi eq, %arg2, %c0_i32_30 : i32
    %37 = arith.extui %36 : i1 to i32
    %c0_i32_31 = arith.constant 0 : i32
    %38 = arith.cmpi ne, %37, %c0_i32_31 : i32
    scf.if %38 {
      %c0_32 = arith.constant 0 : index
      %c0_33 = arith.constant 0 : index
      %39 = vector.load %arg9[%c0_32, %c0_33] : memref<16x1xf32, #tpu.memory_space<vmem>>, vector<16x1xf32>
      %40 = tpu.reciprocal %39 {approx = true} : vector<16x1xf32> -> vector<16x1xf32>
      %c0_34 = arith.constant 0 : index
      %c0_35 = arith.constant 0 : index
      %41 = vector.load %arg10[%c0_34, %c0_35] : memref<16x128xf32, #tpu.memory_space<vmem>>, vector<16x128xf32>
      %42 = vector.broadcast %40 : vector<16x1xf32> to vector<16x128xf32>
      %43 = arith.mulf %41, %42 : vector<16x128xf32>
      %c0_36 = arith.constant 0 : index
      %c0_37 = arith.constant 0 : index
      %c0_38 = arith.constant 0 : index
      %44 = vector.load %arg7[%c0_36, %c0_37, %c0_38] : memref<1x16x128xf32, #tpu.memory_space<vmem>>, vector<1x16x128xf32>
      %45 = vector.shape_cast %44 : vector<1x16x128xf32> to vector<16x128xf32>
      %46 = vector.shape_cast %43 : vector<16x128xf32> to vector<1x16x128xf32>
      tpu.vector_store %arg7[%c0_36, %c0_37, %c0_38], %46 {strides = array<i32>} : memref<1x16x128xf32, #tpu.memory_space<vmem>>, vector<1x16x128xf32>,
    } else {
    }
    return
  }
  func.func @transform_0(%arg0: i32, %arg1: i32, %arg2: i32) -> (i32, i32, i32, i32) {
    %c0_i32 = arith.constant 0 : i32
    %c0_i32_0 = arith.constant 0 : i32
    %c0_i32_1 = arith.constant 0 : i32
    return %arg0, %arg1, %c0_i32, %c0_i32_0 : i32, i32, i32, i32
  }
  func.func @transform_1(%arg0: i32, %arg1: i32, %arg2: i32) -> (i32, i32, i32, i32) {
    %c0_i32 = arith.constant 0 : i32
    %c0_i32_0 = arith.constant 0 : i32
    return %arg0, %arg1, %arg2, %c0_i32 : i32, i32, i32, i32
  }
  func.func @transform_2(%arg0: i32, %arg1: i32, %arg2: i32) -> (i32, i32, i32, i32) {
    %c0_i32 = arith.constant 0 : i32
    %c0_i32_0 = arith.constant 0 : i32
    return %arg0, %arg1, %arg2, %c0_i32 : i32, i32, i32, i32
  }
  func.func @transform_3(%arg0: i32, %arg1: i32, %arg2: i32) -> (i32, i32, i32) {
    %c0_i32 = arith.constant 0 : i32
    %c0_i32_0 = arith.constant 0 : i32
    return %arg0, %c0_i32, %arg2 : i32, i32, i32
  }
  func.func @transform_4(%arg0: i32, %arg1: i32, %arg2: i32) -> (i32, i32, i32) {
    %c0_i32 = arith.constant 0 : i32
    %c0_i32_0 = arith.constant 0 : i32
    return %arg0, %c0_i32, %arg1 : i32, i32, i32
  }
}

module attributes {stable_mosaic.version = 11 : i64} {
  func.func @kernel(%arg0: i32, %arg1: i32, %arg2: memref<16x512xf32, #tpu.memory_space<vmem>>, %arg3: memref<512x128xf32, #tpu.memory_space<vmem>>, %arg4: memref<1x128xf32, #tpu.memory_space<vmem>>, %arg5: memref<16x128xf32, #tpu.memory_space<vmem>>, %arg6: memref<16x128xf32, #tpu.memory_space<vmem>>) attributes {dimension_semantics = [#tpu.dimension_semantics<parallel>, #tpu.dimension_semantics<parallel>], iteration_bounds = array<i64: 2, 1>, scalar_prefetch = 0 : i64, scratch_operands = 0 : i64, tpu.core_type = #tpu.core_type<tc>, window_params = [{transform_indices = @transform_0, window_bounds = array<i64: 16, 512>}, {transform_indices = @transform_1, window_bounds = array<i64: 512, 128>}, {transform_indices = @transform_2, window_bounds = array<i64: 1, 128>}, {transform_indices = @transform_3, window_bounds = array<i64: 16, 128>}, {transform_indices = @transform_4, window_bounds = array<i64: 16, 128>}]} {
    %c0 = arith.constant 0 : index
    %c0_0 = arith.constant 0 : index
    %0 = vector.load %arg2[%c0, %c0_0] : memref<16x512xf32, #tpu.memory_space<vmem>>, vector<16x512xf32>
    %c0_1 = arith.constant 0 : index
    %c0_2 = arith.constant 0 : index
    %1 = vector.load %arg3[%c0_1, %c0_2] : memref<512x128xf32, #tpu.memory_space<vmem>>, vector<512x128xf32>
    %cst = arith.constant dense<0.000000e+00> : vector<16x128xf32>
    %2 = tpu.matmul %0, %1, %cst {dimension_numbers = #tpu.dot_dimension_numbers<[1], [0], [0], [1], [0, 0, 1, 1], [], []>} : vector<16x512xf32>, vector<512x128xf32>, vector<16x128xf32> -> vector<16x128xf32>
    %c0_3 = arith.constant 0 : index
    %c0_4 = arith.constant 0 : index
    %3 = vector.load %arg4[%c0_3, %c0_4] : memref<1x128xf32, #tpu.memory_space<vmem>>, vector<1x128xf32>
    %4 = vector.broadcast %3 : vector<1x128xf32> to vector<16x128xf32>
    %5 = arith.addf %2, %4 : vector<16x128xf32>
    %c0_5 = arith.constant 0 : index
    %c0_6 = arith.constant 0 : index
    %6 = vector.load %arg5[%c0_5, %c0_6] : memref<16x128xf32, #tpu.memory_space<vmem>>, vector<16x128xf32>
    %7 = arith.addf %5, %6 : vector<16x128xf32>
    %c0_7 = arith.constant 0 : index
    %c0_8 = arith.constant 0 : index
    %8 = vector.load %arg6[%c0_7, %c0_8] : memref<16x128xf32, #tpu.memory_space<vmem>>, vector<16x128xf32>
    tpu.vector_store %arg6[%c0_7, %c0_8], %7 {strides = array<i32>} : memref<16x128xf32, #tpu.memory_space<vmem>>, vector<16x128xf32>,
    return
  }
  func.func @transform_0(%arg0: i32, %arg1: i32) -> (i32, i32) {
    %c0_i32 = arith.constant 0 : i32
    %c0_i32_0 = arith.constant 0 : i32
    return %arg0, %c0_i32 : i32, i32
  }
  func.func @transform_1(%arg0: i32, %arg1: i32) -> (i32, i32) {
    %c0_i32 = arith.constant 0 : i32
    %c0_i32_0 = arith.constant 0 : i32
    return %c0_i32, %arg1 : i32, i32
  }
  func.func @transform_2(%arg0: i32, %arg1: i32) -> (i32, i32) {
    %c0_i32 = arith.constant 0 : i32
    %c0_i32_0 = arith.constant 0 : i32
    return %c0_i32, %arg1 : i32, i32
  }
  func.func @transform_3(%arg0: i32, %arg1: i32) -> (i32, i32) {
    %c0_i32 = arith.constant 0 : i32
    return %arg0, %arg1 : i32, i32
  }
  func.func @transform_4(%arg0: i32, %arg1: i32) -> (i32, i32) {
    %c0_i32 = arith.constant 0 : i32
    return %arg0, %arg1 : i32, i32
  }
}

</mosaic_0001>

<llo_original>
// kernel: vision_encoder_forward.8
$region0: #{vision_encoder_forward.8}
  #allocation0 [shape = 'u32[]', space=smem, size = 0x4, offset = 0x4, fixed_abs, tag = 'smem constant byte address 0x4 - core index']
  #allocation1 [shape = 'u32[144,128]{1,0:T(1,128)}', space=vmem, size = 0x12000, scoped, tag = 'internal scratch']
  %s0 = inlined_call_operand.vmem [shape: f32[32,128], index: 0, kind: input, shape index: {}]
  %s1 = inlined_call_operand.vmem [shape: f32[1,128], index: 1, kind: input, shape index: {}]
  %s2 = inlined_call_operand.vmem [shape: f32[1,128], index: 2, kind: input, shape index: {}]
  %s3 = inlined_call_operand.vmem [shape: f32[32,128], index: 3, kind: output, shape index: {}]
  %s4 = sld [smem:[#allocation0]]
  $region45: #{vision_encoder_forward.8} parent=0
    _
  %s6 = ssub.s32 1, %s4
  %s7 = scalar_select 0, %s6, %s4
  loop: start=0, step=1, limit=4
  $region2: #{vision_encoder_forward.8} parent=0 // loop_pre_header
    _
  $region3: #{vision_encoder_forward.8} parent=0 // loop_header
    %s9 = sphi 0, %s13
    %p10 = scmp.ge.s32.totalorder %s9, 4
    %s19 = sphi 0, %s21
    %s22 = sphi 0, %s19
    %s23 = sphi 0, %s22
    %s39 = sphi 0, %s23
    %s43 = sphi 0, %s43
    %s45 = sphi 0, %s43
    %s46 = sphi 0, %s45
    %s60 = sphi 0, %s46
    %s64 = sphi 0, %s64
    %s66 = sphi 0, %s64
    %s67 = sphi 0, %s66
    %s81 = sphi 0, %s67
    %s87 = sphi 0, %s89
    %s90 = sphi 0, %s87
    %s91 = sphi 0, %s90
    %s107 = sphi 0, %s91
  $region4: #{vision_encoder_forward.8} parent=0 // loop_header_branch
    %12 = sbr.rel (%p10) target = $region8
  $region5: #{vision_encoder_forward.8} parent=0 // loop_body
    %s14 = ssub.s32 %s9, 1
    %s15 = ssub.s32 %s9, 2
    %s16 = sadd.s32 %s9, 1
    %s17 = ssub.s32 %s9, %s16
    %p18 = scmp.eq.s32.totalorder %s17, 0
    %s20 = sadd.s32 %s19, 1
    %s21 = scalar_select %p18, %s19, %s20
    %p24 = pneg %p18
    %p25 = scmp.eq.s32.totalorder %s9, 1
    %p26 = por %p24, %p25
    %p27 = scmp.ne.s32.totalorder %s19, %s22
    %p28 = scmp.eq.s32.totalorder %s9, 0
    %p29 = por %p27, %p28
    %p30 = scmp.ne.s32.totalorder %s19, %s22
    %p31 = scmp.eq.s32.totalorder %s14, 1
    %p32 = por %p30, %p31
    %p33 = scmp.ne.s32.totalorder %s22, %s23
    %p34 = scmp.eq.s32.totalorder %s14, 0
    %p35 = por %p33, %p34
    %p36 = scmp.ne.s32.totalorder %s22, %s23
    %p37 = scmp.eq.s32.totalorder %s15, 1
    %p38 = por %p36, %p37
    %p40 = scmp.ne.s32.totalorder %s23, %s39
    %p41 = scmp.eq.s32.totalorder %s15, 0
    %p42 = por %p40, %p41
    %s44 = sadd.s32 %s43, 1
    %p47 = scmp.eq.s32.totalorder %s9, 1
    %p48 = scmp.ne.s32.totalorder %s43, %s45
    %p49 = scmp.eq.s32.totalorder %s9, 0
    %p50 = por %p48, %p49
    %p51 = scmp.ne.s32.totalorder %s43, %s45
    %p52 = scmp.eq.s32.totalorder %s14, 1
    %p53 = por %p51, %p52
    %p54 = scmp.ne.s32.totalorder %s45, %s46
    %p55 = scmp.eq.s32.totalorder %s14, 0
    %p56 = por %p54, %p55
    %p57 = scmp.ne.s32.totalorder %s45, %s46
    %p58 = scmp.eq.s32.totalorder %s15, 1
    %p59 = por %p57, %p58
    %p61 = scmp.ne.s32.totalorder %s46, %s60
    %p62 = scmp.eq.s32.totalorder %s15, 0
    %p63 = por %p61, %p62
    %s65 = sadd.s32 %s64, 1
    %p68 = scmp.eq.s32.totalorder %s9, 1
    %p69 = scmp.ne.s32.totalorder %s64, %s66
    %p70 = scmp.eq.s32.totalorder %s9, 0
    %p71 = por %p69, %p70
    %p72 = scmp.ne.s32.totalorder %s64, %s66
    %p73 = scmp.eq.s32.totalorder %s14, 1
    %p74 = por %p72, %p73
    %p75 = scmp.ne.s32.totalorder %s66, %s67
    %p76 = scmp.eq.s32.totalorder %s14, 0
    %p77 = por %p75, %p76
    %p78 = scmp.ne.s32.totalorder %s66, %s67
    %p79 = scmp.eq.s32.totalorder %s15, 1
    %p80 = por %p78, %p79
    %p82 = scmp.ne.s32.totalorder %s67, %s81
    %p83 = scmp.eq.s32.totalorder %s15, 0
    %p84 = por %p82, %p83
    %s85 = ssub.s32 %s9, %s16
    %p86 = scmp.eq.s32.totalorder %s85, 0
    %s88 = sadd.s32 %s87, 1
    %s89 = scalar_select %p86, %s87, %s88
    %p92 = pneg %p86
    %p93 = scmp.eq.s32.totalorder %s9, 1
    %p94 = por %p92, %p93
    %p95 = scmp.ne.s32.totalorder %s87, %s90
    %p96 = scmp.eq.s32.totalorder %s9, 0
    %p97 = por %p95, %p96
    %p98 = scmp.ne.s32.totalorder %s87, %s90
    %p99 = scmp.eq.s32.totalorder %s14, 1
    %p100 = por %p98, %p99
    %p101 = scmp.ne.s32.totalorder %s90, %s91
    %p102 = scmp.eq.s32.totalorder %s14, 0
    %p103 = por %p101, %p102
    %p104 = scmp.ne.s32.totalorder %s90, %s91
    %p105 = scmp.eq.s32.totalorder %s15, 1
    %p106 = por %p104, %p105
    %p108 = scmp.ne.s32.totalorder %s91, %s107
    %p109 = scmp.eq.s32.totalorder %s15, 0
    %p110 = por %p108, %p109
    %p111 = scmp.le.s32.totalorder 1, %s9
    %p112 = scmp.lt.s32.totalorder %s9, 3
    %p113 = pnand %p111, %p112
    %p114 = pneg %p113
    // Predicated region
    $region9: #{vision_encoder_forward.8} parent=5 // pred_check
      _
    $region10: #{vision_encoder_forward.8} parent=5 // pred_check_branch
      %116 = sbr.rel (%p113) target = $region12
    $region11: #{vision_encoder_forward.8} parent=5 // pred_region
      %s117 = ssub.s32 %s9, 1
      // Predicated region
      $region13: #{vision_encoder_forward.8} parent=11 // pred_check
        %p118 = pneg %p56
      $region14: #{vision_encoder_forward.8} parent=11 // pred_check_branch
        %120 = sbr.rel (%p118) target = $region16
      $region15: #{vision_encoder_forward.8} parent=11 // pred_region
        _
      $region16: #{vision_encoder_forward.8} parent=11 // pred_fallthru
        _
      // Predicated region
      $region17: #{vision_encoder_forward.8} parent=11 // pred_check
        %p121 = pneg %p77
      $region18: #{vision_encoder_forward.8} parent=11 // pred_check_branch
        %123 = sbr.rel (%p121) target = $region20
      $region19: #{vision_encoder_forward.8} parent=11 // pred_region
        _
      $region20: #{vision_encoder_forward.8} parent=11 // pred_fallthru
        _
    $region12: #{vision_encoder_forward.8} parent=5 // pred_fallthru
      _
    %p124 = scmp.lt.s32.totalorder %s9, 2
    // Predicated region
    $region21: #{vision_encoder_forward.8} parent=5 // pred_check
      %p125 = pneg %p124
    $region22: #{vision_encoder_forward.8} parent=5 // pred_check_branch
      %127 = sbr.rel (%p125) target = $region24
    $region23: #{vision_encoder_forward.8} parent=5 // pred_region
      // Predicated region
      $region25: #{vision_encoder_forward.8} parent=23 // pred_check
        %p128 = pneg %p29
      $region26: #{vision_encoder_forward.8} parent=23 // pred_check_branch
        %130 = sbr.rel (%p128) target = $region28
      $region27: #{vision_encoder_forward.8} parent=23 // pred_region
        %s131 = smul.u32 2, %s9
        %p132 = scmp.lt.s32.totalorder %s131, 3
        %s133 = scalar_select %p132, %s131, 3
        %s134 = smul.addr %s133, 8
        %s135 = scalar_lea.vmem %s0, %s134
        %s136 = smul.u32 2, %s9
      $region28: #{vision_encoder_forward.8} parent=23 // pred_fallthru
        _
    $region24: #{vision_encoder_forward.8} parent=5 // pred_fallthru
      _
    %p137 = scmp.le.s32.totalorder 1, %s9
    %p138 = scmp.lt.s32.totalorder %s9, 3
    %p139 = pnand %p137, %p138
    %p140 = pneg %p139
    // Predicated region
    $region29: #{vision_encoder_forward.8} parent=5 // pred_check
      _
    $region30: #{vision_encoder_forward.8} parent=5 // pred_check_branch
      %142 = sbr.rel (%p139) target = $region32
    $region31: #{vision_encoder_forward.8} parent=5 // pred_region
      %s143 = ssub.s32 %s9, 1
      %s144 = smul.u32 2, %s14
      %p145 = scmp.lt.s32.totalorder %s144, 3
      %s146 = scalar_select %p145, %s144, 3
      %s147 = smul.addr %s146, 8
      %s148 = scalar_lea.vmem %s0, %s147
      %p149 = pneg %p35
      %p150 = pneg %p32
      %p151 = pneg %p56
      %p152 = pneg %p53
      %p153 = pneg %p77
      %p154 = pneg %p74
      %p155 = pneg %p103
      %p156 = pneg %p100
      %s157 = smul.u32 2, %s14
      %p158 = scmp.lt.s32.totalorder %s157, 3
      %s159 = scalar_select %p158, %s157, 3
      %s160 = smul.addr %s159, 8
      %s161 = scalar_lea.vmem %s3, %s160
      %s162 = smul.u32 2, %s14
      %p163 = scmp.lt.s32.totalorder %s162, 3
      %s164 = scalar_select %p163, %s162, 3
      %s165 = smul.addr %s164, 8
      %s166 = scalar_lea.vmem %s0, %s165
      %s167 = smul.u32 2, %s14
      %s168 = smul.u32 2, %s14
      %p169 = scmp.lt.s32.totalorder %s168, 3
      %s170 = scalar_select %p169, %s168, 3
      %s171 = smul.addr %s170, 8
      %s172 = scalar_lea.vmem %s3, %s171
      %s173 = smul.u32 2, %s14
      %v174 = vld [vmem:[%s166] sm:$0xff]
      %v175 = vld [vmem:[%s166 + $0x8] sm:$0xff]
      %176 = vadd.xlane.f32.xlu0 %v174
      %v177 = vpop.xlane.xlu0 %176
      %178 = vadd.xlane.f32.xlu0 %v175
      %v179 = vpop.xlane.xlu0 %178
      %v180 = vrcp.pop 128.0
      %v181 = vmul.f32 %v177, %v180
      %v182 = vmul.f32 %v179, %v180
      %v183 = vsub.f32 %v174, %v181
      %v184 = vsub.f32 %v175, %v182
      %v185 = vmul.f32 %v183, %v183
      %v186 = vmul.f32 %v184, %v184
      %187 = vadd.xlane.f32.xlu0 %v185
      %v188 = vpop.xlane.xlu0 %187
      %189 = vadd.xlane.f32.xlu0 %v186
      %v190 = vpop.xlane.xlu0 %189
      %v191 = vmul.f32 %v188, %v180
      %v192 = vmul.f32 %v190, %v180
      %v193 = vadd.f32 %v191, 1e-05
      %v194 = vadd.f32 %v192, 1e-05
      %v195 = vrsqrt.pop %v193
      %v196 = vrsqrt.pop %v194
      %v197 = vmul.f32 %v183, %v195
      %v198 = vmul.f32 %v184, %v196
      %v199 = vld [vmem:[%s1] sm:$0x1]
      %v201 = vlaneseq
      %v202 = vshrl.u32 %v201, 7
      %v203 = vsub.s32 0, %v202
      %v204 = vrot.slane %v199, %v203
      %v206 = vmul.f32 %v197, %v204
      %v207 = vmul.f32 %v198, %v204
      %v208 = vld [vmem:[%s2] sm:$0x1]
      %v210 = vlaneseq
      %v211 = vshrl.u32 %v210, 7
      %v212 = vsub.s32 0, %v211
      %v213 = vrot.slane %v208, %v212
      %v215 = vadd.f32 %v206, %v213
      %v216 = vadd.f32 %v207, %v213
      %217 = vst [vmem:[%s172] sm:$0xff] %v215
      %218 = vst [vmem:[%s172 + $0x8] sm:$0xff] %v216
      %s219 = smul.u32 2, %s14
      %p220 = scmp.lt.s32.totalorder %s219, 3
      %s221 = scalar_select %p220, %s219, 3
      %s222 = smul.addr %s221, 8
      %s223 = scalar_lea.vmem %s3, %s222
      // Predicated region
      $region33: #{vision_encoder_forward.8} parent=31 // pred_check
        %p224 = pneg %p100
      $region34: #{vision_encoder_forward.8} parent=31 // pred_check_branch
        %226 = sbr.rel (%p224) target = $region36
      $region35: #{vision_encoder_forward.8} parent=31 // pred_region
        %s227 = smul.u32 2, %s14
      $region36: #{vision_encoder_forward.8} parent=31 // pred_fallthru
        _
    $region32: #{vision_encoder_forward.8} parent=5 // pred_fallthru
      _
    %p228 = scmp.le.s32.totalorder 2, %s9
    // Predicated region
    $region37: #{vision_encoder_forward.8} parent=5 // pred_check
      %p229 = pneg %p228
    $region38: #{vision_encoder_forward.8} parent=5 // pred_check_branch
      %231 = sbr.rel (%p229) target = $region40
    $region39: #{vision_encoder_forward.8} parent=5 // pred_region
      %s232 = ssub.s32 %s9, 2
      // Predicated region
      $region41: #{vision_encoder_forward.8} parent=39 // pred_check
        %p233 = pneg %p106
      $region42: #{vision_encoder_forward.8} parent=39 // pred_check_branch
        %235 = sbr.rel (%p233) target = $region44
      $region43: #{vision_encoder_forward.8} parent=39 // pred_region
        %s236 = smul.u32 2, %s15
        %p237 = scmp.lt.s32.totalorder %s236, 3
        %s238 = scalar_select %p237, %s236, 3
        %s239 = smul.addr %s238, 8
        %s240 = scalar_lea.vmem %s3, %s239
      $region44: #{vision_encoder_forward.8} parent=39 // pred_fallthru
        _
    $region40: #{vision_encoder_forward.8} parent=5 // pred_fallthru
      _
  $region6: #{vision_encoder_forward.8} parent=0 // loop_footer
    %s13 = sadd.s32 1, %s9
  $region7: #{vision_encoder_forward.8} parent=0 // loop_footer_branch
    %8 = sbr.rel target = $region3
  $region8: #{vision_encoder_forward.8} parent=0 // loop_exit
    _

// kernel: vision_encoder_forward.9
$region0: #{vision_encoder_forward.9}
  #allocation0 [shape = 'u32[]', space=smem, size = 0x4, offset = 0x4, fixed_abs, tag = 'smem constant byte address 0x4 - core index']
  #allocation1 [shape = 'u32[144,128]{1,0:T(1,128)}', space=vmem, size = 0x12000, scoped, tag = 'internal scratch']
  %s0 = inlined_call_operand.vmem [shape: f32[32,128], index: 0, kind: input, shape index: {}]
  %s1 = inlined_call_operand.vmem [shape: f32[128,32], index: 1, kind: input, shape index: {}]
  %s2 = inlined_call_operand.vmem [shape: f32[1,32], index: 2, kind: input, shape index: {}]
  %s3 = inlined_call_operand.vmem [shape: f32[32,192], index: 3, kind: input, shape index: {}]
  %s4 = inlined_call_operand.vmem [shape: f32[32,192], index: 4, kind: output, shape index: {}]
  %s5 = sld [smem:[#allocation0]]
  $region49: #{vision_encoder_forward.9} parent=0
    _
  %s7 = ssub.s32 1, %s5
  %s8 = scalar_select 0, %s7, %s5
  loop: start=0, step=1, limit=4
  $region2: #{vision_encoder_forward.9} parent=0 // loop_pre_header
    _
  $region3: #{vision_encoder_forward.9} parent=0 // loop_header
    %s10 = sphi 0, %s14
    %p11 = scmp.ge.s32.totalorder %s10, 4
    %s20 = sphi 0, %s22
    %s23 = sphi 0, %s20
    %s24 = sphi 0, %s23
    %s40 = sphi 0, %s24
    %s44 = sphi 0, %s44
    %s46 = sphi 0, %s44
    %s47 = sphi 0, %s46
    %s61 = sphi 0, %s47
    %s65 = sphi 0, %s65
    %s67 = sphi 0, %s65
    %s68 = sphi 0, %s67
    %s82 = sphi 0, %s68
    %s86 = sphi 0, %s86
    %s88 = sphi 0, %s86
    %s89 = sphi 0, %s88
    %s103 = sphi 0, %s89
    %s109 = sphi 0, %s111
    %s112 = sphi 0, %s109
    %s113 = sphi 0, %s112
    %s129 = sphi 0, %s113
  $region4: #{vision_encoder_forward.9} parent=0 // loop_header_branch
    %13 = sbr.rel (%p11) target = $region8
  $region5: #{vision_encoder_forward.9} parent=0 // loop_body
    %s15 = ssub.s32 %s10, 1
    %s16 = ssub.s32 %s10, 2
    %s17 = sadd.s32 %s10, 1
    %s18 = ssub.s32 %s10, %s17
    %p19 = scmp.eq.s32.totalorder %s18, 0
    %s21 = sadd.s32 %s20, 1
    %s22 = scalar_select %p19, %s20, %s21
    %p25 = pneg %p19
    %p26 = scmp.eq.s32.totalorder %s10, 1
    %p27 = por %p25, %p26
    %p28 = scmp.ne.s32.totalorder %s20, %s23
    %p29 = scmp.eq.s32.totalorder %s10, 0
    %p30 = por %p28, %p29
    %p31 = scmp.ne.s32.totalorder %s20, %s23
    %p32 = scmp.eq.s32.totalorder %s15, 1
    %p33 = por %p31, %p32
    %p34 = scmp.ne.s32.totalorder %s23, %s24
    %p35 = scmp.eq.s32.totalorder %s15, 0
    %p36 = por %p34, %p35
    %p37 = scmp.ne.s32.totalorder %s23, %s24
    %p38 = scmp.eq.s32.totalorder %s16, 1
    %p39 = por %p37, %p38
    %p41 = scmp.ne.s32.totalorder %s24, %s40
    %p42 = scmp.eq.s32.totalorder %s16, 0
    %p43 = por %p41, %p42
    %s45 = sadd.s32 %s44, 1
    %p48 = scmp.eq.s32.totalorder %s10, 1
    %p49 = scmp.ne.s32.totalorder %s44, %s46
    %p50 = scmp.eq.s32.totalorder %s10, 0
    %p51 = por %p49, %p50
    %p52 = scmp.ne.s32.totalorder %s44, %s46
    %p53 = scmp.eq.s32.totalorder %s15, 1
    %p54 = por %p52, %p53
    %p55 = scmp.ne.s32.totalorder %s46, %s47
    %p56 = scmp.eq.s32.totalorder %s15, 0
    %p57 = por %p55, %p56
    %p58 = scmp.ne.s32.totalorder %s46, %s47
    %p59 = scmp.eq.s32.totalorder %s16, 1
    %p60 = por %p58, %p59
    %p62 = scmp.ne.s32.totalorder %s47, %s61
    %p63 = scmp.eq.s32.totalorder %s16, 0
    %p64 = por %p62, %p63
    %s66 = sadd.s32 %s65, 1
    %p69 = scmp.eq.s32.totalorder %s10, 1
    %p70 = scmp.ne.s32.totalorder %s65, %s67
    %p71 = scmp.eq.s32.totalorder %s10, 0
    %p72 = por %p70, %p71
    %p73 = scmp.ne.s32.totalorder %s65, %s67
    %p74 = scmp.eq.s32.totalorder %s15, 1
    %p75 = por %p73, %p74
    %p76 = scmp.ne.s32.totalorder %s67, %s68
    %p77 = scmp.eq.s32.totalorder %s15, 0
    %p78 = por %p76, %p77
    %p79 = scmp.ne.s32.totalorder %s67, %s68
    %p80 = scmp.eq.s32.totalorder %s16, 1
    %p81 = por %p79, %p80
    %p83 = scmp.ne.s32.totalorder %s68, %s82
    %p84 = scmp.eq.s32.totalorder %s16, 0
    %p85 = por %p83, %p84
    %s87 = sadd.s32 %s86, 1
    %p90 = scmp.eq.s32.totalorder %s10, 1
    %p91 = scmp.ne.s32.totalorder %s86, %s88
    %p92 = scmp.eq.s32.totalorder %s10, 0
    %p93 = por %p91, %p92
    %p94 = scmp.ne.s32.totalorder %s86, %s88
    %p95 = scmp.eq.s32.totalorder %s15, 1
    %p96 = por %p94, %p95
    %p97 = scmp.ne.s32.totalorder %s88, %s89
    %p98 = scmp.eq.s32.totalorder %s15, 0
    %p99 = por %p97, %p98
    %p100 = scmp.ne.s32.totalorder %s88, %s89
    %p101 = scmp.eq.s32.totalorder %s16, 1
    %p102 = por %p100, %p101
    %p104 = scmp.ne.s32.totalorder %s89, %s103
    %p105 = scmp.eq.s32.totalorder %s16, 0
    %p106 = por %p104, %p105
    %s107 = ssub.s32 %s10, %s17
    %p108 = scmp.eq.s32.totalorder %s107, 0
    %s110 = sadd.s32 %s109, 1
    %s111 = scalar_select %p108, %s109, %s110
    %p114 = pneg %p108
    %p115 = scmp.eq.s32.totalorder %s10, 1
    %p116 = por %p114, %p115
    %p117 = scmp.ne.s32.totalorder %s109, %s112
    %p118 = scmp.eq.s32.totalorder %s10, 0
    %p119 = por %p117, %p118
    %p120 = scmp.ne.s32.totalorder %s109, %s112
    %p121 = scmp.eq.s32.totalorder %s15, 1
    %p122 = por %p120, %p121
    %p123 = scmp.ne.s32.totalorder %s112, %s113
    %p124 = scmp.eq.s32.totalorder %s15, 0
    %p125 = por %p123, %p124
    %p126 = scmp.ne.s32.totalorder %s112, %s113
    %p127 = scmp.eq.s32.totalorder %s16, 1
    %p128 = por %p126, %p127
    %p130 = scmp.ne.s32.totalorder %s113, %s129
    %p131 = scmp.eq.s32.totalorder %s16, 0
    %p132 = por %p130, %p131
    %p133 = scmp.le.s32.totalorder 1, %s10
    %p134 = scmp.lt.s32.totalorder %s10, 3
    %p135 = pnand %p133, %p134
    %p136 = pneg %p135
    // Predicated region
    $region9: #{vision_encoder_forward.9} parent=5 // pred_check
      _
    $region10: #{vision_encoder_forward.9} parent=5 // pred_check_branch
      %138 = sbr.rel (%p135) target = $region12
    $region11: #{vision_encoder_forward.9} parent=5 // pred_region
      %s139 = ssub.s32 %s10, 1
      // Predicated region
      $region13: #{vision_encoder_forward.9} parent=11 // pred_check
        %p140 = pneg %p57
      $region14: #{vision_encoder_forward.9} parent=11 // pred_check_branch
        %142 = sbr.rel (%p140) target = $region16
      $region15: #{vision_encoder_forward.9} parent=11 // pred_region
        _
      $region16: #{vision_encoder_forward.9} parent=11 // pred_fallthru
        _
      // Predicated region
      $region17: #{vision_encoder_forward.9} parent=11 // pred_check
        %p143 = pneg %p78
      $region18: #{vision_encoder_forward.9} parent=11 // pred_check_branch
        %145 = sbr.rel (%p143) target = $region20
      $region19: #{vision_encoder_forward.9} parent=11 // pred_region
        _
      $region20: #{vision_encoder_forward.9} parent=11 // pred_fallthru
        _
      // Predicated region
      $region21: #{vision_encoder_forward.9} parent=11 // pred_check
        %p146 = pneg %p99
      $region22: #{vision_encoder_forward.9} parent=11 // pred_check_branch
        %148 = sbr.rel (%p146) target = $region24
      $region23: #{vision_encoder_forward.9} parent=11 // pred_region
        _
      $region24: #{vision_encoder_forward.9} parent=11 // pred_fallthru
        _
    $region12: #{vision_encoder_forward.9} parent=5 // pred_fallthru
      _
    %p149 = scmp.lt.s32.totalorder %s10, 2
    // Predicated region
    $region25: #{vision_encoder_forward.9} parent=5 // pred_check
      %p150 = pneg %p149
    $region26: #{vision_encoder_forward.9} parent=5 // pred_check_branch
      %152 = sbr.rel (%p150) target = $region28
    $region27: #{vision_encoder_forward.9} parent=5 // pred_region
      // Predicated region
      $region29: #{vision_encoder_forward.9} parent=27 // pred_check
        %p153 = pneg %p30
      $region30: #{vision_encoder_forward.9} parent=27 // pred_check_branch
        %155 = sbr.rel (%p153) target = $region32
      $region31: #{vision_encoder_forward.9} parent=27 // pred_region
        %s156 = smul.u32 2, %s10
        %p157 = scmp.lt.s32.totalorder %s156, 3
        %s158 = scalar_select %p157, %s156, 3
        %s159 = smul.addr %s158, 8
        %s160 = scalar_lea.vmem %s0, %s159
        %s161 = smul.u32 2, %s10
      $region32: #{vision_encoder_forward.9} parent=27 // pred_fallthru
        _
    $region28: #{vision_encoder_forward.9} parent=5 // pred_fallthru
      _
    %p162 = scmp.le.s32.totalorder 1, %s10
    %p163 = scmp.lt.s32.totalorder %s10, 3
    %p164 = pnand %p162, %p163
    %p165 = pneg %p164
    // Predicated region
    $region33: #{vision_encoder_forward.9} parent=5 // pred_check
      _
    $region34: #{vision_encoder_forward.9} parent=5 // pred_check_branch
      %167 = sbr.rel (%p164) target = $region36
    $region35: #{vision_encoder_forward.9} parent=5 // pred_region
      %s168 = ssub.s32 %s10, 1
      %s169 = smul.u32 2, %s15
      %p170 = scmp.lt.s32.totalorder %s169, 3
      %s171 = scalar_select %p170, %s169, 3
      %s172 = smul.addr %s171, 8
      %s173 = scalar_lea.vmem %s0, %s172
      %p174 = pneg %p36
      %p175 = pneg %p33
      %p176 = pneg %p57
      %p177 = pneg %p54
      %p178 = pneg %p78
      %p179 = pneg %p75
      %p180 = pneg %p99
      %p181 = pneg %p96
      %p182 = pneg %p125
      %p183 = pneg %p122
      %s184 = smul.u32 2, %s15
      %p185 = scmp.lt.s32.totalorder %s184, 3
      %s186 = scalar_select %p185, %s184, 3
      %s187 = smul.addr %s186, 2
      %s188 = smul.addr %s187, 8
      %s189 = scalar_lea.vmem %s4, %s188
      %s190 = smul.u32 2, %s15
      %p191 = scmp.lt.s32.totalorder %s190, 3
      %s192 = scalar_select %p191, %s190, 3
      %s193 = smul.addr %s192, 8
      %s194 = scalar_lea.vmem %s0, %s193
      %s195 = smul.u32 2, %s15
      %s196 = smul.u32 2, %s15
      %p197 = scmp.lt.s32.totalorder %s196, 3
      %s198 = scalar_select %p197, %s196, 3
      %s199 = smul.addr %s198, 2
      %s200 = smul.addr %s199, 8
      %s201 = scalar_lea.vmem %s4, %s200
      %s202 = smul.u32 2, %s15
      %v203 = vld [vmem:[%s194] sm:$0xff]
      %v204 = vld [vmem:[%s194 + $0x8] sm:$0xff]
      %v205 = vld [vmem:[%s1] sm:$0xff]
      %v206 = vld [vmem:[%s1 + $0x8] sm:$0xff]
      %v207 = vld [vmem:[%s1 + $0x10] sm:$0xff]
      %v208 = vld [vmem:[%s1 + $0x18] sm:$0xff]
      %v209 = vld [vmem:[%s1 + $0x20] sm:$0xff]
      %v210 = vld [vmem:[%s1 + $0x28] sm:$0xff]
      %v211 = vld [vmem:[%s1 + $0x30] sm:$0xff]
      %v212 = vld [vmem:[%s1 + $0x38] sm:$0xff]
      %v213 = vld [vmem:[%s1 + $0x40] sm:$0xff]
      %v214 = vld [vmem:[%s1 + $0x48] sm:$0xff]
      %v215 = vld [vmem:[%s1 + $0x50] sm:$0xff]
      %v216 = vld [vmem:[%s1 + $0x58] sm:$0xff]
      %v217 = vld [vmem:[%s1 + $0x60] sm:$0xff]
      %v218 = vld [vmem:[%s1 + $0x68] sm:$0xff]
      %v219 = vld [vmem:[%s1 + $0x70] sm:$0xff]
      %v220 = vld [vmem:[%s1 + $0x78] sm:$0xff]
      %221 = vmatprep.subr.mxu0 0.0
      %222 = vmatpush1.msra.mxu0 %v205
      %223 = vmatprep.subr.mxu0 0.0
      %224 = vmatpush1.msra.mxu0 %v206
      %225 = vmatprep.subr.mxu0 0.0
      %226 = vmatpush1.msra.mxu0 %v207
      %227 = vmatprep.subr.mxu0 0.0
      %228 = vmatpush1.msra.mxu0 %v208
      %229 = vmatprep.subr.mxu0 0.0
      %230 = vmatpush1.msra.mxu0 %v209
      %231 = vmatprep.subr.mxu0 0.0
      %232 = vmatpush1.msra.mxu0 %v210
      %233 = vmatprep.subr.mxu0 0.0
      %234 = vmatpush1.msra.mxu0 %v211
      %235 = vmatprep.subr.mxu0 0.0
      %236 = vmatpush1.msra.mxu0 %v212
      %237 = vmatprep.subr.mxu0 0.0
      %238 = vmatpush1.msra.mxu0 %v213
      %239 = vmatprep.subr.mxu0 0.0
      %240 = vmatpush1.msra.mxu0 %v214
      %241 = vmatprep.subr.mxu0 0.0
      %242 = vmatpush1.msra.mxu0 %v215
      %243 = vmatprep.subr.mxu0 0.0
      %244 = vmatpush1.msra.mxu0 %v216
      %245 = vmatprep.subr.mxu0 0.0
      %246 = vmatpush1.msra.mxu0 %v217
      %247 = vmatprep.subr.mxu0 0.0
      %248 = vmatpush1.msra.mxu0 %v218
      %249 = vmatprep.subr.mxu0 0.0
      %250 = vmatpush1.msra.mxu0 %v219
      %251 = vmatprep.subr.mxu0 0.0
      %252 = vmatpush1.msra.mxu0 %v220
      %253 = vmatprep.subr.mxu0 0.0
      %254 = vmatpush1.msra.mxu0 0.0
      %255 = vmatprep.subr.mxu0 0.0
      %256 = vmatpush1.msra.mxu0 0.0
      %257 = vmatprep.subr.mxu0 0.0
      %258 = vmatpush1.msra.mxu0 0.0
      %259 = vmatprep.subr.mxu0 0.0
      %260 = vmatpush1.msra.mxu0 0.0
      %261 = vmatprep.subr.mxu0 0.0
      %262 = vmatpush1.msra.mxu0 0.0
      %263 = vmatprep.subr.mxu0 0.0
      %264 = vmatpush1.msra.mxu0 0.0
      %265 = vmatprep.subr.mxu0 0.0
      %266 = vmatpush1.msra.mxu0 0.0
      %267 = vmatprep.subr.mxu0 0.0
      %268 = vmatpush1.msra.mxu0 0.0
      %269 = vmatprep.subr.mxu0 0.0
      %270 = vmatpush1.msra.mxu0 0.0
      %271 = vmatprep.subr.mxu0 0.0
      %272 = vmatpush1.msra.mxu0 0.0
      %273 = vmatprep.subr.mxu0 0.0
      %274 = vmatpush1.msra.mxu0 0.0
      %275 = vmatprep.subr.mxu0 0.0
      %276 = vmatpush1.msra.mxu0 0.0
      %277 = vmatprep.subr.mxu0 0.0
      %278 = vmatpush1.msra.mxu0 0.0
      %279 = vmatprep.subr.mxu0 0.0
      %280 = vmatpush1.msra.mxu0 0.0
      %281 = vmatprep.subr.mxu0 0.0
      %282 = vmatpush1.msra.mxu0 0.0
      %283 = vmatprep.subr.mxu0 0.0
      %284 = vmatpush1.msra.mxu0 0.0
      %285 = vmatprep.mubr.f32.mxu0 0.0
      %286 = vmatmul.mubr.f32.gmra.mrb[0].mxu0 %v203
      %v287 = vpop.f32.mrb[0].mxu0
      %v288 = vadd.f32 0.0, %v287
      %v289 = vpop.f32.mrb[0].mxu0
      %290 = vmatprep.mubr.f32.mxu0 0.0
      %291 = vmatmul.mubr.f32.gmra.mrb[0].mxu0 %v204
      %v292 = vpop.f32.mrb[0].mxu0
      %v293 = vadd.f32 0.0, %v292
      %v294 = vpop.f32.mrb[0].mxu0
      %295 = vdwg.mxu0
      %v296 = vmul.f32 %v288, %v288
      %v297 = vmul.f32 %v293, %v293
      %vm298 = vcmask 261120
      %v299 = vsel %vm298, %v296, 0.0
      %300 = vadd.xlane.f32.xlu0 %v299
      %v301 = vpop.xlane.xlu0 %300
      %v302 = vsel %vm298, %v297, 0.0
      %303 = vadd.xlane.f32.xlu0 %v302
      %v304 = vpop.xlane.xlu0 %303
      %v305 = vrcp.pop 32.0
      %v306 = vmul.f32 %v301, %v305
      %v307 = vmul.f32 %v304, %v305
      %v308 = vld [vmem:[%s2] sm:$0x1]
      %v309 = vadd.f32 %v306, 1e-07
      %v310 = vadd.f32 %v307, 1e-07
      %v311 = vrsqrt.pop %v309
      %v312 = vrsqrt.pop %v310
      %v313 = vmul.f32 %v288, %v311
      %v314 = vmul.f32 %v293, %v312
      %v316 = vlaneseq
      %v317 = vshrl.u32 %v316, 7
      %v318 = vsub.s32 0, %v317
      %v319 = vrot.slane %v308, %v318
      %v321 = vmul.f32 %v319, %v313
      %v322 = vmul.f32 %v319, %v314
      %v323 = vld [vmem:[%s3] sm:$0xff]
      %v324 = vld [vmem:[%s3 + $0x8] sm:$0xff]
      %v325 = vld [vmem:[%s3 + $0x10] sm:$0xff]
      %v326 = vld [vmem:[%s3 + $0x18] sm:$0xff]
      %v327 = vld [vmem:[%s3 + $0x20] sm:$0xff]
      %v328 = vld [vmem:[%s3 + $0x28] sm:$0xff]
      %v329 = vld [vmem:[%s3 + $0x30] sm:$0xff]
      %v330 = vld [vmem:[%s3 + $0x38] sm:$0xff]
      %v332 = vsel %vm298, %v321, 0
      %v335 = vsel %vm298, %v322, 0
      %337 = vmatprep.subr.mxu0 %v324
      %338 = vmatpush1.msra.mxu0 %v323
      %339 = vmatprep.subr.mxu0 %v326
      %340 = vmatpush1.msra.mxu0 %v325
      %341 = vmatprep.subr.mxu0 %v328
      %342 = vmatpush1.msra.mxu0 %v327
      %343 = vmatprep.subr.mxu0 %v330
      %344 = vmatpush1.msra.mxu0 %v329
      %345 = vmatprep.subr.mxu0 0.0
      %346 = vmatpush1.msra.mxu0 0.0
      %347 = vmatprep.subr.mxu0 0.0
      %348 = vmatpush1.msra.mxu0 0.0
      %349 = vmatprep.subr.mxu0 0.0
      %350 = vmatpush1.msra.mxu0 0.0
      %351 = vmatprep.subr.mxu0 0.0
      %352 = vmatpush1.msra.mxu0 0.0
      %353 = vmatprep.subr.mxu0 0.0
      %354 = vmatpush1.msra.mxu0 0.0
      %355 = vmatprep.subr.mxu0 0.0
      %356 = vmatpush1.msra.mxu0 0.0
      %357 = vmatprep.subr.mxu0 0.0
      %358 = vmatpush1.msra.mxu0 0.0
      %359 = vmatprep.subr.mxu0 0.0
      %360 = vmatpush1.msra.mxu0 0.0
      %361 = vmatprep.subr.mxu0 0.0
      %362 = vmatpush1.msra.mxu0 0.0
      %363 = vmatprep.subr.mxu0 0.0
      %364 = vmatpush1.msra.mxu0 0.0
      %365 = vmatprep.subr.mxu0 0.0
      %366 = vmatpush1.msra.mxu0 0.0
      %367 = vmatprep.subr.mxu0 0.0
      %368 = vmatpush1.msra.mxu0 0.0
      %369 = vmatprep.subr.mxu0 0.0
      %370 = vmatpush1.msra.mxu0 0.0
      %371 = vmatprep.subr.mxu0 0.0
      %372 = vmatpush1.msra.mxu0 0.0
      %373 = vmatprep.subr.mxu0 0.0
      %374 = vmatpush1.msra.mxu0 0.0
      %375 = vmatprep.subr.mxu0 0.0
      %376 = vmatpush1.msra.mxu0 0.0
      %377 = vmatprep.subr.mxu0 0.0
      %378 = vmatpush1.msra.mxu0 0.0
      %379 = vmatprep.subr.mxu0 0.0
      %380 = vmatpush1.msra.mxu0 0.0
      %381 = vmatprep.subr.mxu0 0.0
      %382 = vmatpush1.msra.mxu0 0.0
      %383 = vmatprep.subr.mxu0 0.0
      %384 = vmatpush1.msra.mxu0 0.0
      %385 = vmatprep.subr.mxu0 0.0
      %386 = vmatpush1.msra.mxu0 0.0
      %387 = vmatprep.subr.mxu0 0.0
      %388 = vmatpush1.msra.mxu0 0.0
      %389 = vmatprep.subr.mxu0 0.0
      %390 = vmatpush1.msra.mxu0 0.0
      %391 = vmatprep.subr.mxu0 0.0
      %392 = vmatpush1.msra.mxu0 0.0
      %393 = vmatprep.subr.mxu0 0.0
      %394 = vmatpush1.msra.mxu0 0.0
      %395 = vmatprep.subr.mxu0 0.0
      %396 = vmatpush1.msra.mxu0 0.0
      %397 = vmatprep.subr.mxu0 0.0
      %398 = vmatpush1.msra.mxu0 0.0
      %399 = vmatprep.subr.mxu0 0.0
      %400 = vmatpush1.msra.mxu0 0.0
      %401 = vmatprep.mubr.f32.mxu0 0.0
      %402 = vmatmul.mubr.f32.gmra.mrb[0].mxu0 %v332
      %v403 = vpop.f32.mrb[0].mxu0
      %v404 = vadd.f32 0.0, %v403
      %v405 = vpop.f32.mrb[0].mxu0
      %v406 = vadd.f32 0.0, %v405
      %407 = vmatprep.mubr.f32.mxu0 0.0
      %408 = vmatmul.mubr.f32.gmra.mrb[0].mxu0 %v335
      %v409 = vpop.f32.mrb[0].mxu0
      %v410 = vadd.f32 0.0, %v409
      %v411 = vpop.f32.mrb[0].mxu0
      %v412 = vadd.f32 0.0, %v411
      %413 = vdwg.mxu0
      %414 = vst [vmem:[%s201] sm:$0xff] %v404
      %vm415 = vcmask 523264
      %416 = vst.msk [vmem:[%s201 + $0x8] sm:$0xff] %vm415, %v406
      %417 = vst [vmem:[%s201 + $0x10] sm:$0xff] %v410
      %418 = vst.msk [vmem:[%s201 + $0x18] sm:$0xff] %vm415, %v412
      %s419 = smul.u32 2, %s15
      %p420 = scmp.lt.s32.totalorder %s419, 3
      %s421 = scalar_select %p420, %s419, 3
      %s422 = smul.addr %s421, 2
      %s423 = smul.addr %s422, 8
      %s424 = scalar_lea.vmem %s4, %s423
      // Predicated region
      $region37: #{vision_encoder_forward.9} parent=35 // pred_check
        %p425 = pneg %p122
      $region38: #{vision_encoder_forward.9} parent=35 // pred_check_branch
        %427 = sbr.rel (%p425) target = $region40
      $region39: #{vision_encoder_forward.9} parent=35 // pred_region
        %s428 = smul.u32 2, %s15
      $region40: #{vision_encoder_forward.9} parent=35 // pred_fallthru
        _
    $region36: #{vision_encoder_forward.9} parent=5 // pred_fallthru
      _
    %p429 = scmp.le.s32.totalorder 2, %s10
    // Predicated region
    $region41: #{vision_encoder_forward.9} parent=5 // pred_check
      %p430 = pneg %p429
    $region42: #{vision_encoder_forward.9} parent=5 // pred_check_branch
      %432 = sbr.rel (%p430) target = $region44
    $region43: #{vision_encoder_forward.9} parent=5 // pred_region
      %s433 = ssub.s32 %s10, 2
      // Predicated region
      $region45: #{vision_encoder_forward.9} parent=43 // pred_check
        %p434 = pneg %p128
      $region46: #{vision_encoder_forward.9} parent=43 // pred_check_branch
        %436 = sbr.rel (%p434) target = $region48
      $region47: #{vision_encoder_forward.9} parent=43 // pred_region
        %s437 = smul.u32 2, %s16
        %p438 = scmp.lt.s32.totalorder %s437, 3
        %s439 = scalar_select %p438, %s437, 3
        %s440 = smul.addr %s439, 2
        %s441 = smul.addr %s440, 8
        %s442 = scalar_lea.vmem %s4, %s441
      $region48: #{vision_encoder_forward.9} parent=43 // pred_fallthru
        _
    $region44: #{vision_encoder_forward.9} parent=5 // pred_fallthru
      _
  $region6: #{vision_encoder_forward.9} parent=0 // loop_footer
    %s14 = sadd.s32 1, %s10
  $region7: #{vision_encoder_forward.9} parent=0 // loop_footer_branch
    %9 = sbr.rel target = $region3
  $region8: #{vision_encoder_forward.9} parent=0 // loop_exit
    _

// kernel: vision_encoder_forward.10
$region0: #{vision_encoder_forward.10}
  #allocation0 [shape = 'u32[]', space=smem, size = 0x4, offset = 0x4, fixed_abs, tag = 'smem constant byte address 0x4 - core index']
  #allocation1 [shape = 'u32[144,128]{1,0:T(1,128)}', space=vmem, size = 0x12000, scoped, tag = 'internal scratch']
  %s0 = inlined_call_operand.vmem [shape: f32[32,128], index: 0, kind: input, shape index: {}]
  %s1 = inlined_call_operand.vmem [shape: f32[128,8], index: 1, kind: input, shape index: {}]
  %s2 = inlined_call_operand.vmem [shape: f32[128,32], index: 2, kind: input, shape index: {}]
  %s3 = inlined_call_operand.vmem [shape: f32[1,8], index: 3, kind: input, shape index: {}]
  %s4 = inlined_call_operand.vmem [shape: f32[8,256], index: 4, kind: input, shape index: {}]
  %s5 = inlined_call_operand.vmem [shape: f32[32,256], index: 5, kind: output, shape index: {0}]
  %s6 = inlined_call_operand.vmem [shape: f32[32,32], index: 6, kind: output, shape index: {1}]
  %7 = xla_tuple %s5, %s6
  %s8 = sld [smem:[#allocation0]]
  $region61: #{vision_encoder_forward.10} parent=0
    _
  %s10 = ssub.s32 1, %s8
  %s11 = scalar_select 0, %s10, %s8
  loop: start=0, step=1, limit=4
  $region2: #{vision_encoder_forward.10} parent=0 // loop_pre_header
    _
  $region3: #{vision_encoder_forward.10} parent=0 // loop_header
    %s13 = sphi 0, %s17
    %p14 = scmp.ge.s32.totalorder %s13, 4
    %s23 = sphi 0, %s25
    %s26 = sphi 0, %s23
    %s27 = sphi 0, %s26
    %s43 = sphi 0, %s27
    %s47 = sphi 0, %s47
    %s49 = sphi 0, %s47
    %s50 = sphi 0, %s49
    %s64 = sphi 0, %s50
    %s68 = sphi 0, %s68
    %s70 = sphi 0, %s68
    %s71 = sphi 0, %s70
    %s85 = sphi 0, %s71
    %s89 = sphi 0, %s89
    %s91 = sphi 0, %s89
    %s92 = sphi 0, %s91
    %s106 = sphi 0, %s92
    %s110 = sphi 0, %s110
    %s112 = sphi 0, %s110
    %s113 = sphi 0, %s112
    %s127 = sphi 0, %s113
    %s133 = sphi 0, %s135
    %s136 = sphi 0, %s133
    %s137 = sphi 0, %s136
    %s153 = sphi 0, %s137
    %s159 = sphi 0, %s161
    %s162 = sphi 0, %s159
    %s163 = sphi 0, %s162
    %s179 = sphi 0, %s163
  $region4: #{vision_encoder_forward.10} parent=0 // loop_header_branch
    %16 = sbr.rel (%p14) target = $region8
  $region5: #{vision_encoder_forward.10} parent=0 // loop_body
    %s18 = ssub.s32 %s13, 1
    %s19 = ssub.s32 %s13, 2
    %s20 = sadd.s32 %s13, 1
    %s21 = ssub.s32 %s13, %s20
    %p22 = scmp.eq.s32.totalorder %s21, 0
    %s24 = sadd.s32 %s23, 1
    %s25 = scalar_select %p22, %s23, %s24
    %p28 = pneg %p22
    %p29 = scmp.eq.s32.totalorder %s13, 1
    %p30 = por %p28, %p29
    %p31 = scmp.ne.s32.totalorder %s23, %s26
    %p32 = scmp.eq.s32.totalorder %s13, 0
    %p33 = por %p31, %p32
    %p34 = scmp.ne.s32.totalorder %s23, %s26
    %p35 = scmp.eq.s32.totalorder %s18, 1
    %p36 = por %p34, %p35
    %p37 = scmp.ne.s32.totalorder %s26, %s27
    %p38 = scmp.eq.s32.totalorder %s18, 0
    %p39 = por %p37, %p38
    %p40 = scmp.ne.s32.totalorder %s26, %s27
    %p41 = scmp.eq.s32.totalorder %s19, 1
    %p42 = por %p40, %p41
    %p44 = scmp.ne.s32.totalorder %s27, %s43
    %p45 = scmp.eq.s32.totalorder %s19, 0
    %p46 = por %p44, %p45
    %s48 = sadd.s32 %s47, 1
    %p51 = scmp.eq.s32.totalorder %s13, 1
    %p52 = scmp.ne.s32.totalorder %s47, %s49
    %p53 = scmp.eq.s32.totalorder %s13, 0
    %p54 = por %p52, %p53
    %p55 = scmp.ne.s32.totalorder %s47, %s49
    %p56 = scmp.eq.s32.totalorder %s18, 1
    %p57 = por %p55, %p56
    %p58 = scmp.ne.s32.totalorder %s49, %s50
    %p59 = scmp.eq.s32.totalorder %s18, 0
    %p60 = por %p58, %p59
    %p61 = scmp.ne.s32.totalorder %s49, %s50
    %p62 = scmp.eq.s32.totalorder %s19, 1
    %p63 = por %p61, %p62
    %p65 = scmp.ne.s32.totalorder %s50, %s64
    %p66 = scmp.eq.s32.totalorder %s19, 0
    %p67 = por %p65, %p66
    %s69 = sadd.s32 %s68, 1
    %p72 = scmp.eq.s32.totalorder %s13, 1
    %p73 = scmp.ne.s32.totalorder %s68, %s70
    %p74 = scmp.eq.s32.totalorder %s13, 0
    %p75 = por %p73, %p74
    %p76 = scmp.ne.s32.totalorder %s68, %s70
    %p77 = scmp.eq.s32.totalorder %s18, 1
    %p78 = por %p76, %p77
    %p79 = scmp.ne.s32.totalorder %s70, %s71
    %p80 = scmp.eq.s32.totalorder %s18, 0
    %p81 = por %p79, %p80
    %p82 = scmp.ne.s32.totalorder %s70, %s71
    %p83 = scmp.eq.s32.totalorder %s19, 1
    %p84 = por %p82, %p83
    %p86 = scmp.ne.s32.totalorder %s71, %s85
    %p87 = scmp.eq.s32.totalorder %s19, 0
    %p88 = por %p86, %p87
    %s90 = sadd.s32 %s89, 1
    %p93 = scmp.eq.s32.totalorder %s13, 1
    %p94 = scmp.ne.s32.totalorder %s89, %s91
    %p95 = scmp.eq.s32.totalorder %s13, 0
    %p96 = por %p94, %p95
    %p97 = scmp.ne.s32.totalorder %s89, %s91
    %p98 = scmp.eq.s32.totalorder %s18, 1
    %p99 = por %p97, %p98
    %p100 = scmp.ne.s32.totalorder %s91, %s92
    %p101 = scmp.eq.s32.totalorder %s18, 0
    %p102 = por %p100, %p101
    %p103 = scmp.ne.s32.totalorder %s91, %s92
    %p104 = scmp.eq.s32.totalorder %s19, 1
    %p105 = por %p103, %p104
    %p107 = scmp.ne.s32.totalorder %s92, %s106
    %p108 = scmp.eq.s32.totalorder %s19, 0
    %p109 = por %p107, %p108
    %s111 = sadd.s32 %s110, 1
    %p114 = scmp.eq.s32.totalorder %s13, 1
    %p115 = scmp.ne.s32.totalorder %s110, %s112
    %p116 = scmp.eq.s32.totalorder %s13, 0
    %p117 = por %p115, %p116
    %p118 = scmp.ne.s32.totalorder %s110, %s112
    %p119 = scmp.eq.s32.totalorder %s18, 1
    %p120 = por %p118, %p119
    %p121 = scmp.ne.s32.totalorder %s112, %s113
    %p122 = scmp.eq.s32.totalorder %s18, 0
    %p123 = por %p121, %p122
    %p124 = scmp.ne.s32.totalorder %s112, %s113
    %p125 = scmp.eq.s32.totalorder %s19, 1
    %p126 = por %p124, %p125
    %p128 = scmp.ne.s32.totalorder %s113, %s127
    %p129 = scmp.eq.s32.totalorder %s19, 0
    %p130 = por %p128, %p129
    %s131 = ssub.s32 %s13, %s20
    %p132 = scmp.eq.s32.totalorder %s131, 0
    %s134 = sadd.s32 %s133, 1
    %s135 = scalar_select %p132, %s133, %s134
    %p138 = pneg %p132
    %p139 = scmp.eq.s32.totalorder %s13, 1
    %p140 = por %p138, %p139
    %p141 = scmp.ne.s32.totalorder %s133, %s136
    %p142 = scmp.eq.s32.totalorder %s13, 0
    %p143 = por %p141, %p142
    %p144 = scmp.ne.s32.totalorder %s133, %s136
    %p145 = scmp.eq.s32.totalorder %s18, 1
    %p146 = por %p144, %p145
    %p147 = scmp.ne.s32.totalorder %s136, %s137
    %p148 = scmp.eq.s32.totalorder %s18, 0
    %p149 = por %p147, %p148
    %p150 = scmp.ne.s32.totalorder %s136, %s137
    %p151 = scmp.eq.s32.totalorder %s19, 1
    %p152 = por %p150, %p151
    %p154 = scmp.ne.s32.totalorder %s137, %s153
    %p155 = scmp.eq.s32.totalorder %s19, 0
    %p156 = por %p154, %p155
    %s157 = ssub.s32 %s13, %s20
    %p158 = scmp.eq.s32.totalorder %s157, 0
    %s160 = sadd.s32 %s159, 1
    %s161 = scalar_select %p158, %s159, %s160
    %p164 = pneg %p158
    %p165 = scmp.eq.s32.totalorder %s13, 1
    %p166 = por %p164, %p165
    %p167 = scmp.ne.s32.totalorder %s159, %s162
    %p168 = scmp.eq.s32.totalorder %s13, 0
    %p169 = por %p167, %p168
    %p170 = scmp.ne.s32.totalorder %s159, %s162
    %p171 = scmp.eq.s32.totalorder %s18, 1
    %p172 = por %p170, %p171
    %p173 = scmp.ne.s32.totalorder %s162, %s163
    %p174 = scmp.eq.s32.totalorder %s18, 0
    %p175 = por %p173, %p174
    %p176 = scmp.ne.s32.totalorder %s162, %s163
    %p177 = scmp.eq.s32.totalorder %s19, 1
    %p178 = por %p176, %p177
    %p180 = scmp.ne.s32.totalorder %s163, %s179
    %p181 = scmp.eq.s32.totalorder %s19, 0
    %p182 = por %p180, %p181
    %p183 = scmp.le.s32.totalorder 1, %s13
    %p184 = scmp.lt.s32.totalorder %s13, 3
    %p185 = pnand %p183, %p184
    %p186 = pneg %p185
    // Predicated region
    $region9: #{vision_encoder_forward.10} parent=5 // pred_check
      _
    $region10: #{vision_encoder_forward.10} parent=5 // pred_check_branch
      %188 = sbr.rel (%p185) target = $region12
    $region11: #{vision_encoder_forward.10} parent=5 // pred_region
      %s189 = ssub.s32 %s13, 1
      // Predicated region
      $region13: #{vision_encoder_forward.10} parent=11 // pred_check
        %p190 = pneg %p60
      $region14: #{vision_encoder_forward.10} parent=11 // pred_check_branch
        %192 = sbr.rel (%p190) target = $region16
      $region15: #{vision_encoder_forward.10} parent=11 // pred_region
        _
      $region16: #{vision_encoder_forward.10} parent=11 // pred_fallthru
        _
      // Predicated region
      $region17: #{vision_encoder_forward.10} parent=11 // pred_check
        %p193 = pneg %p81
      $region18: #{vision_encoder_forward.10} parent=11 // pred_check_branch
        %195 = sbr.rel (%p193) target = $region20
      $region19: #{vision_encoder_forward.10} parent=11 // pred_region
        _
      $region20: #{vision_encoder_forward.10} parent=11 // pred_fallthru
        _
      // Predicated region
      $region21: #{vision_encoder_forward.10} parent=11 // pred_check
        %p196 = pneg %p102
      $region22: #{vision_encoder_forward.10} parent=11 // pred_check_branch
        %198 = sbr.rel (%p196) target = $region24
      $region23: #{vision_encoder_forward.10} parent=11 // pred_region
        _
      $region24: #{vision_encoder_forward.10} parent=11 // pred_fallthru
        _
      // Predicated region
      $region25: #{vision_encoder_forward.10} parent=11 // pred_check
        %p199 = pneg %p123
      $region26: #{vision_encoder_forward.10} parent=11 // pred_check_branch
        %201 = sbr.rel (%p199) target = $region28
      $region27: #{vision_encoder_forward.10} parent=11 // pred_region
        _
      $region28: #{vision_encoder_forward.10} parent=11 // pred_fallthru
        _
    $region12: #{vision_encoder_forward.10} parent=5 // pred_fallthru
      _
    %p202 = scmp.lt.s32.totalorder %s13, 2
    // Predicated region
    $region29: #{vision_encoder_forward.10} parent=5 // pred_check
      %p203 = pneg %p202
    $region30: #{vision_encoder_forward.10} parent=5 // pred_check_branch
      %205 = sbr.rel (%p203) target = $region32
    $region31: #{vision_encoder_forward.10} parent=5 // pred_region
      // Predicated region
      $region33: #{vision_encoder_forward.10} parent=31 // pred_check
        %p206 = pneg %p33
      $region34: #{vision_encoder_forward.10} parent=31 // pred_check_branch
        %208 = sbr.rel (%p206) target = $region36
      $region35: #{vision_encoder_forward.10} parent=31 // pred_region
        %s209 = smul.u32 2, %s13
        %p210 = scmp.lt.s32.totalorder %s209, 3
        %s211 = scalar_select %p210, %s209, 3
        %s212 = smul.addr %s211, 8
        %s213 = scalar_lea.vmem %s0, %s212
        %s214 = smul.u32 2, %s13
      $region36: #{vision_encoder_forward.10} parent=31 // pred_fallthru
        _
    $region32: #{vision_encoder_forward.10} parent=5 // pred_fallthru
      _
    %p215 = scmp.le.s32.totalorder 1, %s13
    %p216 = scmp.lt.s32.totalorder %s13, 3
    %p217 = pnand %p215, %p216
    %p218 = pneg %p217
    // Predicated region
    $region37: #{vision_encoder_forward.10} parent=5 // pred_check
      _
    $region38: #{vision_encoder_forward.10} parent=5 // pred_check_branch
      %220 = sbr.rel (%p217) target = $region40
    $region39: #{vision_encoder_forward.10} parent=5 // pred_region
      %s221 = ssub.s32 %s13, 1
      %s222 = smul.u32 2, %s18
      %p223 = scmp.lt.s32.totalorder %s222, 3
      %s224 = scalar_select %p223, %s222, 3
      %s225 = smul.addr %s224, 8
      %s226 = scalar_lea.vmem %s0, %s225
      %p227 = pneg %p39
      %p228 = pneg %p36
      %p229 = pneg %p60
      %p230 = pneg %p57
      %p231 = pneg %p81
      %p232 = pneg %p78
      %p233 = pneg %p102
      %p234 = pneg %p99
      %p235 = pneg %p123
      %p236 = pneg %p120
      %p237 = pneg %p149
      %p238 = pneg %p146
      %s239 = smul.u32 2, %s18
      %p240 = scmp.lt.s32.totalorder %s239, 3
      %s241 = scalar_select %p240, %s239, 3
      %s242 = smul.addr %s241, 2
      %s243 = smul.addr %s242, 8
      %s244 = scalar_lea.vmem %s5, %s243
      %p245 = pneg %p175
      %p246 = pneg %p172
      %s247 = smul.u32 2, %s18
      %p248 = scmp.lt.s32.totalorder %s247, 3
      %s249 = scalar_select %p248, %s247, 3
      %s250 = smul.addr %s249, 8
      %s251 = scalar_lea.vmem %s6, %s250
      %s252 = smul.u32 2, %s18
      %p253 = scmp.lt.s32.totalorder %s252, 3
      %s254 = scalar_select %p253, %s252, 3
      %s255 = smul.addr %s254, 8
      %s256 = scalar_lea.vmem %s0, %s255
      %s257 = smul.u32 2, %s18
      %s258 = smul.u32 2, %s18
      %p259 = scmp.lt.s32.totalorder %s258, 3
      %s260 = scalar_select %p259, %s258, 3
      %s261 = smul.addr %s260, 2
      %s262 = smul.addr %s261, 8
      %s263 = scalar_lea.vmem %s5, %s262
      %s264 = smul.u32 2, %s18
      %s265 = smul.u32 2, %s18
      %p266 = scmp.lt.s32.totalorder %s265, 3
      %s267 = scalar_select %p266, %s265, 3
      %s268 = smul.addr %s267, 8
      %s269 = scalar_lea.vmem %s6, %s268
      %s270 = smul.u32 2, %s18
      %v271 = vld [vmem:[%s256] sm:$0xff]
      %v272 = vld [vmem:[%s256 + $0x8] sm:$0xff]
      %v273 = vld [vmem:[%s2] sm:$0xff]
      %v274 = vld [vmem:[%s2 + $0x8] sm:$0xff]
      %v275 = vld [vmem:[%s2 + $0x10] sm:$0xff]
      %v276 = vld [vmem:[%s2 + $0x18] sm:$0xff]
      %v277 = vld [vmem:[%s2 + $0x20] sm:$0xff]
      %v278 = vld [vmem:[%s2 + $0x28] sm:$0xff]
      %v279 = vld [vmem:[%s2 + $0x30] sm:$0xff]
      %v280 = vld [vmem:[%s2 + $0x38] sm:$0xff]
      %v281 = vld [vmem:[%s2 + $0x40] sm:$0xff]
      %v282 = vld [vmem:[%s2 + $0x48] sm:$0xff]
      %v283 = vld [vmem:[%s2 + $0x50] sm:$0xff]
      %v284 = vld [vmem:[%s2 + $0x58] sm:$0xff]
      %v285 = vld [vmem:[%s2 + $0x60] sm:$0xff]
      %v286 = vld [vmem:[%s2 + $0x68] sm:$0xff]
      %v287 = vld [vmem:[%s2 + $0x70] sm:$0xff]
      %v288 = vld [vmem:[%s2 + $0x78] sm:$0xff]
      %289 = vmatprep.subr.mxu0 0.0
      %290 = vmatpush1.msra.mxu0 %v273
      %291 = vmatprep.subr.mxu0 0.0
      %292 = vmatpush1.msra.mxu0 %v274
      %293 = vmatprep.subr.mxu0 0.0
      %294 = vmatpush1.msra.mxu0 %v275
      %295 = vmatprep.subr.mxu0 0.0
      %296 = vmatpush1.msra.mxu0 %v276
      %297 = vmatprep.subr.mxu0 0.0
      %298 = vmatpush1.msra.mxu0 %v277
      %299 = vmatprep.subr.mxu0 0.0
      %300 = vmatpush1.msra.mxu0 %v278
      %301 = vmatprep.subr.mxu0 0.0
      %302 = vmatpush1.msra.mxu0 %v279
      %303 = vmatprep.subr.mxu0 0.0
      %304 = vmatpush1.msra.mxu0 %v280
      %305 = vmatprep.subr.mxu0 0.0
      %306 = vmatpush1.msra.mxu0 %v281
      %307 = vmatprep.subr.mxu0 0.0
      %308 = vmatpush1.msra.mxu0 %v282
      %309 = vmatprep.subr.mxu0 0.0
      %310 = vmatpush1.msra.mxu0 %v283
      %311 = vmatprep.subr.mxu0 0.0
      %312 = vmatpush1.msra.mxu0 %v284
      %313 = vmatprep.subr.mxu0 0.0
      %314 = vmatpush1.msra.mxu0 %v285
      %315 = vmatprep.subr.mxu0 0.0
      %316 = vmatpush1.msra.mxu0 %v286
      %317 = vmatprep.subr.mxu0 0.0
      %318 = vmatpush1.msra.mxu0 %v287
      %319 = vmatprep.subr.mxu0 0.0
      %320 = vmatpush1.msra.mxu0 %v288
      %321 = vmatprep.subr.mxu0 0.0
      %322 = vmatpush1.msra.mxu0 0.0
      %323 = vmatprep.subr.mxu0 0.0
      %324 = vmatpush1.msra.mxu0 0.0
      %325 = vmatprep.subr.mxu0 0.0
      %326 = vmatpush1.msra.mxu0 0.0
      %327 = vmatprep.subr.mxu0 0.0
      %328 = vmatpush1.msra.mxu0 0.0
      %329 = vmatprep.subr.mxu0 0.0
      %330 = vmatpush1.msra.mxu0 0.0
      %331 = vmatprep.subr.mxu0 0.0
      %332 = vmatpush1.msra.mxu0 0.0
      %333 = vmatprep.subr.mxu0 0.0
      %334 = vmatpush1.msra.mxu0 0.0
      %335 = vmatprep.subr.mxu0 0.0
      %336 = vmatpush1.msra.mxu0 0.0
      %337 = vmatprep.subr.mxu0 0.0
      %338 = vmatpush1.msra.mxu0 0.0
      %339 = vmatprep.subr.mxu0 0.0
      %340 = vmatpush1.msra.mxu0 0.0
      %341 = vmatprep.subr.mxu0 0.0
      %342 = vmatpush1.msra.mxu0 0.0
      %343 = vmatprep.subr.mxu0 0.0
      %344 = vmatpush1.msra.mxu0 0.0
      %345 = vmatprep.subr.mxu0 0.0
      %346 = vmatpush1.msra.mxu0 0.0
      %347 = vmatprep.subr.mxu0 0.0
      %348 = vmatpush1.msra.mxu0 0.0
      %349 = vmatprep.subr.mxu0 0.0
      %350 = vmatpush1.msra.mxu0 0.0
      %351 = vmatprep.subr.mxu0 0.0
      %352 = vmatpush1.msra.mxu0 0.0
      %353 = vmatprep.mubr.f32.mxu0 0.0
      %354 = vmatmul.mubr.f32.gmra.mrb[0].mxu0 %v271
      %v355 = vpop.f32.mrb[0].mxu0
      %v356 = vadd.f32 0.0, %v355
      %v357 = vpop.f32.mrb[0].mxu0
      %358 = vmatprep.mubr.f32.mxu0 0.0
      %359 = vmatmul.mubr.f32.gmra.mrb[0].mxu0 %v272
      %v360 = vpop.f32.mrb[0].mxu0
      %v361 = vadd.f32 0.0, %v360
      %v362 = vpop.f32.mrb[0].mxu0
      %363 = vdwg.mxu0
      %vm364 = vcmask 261120
      %365 = vst.msk [vmem:[%s269] sm:$0xff] %vm364, %v356
      %366 = vst.msk [vmem:[%s269 + $0x8] sm:$0xff] %vm364, %v361
      %v367 = vld [vmem:[%s1] sm:$0xff]
      %v368 = vld [vmem:[%s1 + $0x8] sm:$0xff]
      %v369 = vld [vmem:[%s1 + $0x10] sm:$0xff]
      %v370 = vld [vmem:[%s1 + $0x18] sm:$0xff]
      %v371 = vld [vmem:[%s1 + $0x20] sm:$0xff]
      %v372 = vld [vmem:[%s1 + $0x28] sm:$0xff]
      %v373 = vld [vmem:[%s1 + $0x30] sm:$0xff]
      %v374 = vld [vmem:[%s1 + $0x38] sm:$0xff]
      %v375 = vld [vmem:[%s1 + $0x40] sm:$0xff]
      %v376 = vld [vmem:[%s1 + $0x48] sm:$0xff]
      %v377 = vld [vmem:[%s1 + $0x50] sm:$0xff]
      %v378 = vld [vmem:[%s1 + $0x58] sm:$0xff]
      %v379 = vld [vmem:[%s1 + $0x60] sm:$0xff]
      %v380 = vld [vmem:[%s1 + $0x68] sm:$0xff]
      %v381 = vld [vmem:[%s1 + $0x70] sm:$0xff]
      %v382 = vld [vmem:[%s1 + $0x78] sm:$0xff]
      %383 = vmatprep.subr.mxu0 0.0
      %384 = vmatpush1.msra.mxu0 %v367
      %385 = vmatprep.subr.mxu0 0.0
      %386 = vmatpush1.msra.mxu0 %v368
      %387 = vmatprep.subr.mxu0 0.0
      %388 = vmatpush1.msra.mxu0 %v369
      %389 = vmatprep.subr.mxu0 0.0
      %390 = vmatpush1.msra.mxu0 %v370
      %391 = vmatprep.subr.mxu0 0.0
      %392 = vmatpush1.msra.mxu0 %v371
      %393 = vmatprep.subr.mxu0 0.0
      %394 = vmatpush1.msra.mxu0 %v372
      %395 = vmatprep.subr.mxu0 0.0
      %396 = vmatpush1.msra.mxu0 %v373
      %397 = vmatprep.subr.mxu0 0.0
      %398 = vmatpush1.msra.mxu0 %v374
      %399 = vmatprep.subr.mxu0 0.0
      %400 = vmatpush1.msra.mxu0 %v375
      %401 = vmatprep.subr.mxu0 0.0
      %402 = vmatpush1.msra.mxu0 %v376
      %403 = vmatprep.subr.mxu0 0.0
      %404 = vmatpush1.msra.mxu0 %v377
      %405 = vmatprep.subr.mxu0 0.0
      %406 = vmatpush1.msra.mxu0 %v378
      %407 = vmatprep.subr.mxu0 0.0
      %408 = vmatpush1.msra.mxu0 %v379
      %409 = vmatprep.subr.mxu0 0.0
      %410 = vmatpush1.msra.mxu0 %v380
      %411 = vmatprep.subr.mxu0 0.0
      %412 = vmatpush1.msra.mxu0 %v381
      %413 = vmatprep.subr.mxu0 0.0
      %414 = vmatpush1.msra.mxu0 %v382
      %415 = vmatprep.subr.mxu0 0.0
      %416 = vmatpush1.msra.mxu0 0.0
      %417 = vmatprep.subr.mxu0 0.0
      %418 = vmatpush1.msra.mxu0 0.0
      %419 = vmatprep.subr.mxu0 0.0
      %420 = vmatpush1.msra.mxu0 0.0
      %421 = vmatprep.subr.mxu0 0.0
      %422 = vmatpush1.msra.mxu0 0.0
      %423 = vmatprep.subr.mxu0 0.0
      %424 = vmatpush1.msra.mxu0 0.0
      %425 = vmatprep.subr.mxu0 0.0
      %426 = vmatpush1.msra.mxu0 0.0
      %427 = vmatprep.subr.mxu0 0.0
      %428 = vmatpush1.msra.mxu0 0.0
      %429 = vmatprep.subr.mxu0 0.0
      %430 = vmatpush1.msra.mxu0 0.0
      %431 = vmatprep.subr.mxu0 0.0
      %432 = vmatpush1.msra.mxu0 0.0
      %433 = vmatprep.subr.mxu0 0.0
      %434 = vmatpush1.msra.mxu0 0.0
      %435 = vmatprep.subr.mxu0 0.0
      %436 = vmatpush1.msra.mxu0 0.0
      %437 = vmatprep.subr.mxu0 0.0
      %438 = vmatpush1.msra.mxu0 0.0
      %439 = vmatprep.subr.mxu0 0.0
      %440 = vmatpush1.msra.mxu0 0.0
      %441 = vmatprep.subr.mxu0 0.0
      %442 = vmatpush1.msra.mxu0 0.0
      %443 = vmatprep.subr.mxu0 0.0
      %444 = vmatpush1.msra.mxu0 0.0
      %445 = vmatprep.subr.mxu0 0.0
      %446 = vmatpush1.msra.mxu0 0.0
      %447 = vmatprep.mubr.f32.mxu0 0.0
      %448 = vmatmul.mubr.f32.gmra.mrb[0].mxu0 %v271
      %v449 = vpop.f32.mrb[0].mxu0
      %v450 = vadd.f32 0.0, %v449
      %v451 = vpop.f32.mrb[0].mxu0
      %452 = vmatprep.mubr.f32.mxu0 0.0
      %453 = vmatmul.mubr.f32.gmra.mrb[0].mxu0 %v272
      %v454 = vpop.f32.mrb[0].mxu0
      %v455 = vadd.f32 0.0, %v454
      %v456 = vpop.f32.mrb[0].mxu0
      %457 = vdwg.mxu0
      %v458 = vmul.f32 %v450, %v450
      %v459 = vmul.f32 %v455, %v455
      %vm460 = vcmask 64512
      %v461 = vsel %vm460, %v458, 0.0
      %462 = vadd.xlane.f32.xlu0 %v461
      %v463 = vpop.xlane.xlu0 %462
      %v464 = vsel %vm460, %v459, 0.0
      %465 = vadd.xlane.f32.xlu0 %v464
      %v466 = vpop.xlane.xlu0 %465
      %v467 = vrcp.pop 8.0
      %v468 = vmul.f32 %v463, %v467
      %v469 = vmul.f32 %v466, %v467
      %v470 = vld [vmem:[%s3] sm:$0x1]
      %v471 = vadd.f32 %v468, 1e-07
      %v472 = vadd.f32 %v469, 1e-07
      %v473 = vrsqrt.pop %v471
      %v474 = vrsqrt.pop %v472
      %v475 = vmul.f32 %v450, %v473
      %v476 = vmul.f32 %v455, %v474
      %v478 = vlaneseq
      %v479 = vshrl.u32 %v478, 7
      %v480 = vsub.s32 0, %v479
      %v481 = vrot.slane %v470, %v480
      %v483 = vmul.f32 %v481, %v475
      %v484 = vmul.f32 %v481, %v476
      %v485 = vld [vmem:[%s4] sm:$0xff]
      %v486 = vld [vmem:[%s4 + $0x8] sm:$0xff]
      %v488 = vsel %vm460, %v483, 0
      %v491 = vsel %vm460, %v484, 0
      %493 = vmatprep.subr.mxu0 %v486
      %494 = vmatpush1.msra.mxu0 %v485
      %495 = vmatprep.subr.mxu0 0.0
      %496 = vmatpush1.msra.mxu0 0.0
      %497 = vmatprep.subr.mxu0 0.0
      %498 = vmatpush1.msra.mxu0 0.0
      %499 = vmatprep.subr.mxu0 0.0
      %500 = vmatpush1.msra.mxu0 0.0
      %501 = vmatprep.subr.mxu0 0.0
      %502 = vmatpush1.msra.mxu0 0.0
      %503 = vmatprep.subr.mxu0 0.0
      %504 = vmatpush1.msra.mxu0 0.0
      %505 = vmatprep.subr.mxu0 0.0
      %506 = vmatpush1.msra.mxu0 0.0
      %507 = vmatprep.subr.mxu0 0.0
      %508 = vmatpush1.msra.mxu0 0.0
      %509 = vmatprep.subr.mxu0 0.0
      %510 = vmatpush1.msra.mxu0 0.0
      %511 = vmatprep.subr.mxu0 0.0
      %512 = vmatpush1.msra.mxu0 0.0
      %513 = vmatprep.subr.mxu0 0.0
      %514 = vmatpush1.msra.mxu0 0.0
      %515 = vmatprep.subr.mxu0 0.0
      %516 = vmatpush1.msra.mxu0 0.0
      %517 = vmatprep.subr.mxu0 0.0
      %518 = vmatpush1.msra.mxu0 0.0
      %519 = vmatprep.subr.mxu0 0.0
      %520 = vmatpush1.msra.mxu0 0.0
      %521 = vmatprep.subr.mxu0 0.0
      %522 = vmatpush1.msra.mxu0 0.0
      %523 = vmatprep.subr.mxu0 0.0
      %524 = vmatpush1.msra.mxu0 0.0
      %525 = vmatprep.subr.mxu0 0.0
      %526 = vmatpush1.msra.mxu0 0.0
      %527 = vmatprep.subr.mxu0 0.0
      %528 = vmatpush1.msra.mxu0 0.0
      %529 = vmatprep.subr.mxu0 0.0
      %530 = vmatpush1.msra.mxu0 0.0
      %531 = vmatprep.subr.mxu0 0.0
      %532 = vmatpush1.msra.mxu0 0.0
      %533 = vmatprep.subr.mxu0 0.0
      %534 = vmatpush1.msra.mxu0 0.0
      %535 = vmatprep.subr.mxu0 0.0
      %536 = vmatpush1.msra.mxu0 0.0
      %537 = vmatprep.subr.mxu0 0.0
      %538 = vmatpush1.msra.mxu0 0.0
      %539 = vmatprep.subr.mxu0 0.0
      %540 = vmatpush1.msra.mxu0 0.0
      %541 = vmatprep.subr.mxu0 0.0
      %542 = vmatpush1.msra.mxu0 0.0
      %543 = vmatprep.subr.mxu0 0.0
      %544 = vmatpush1.msra.mxu0 0.0
      %545 = vmatprep.subr.mxu0 0.0
      %546 = vmatpush1.msra.mxu0 0.0
      %547 = vmatprep.subr.mxu0 0.0
      %548 = vmatpush1.msra.mxu0 0.0
      %549 = vmatprep.subr.mxu0 0.0
      %550 = vmatpush1.msra.mxu0 0.0
      %551 = vmatprep.subr.mxu0 0.0
      %552 = vmatpush1.msra.mxu0 0.0
      %553 = vmatprep.subr.mxu0 0.0
      %554 = vmatpush1.msra.mxu0 0.0
      %555 = vmatprep.subr.mxu0 0.0
      %556 = vmatpush1.msra.mxu0 0.0
      %557 = vmatprep.mubr.f32.mxu0 0.0
      %558 = vmatmul.mubr.f32.gmra.mrb[0].mxu0 %v488
      %v559 = vpop.f32.mrb[0].mxu0
      %v560 = vadd.f32 0.0, %v559
      %v561 = vpop.f32.mrb[0].mxu0
      %v562 = vadd.f32 0.0, %v561
      %563 = vmatprep.mubr.f32.mxu0 0.0
      %564 = vmatmul.mubr.f32.gmra.mrb[0].mxu0 %v491
      %v565 = vpop.f32.mrb[0].mxu0
      %v566 = vadd.f32 0.0, %v565
      %v567 = vpop.f32.mrb[0].mxu0
      %v568 = vadd.f32 0.0, %v567
      %569 = vdwg.mxu0
      %570 = vst [vmem:[%s263] sm:$0xff] %v560
      %571 = vst [vmem:[%s263 + $0x8] sm:$0xff] %v562
      %572 = vst [vmem:[%s263 + $0x10] sm:$0xff] %v566
      %573 = vst [vmem:[%s263 + $0x18] sm:$0xff] %v568
      %s574 = smul.u32 2, %s18
      %p575 = scmp.lt.s32.totalorder %s574, 3
      %s576 = scalar_select %p575, %s574, 3
      %s577 = smul.addr %s576, 2
      %s578 = smul.addr %s577, 8
      %s579 = scalar_lea.vmem %s5, %s578
      %s580 = smul.u32 2, %s18
      %p581 = scmp.lt.s32.totalorder %s580, 3
      %s582 = scalar_select %p581, %s580, 3
      %s583 = smul.addr %s582, 8
      %s584 = scalar_lea.vmem %s6, %s583
      // Predicated region
      $region41: #{vision_encoder_forward.10} parent=39 // pred_check
        %p585 = pneg %p146
      $region42: #{vision_encoder_forward.10} parent=39 // pred_check_branch
        %587 = sbr.rel (%p585) target = $region44
      $region43: #{vision_encoder_forward.10} parent=39 // pred_region
        %s588 = smul.u32 2, %s18
      $region44: #{vision_encoder_forward.10} parent=39 // pred_fallthru
        _
      // Predicated region
      $region45: #{vision_encoder_forward.10} parent=39 // pred_check
        %p589 = pneg %p172
      $region46: #{vision_encoder_forward.10} parent=39 // pred_check_branch
        %591 = sbr.rel (%p589) target = $region48
      $region47: #{vision_encoder_forward.10} parent=39 // pred_region
        %s592 = smul.u32 2, %s18
      $region48: #{vision_encoder_forward.10} parent=39 // pred_fallthru
        _
    $region40: #{vision_encoder_forward.10} parent=5 // pred_fallthru
      _
    %p593 = scmp.le.s32.totalorder 2, %s13
    // Predicated region
    $region49: #{vision_encoder_forward.10} parent=5 // pred_check
      %p594 = pneg %p593
    $region50: #{vision_encoder_forward.10} parent=5 // pred_check_branch
      %596 = sbr.rel (%p594) target = $region52
    $region51: #{vision_encoder_forward.10} parent=5 // pred_region
      %s597 = ssub.s32 %s13, 2
      // Predicated region
      $region53: #{vision_encoder_forward.10} parent=51 // pred_check
        %p598 = pneg %p152
      $region54: #{vision_encoder_forward.10} parent=51 // pred_check_branch
        %600 = sbr.rel (%p598) target = $region56
      $region55: #{vision_encoder_forward.10} parent=51 // pred_region
        %s601 = smul.u32 2, %s19
        %p602 = scmp.lt.s32.totalorder %s601, 3
        %s603 = scalar_select %p602, %s601, 3
        %s604 = smul.addr %s603, 2
        %s605 = smul.addr %s604, 8
        %s606 = scalar_lea.vmem %s5, %s605
      $region56: #{vision_encoder_forward.10} parent=51 // pred_fallthru
        _
      // Predicated region
      $region57: #{vision_encoder_forward.10} parent=51 // pred_check
        %p607 = pneg %p178
      $region58: #{vision_encoder_forward.10} parent=51 // pred_check_branch
        %609 = sbr.rel (%p607) target = $region60
      $region59: #{vision_encoder_forward.10} parent=51 // pred_region
        %s610 = smul.u32 2, %s19
        %p611 = scmp.lt.s32.totalorder %s610, 3
        %s612 = scalar_select %p611, %s610, 3
        %s613 = smul.addr %s612, 8
        %s614 = scalar_lea.vmem %s6, %s613
      $region60: #{vision_encoder_forward.10} parent=51 // pred_fallthru
        _
    $region52: #{vision_encoder_forward.10} parent=5 // pred_fallthru
      _
  $region6: #{vision_encoder_forward.10} parent=0 // loop_footer
    %s17 = sadd.s32 1, %s13
  $region7: #{vision_encoder_forward.10} parent=0 // loop_footer_branch
    %12 = sbr.rel target = $region3
  $region8: #{vision_encoder_forward.10} parent=0 // loop_exit
    _

// kernel: vision_encoder_forward.12
$region0: #{vision_encoder_forward.12}
  #allocation0 [shape = 'u32[]', space=smem, size = 0x4, offset = 0x4, fixed_abs, tag = 'smem constant byte address 0x4 - core index']
  #allocation1 [shape = 'u32[144,128]{1,0:T(1,128)}', space=vmem, size = 0x12000, scoped, tag = 'internal scratch']
  %s0 = inlined_call_operand.vmem [shape: f32[32,256], index: 0, kind: input, shape index: {}]
  %s1 = inlined_call_operand.vmem [shape: f32[256,128], index: 1, kind: input, shape index: {}]
  %s2 = inlined_call_operand.vmem [shape: f32[32,128], index: 2, kind: input, shape index: {}]
  %s3 = inlined_call_operand.vmem [shape: f32[32,128], index: 3, kind: output, shape index: {}]
  %s4 = sld [smem:[#allocation0]]
  $region45: #{vision_encoder_forward.12} parent=0
    _
  %s6 = ssub.s32 1, %s4
  %s7 = scalar_select 0, %s6, %s4
  loop: start=0, step=1, limit=4
  $region2: #{vision_encoder_forward.12} parent=0 // loop_pre_header
    _
  $region3: #{vision_encoder_forward.12} parent=0 // loop_header
    %s9 = sphi 0, %s13
    %p10 = scmp.ge.s32.totalorder %s9, 4
    %s16 = sphi 0, %s28
    %s17 = sphi 0, %s24
    %s18 = sphi 0, %s16
    %s19 = sphi 0, %s17
    %s20 = sphi 0, %s18
    %s21 = sphi 0, %s19
    %s31 = sphi 0, %s33
    %s34 = sphi 0, %s31
    %s35 = sphi 0, %s34
    %s51 = sphi 0, %s35
    %s57 = sphi 0, %s59
    %s60 = sphi 0, %s57
    %s61 = sphi 0, %s60
    %s77 = sphi 0, %s61
    %s85 = sphi 0, %s87
    %s88 = sphi 0, %s85
    %s89 = sphi 0, %s88
    %s105 = sphi 0, %s89
    %s113 = sphi 0, %s115
    %s116 = sphi 0, %s113
    %s117 = sphi 0, %s116
    %s133 = sphi 0, %s117
  $region4: #{vision_encoder_forward.12} parent=0 // loop_header_branch
    %12 = sbr.rel (%p10) target = $region8
  $region5: #{vision_encoder_forward.12} parent=0 // loop_body
    %s14 = ssub.s32 %s9, 1
    %s15 = ssub.s32 %s9, 2
    %s22 = sadd.s32 1, %s17
    %p23 = scmp.ge.s32.totalorder %s22, 1
    %s24 = scalar_select %p23, 0, %s22
    %s25 = sadd.s32 1, %s16
    %s26 = scalar_select %p23, %s25, %s16
    %p27 = scmp.ge.s32.totalorder %s26, 2
    %s28 = scalar_select %p27, 0, %s26
    %s29 = ssub.s32 %s16, %s28
    %p30 = scmp.eq.s32.totalorder %s29, 0
    %s32 = sadd.s32 %s31, 1
    %s33 = scalar_select %p30, %s31, %s32
    %p36 = pneg %p30
    %p37 = scmp.eq.s32.totalorder %s9, 1
    %p38 = por %p36, %p37
    %p39 = scmp.ne.s32.totalorder %s31, %s34
    %p40 = scmp.eq.s32.totalorder %s9, 0
    %p41 = por %p39, %p40
    %p42 = scmp.ne.s32.totalorder %s31, %s34
    %p43 = scmp.eq.s32.totalorder %s14, 1
    %p44 = por %p42, %p43
    %p45 = scmp.ne.s32.totalorder %s34, %s35
    %p46 = scmp.eq.s32.totalorder %s14, 0
    %p47 = por %p45, %p46
    %p48 = scmp.ne.s32.totalorder %s34, %s35
    %p49 = scmp.eq.s32.totalorder %s15, 1
    %p50 = por %p48, %p49
    %p52 = scmp.ne.s32.totalorder %s35, %s51
    %p53 = scmp.eq.s32.totalorder %s15, 0
    %p54 = por %p52, %p53
    %s55 = ssub.s32 %s17, %s24
    %p56 = scmp.eq.s32.totalorder %s55, 0
    %s58 = sadd.s32 %s57, 1
    %s59 = scalar_select %p56, %s57, %s58
    %p62 = pneg %p56
    %p63 = scmp.eq.s32.totalorder %s9, 1
    %p64 = por %p62, %p63
    %p65 = scmp.ne.s32.totalorder %s57, %s60
    %p66 = scmp.eq.s32.totalorder %s9, 0
    %p67 = por %p65, %p66
    %p68 = scmp.ne.s32.totalorder %s57, %s60
    %p69 = scmp.eq.s32.totalorder %s14, 1
    %p70 = por %p68, %p69
    %p71 = scmp.ne.s32.totalorder %s60, %s61
    %p72 = scmp.eq.s32.totalorder %s14, 0
    %p73 = por %p71, %p72
    %p74 = scmp.ne.s32.totalorder %s60, %s61
    %p75 = scmp.eq.s32.totalorder %s15, 1
    %p76 = por %p74, %p75
    %p78 = scmp.ne.s32.totalorder %s61, %s77
    %p79 = scmp.eq.s32.totalorder %s15, 0
    %p80 = por %p78, %p79
    %s81 = ssub.s32 %s16, %s28
    %s82 = ssub.s32 %s17, %s24
    %s83 = sor.u32 %s81, %s82
    %p84 = scmp.eq.s32.totalorder %s83, 0
    %s86 = sadd.s32 %s85, 1
    %s87 = scalar_select %p84, %s85, %s86
    %p90 = pneg %p84
    %p91 = scmp.eq.s32.totalorder %s9, 1
    %p92 = por %p90, %p91
    %p93 = scmp.ne.s32.totalorder %s85, %s88
    %p94 = scmp.eq.s32.totalorder %s9, 0
    %p95 = por %p93, %p94
    %p96 = scmp.ne.s32.totalorder %s85, %s88
    %p97 = scmp.eq.s32.totalorder %s14, 1
    %p98 = por %p96, %p97
    %p99 = scmp.ne.s32.totalorder %s88, %s89
    %p100 = scmp.eq.s32.totalorder %s14, 0
    %p101 = por %p99, %p100
    %p102 = scmp.ne.s32.totalorder %s88, %s89
    %p103 = scmp.eq.s32.totalorder %s15, 1
    %p104 = por %p102, %p103
    %p106 = scmp.ne.s32.totalorder %s89, %s105
    %p107 = scmp.eq.s32.totalorder %s15, 0
    %p108 = por %p106, %p107
    %s109 = ssub.s32 %s16, %s28
    %s110 = ssub.s32 %s17, %s24
    %s111 = sor.u32 %s109, %s110
    %p112 = scmp.eq.s32.totalorder %s111, 0
    %s114 = sadd.s32 %s113, 1
    %s115 = scalar_select %p112, %s113, %s114
    %p118 = pneg %p112
    %p119 = scmp.eq.s32.totalorder %s9, 1
    %p120 = por %p118, %p119
    %p121 = scmp.ne.s32.totalorder %s113, %s116
    %p122 = scmp.eq.s32.totalorder %s9, 0
    %p123 = por %p121, %p122
    %p124 = scmp.ne.s32.totalorder %s113, %s116
    %p125 = scmp.eq.s32.totalorder %s14, 1
    %p126 = por %p124, %p125
    %p127 = scmp.ne.s32.totalorder %s116, %s117
    %p128 = scmp.eq.s32.totalorder %s14, 0
    %p129 = por %p127, %p128
    %p130 = scmp.ne.s32.totalorder %s116, %s117
    %p131 = scmp.eq.s32.totalorder %s15, 1
    %p132 = por %p130, %p131
    %p134 = scmp.ne.s32.totalorder %s117, %s133
    %p135 = scmp.eq.s32.totalorder %s15, 0
    %p136 = por %p134, %p135
    %p137 = scmp.le.s32.totalorder 1, %s9
    %p138 = scmp.lt.s32.totalorder %s9, 3
    %p139 = pnand %p137, %p138
    %p140 = pneg %p139
    // Predicated region
    $region9: #{vision_encoder_forward.12} parent=5 // pred_check
      _
    $region10: #{vision_encoder_forward.12} parent=5 // pred_check_branch
      %142 = sbr.rel (%p139) target = $region12
    $region11: #{vision_encoder_forward.12} parent=5 // pred_region
      %s143 = ssub.s32 %s9, 1
      // Predicated region
      $region13: #{vision_encoder_forward.12} parent=11 // pred_check
        %p144 = pneg %p73
      $region14: #{vision_encoder_forward.12} parent=11 // pred_check_branch
        %146 = sbr.rel (%p144) target = $region16
      $region15: #{vision_encoder_forward.12} parent=11 // pred_region
        %p147 = scmp.lt.s32.totalorder %s19, 0
        %s148 = scalar_select %p147, %s19, 0
        %s149 = smul.addr %s148, 8
        %s150 = scalar_lea.vmem %s1, %s149
      $region16: #{vision_encoder_forward.12} parent=11 // pred_fallthru
        _
    $region12: #{vision_encoder_forward.12} parent=5 // pred_fallthru
      _
    %p151 = scmp.lt.s32.totalorder %s9, 2
    // Predicated region
    $region17: #{vision_encoder_forward.12} parent=5 // pred_check
      %p152 = pneg %p151
    $region18: #{vision_encoder_forward.12} parent=5 // pred_check_branch
      %154 = sbr.rel (%p152) target = $region20
    $region19: #{vision_encoder_forward.12} parent=5 // pred_region
      // Predicated region
      $region21: #{vision_encoder_forward.12} parent=19 // pred_check
        %p155 = pneg %p41
      $region22: #{vision_encoder_forward.12} parent=19 // pred_check_branch
        %157 = sbr.rel (%p155) target = $region24
      $region23: #{vision_encoder_forward.12} parent=19 // pred_region
        %s158 = smul.u32 2, %s16
        %p159 = scmp.lt.s32.totalorder %s158, 3
        %s160 = scalar_select %p159, %s158, 3
        %s161 = smul.addr %s160, 2
        %s162 = smul.addr %s161, 8
        %s163 = scalar_lea.vmem %s0, %s162
        %s164 = smul.u32 2, %s16
      $region24: #{vision_encoder_forward.12} parent=19 // pred_fallthru
        _
      // Predicated region
      $region25: #{vision_encoder_forward.12} parent=19 // pred_check
        %p165 = pneg %p95
      $region26: #{vision_encoder_forward.12} parent=19 // pred_check_branch
        %167 = sbr.rel (%p165) target = $region28
      $region27: #{vision_encoder_forward.12} parent=19 // pred_region
        %s168 = smul.u32 2, %s16
        %p169 = scmp.lt.s32.totalorder %s168, 3
        %s170 = scalar_select %p169, %s168, 3
        %p171 = scmp.lt.s32.totalorder %s17, 0
        %s172 = scalar_select %p171, %s17, 0
        %s173 = sadd.s32 %s172, %s170
        %s174 = smul.addr %s173, 8
        %s175 = scalar_lea.vmem %s2, %s174
        %s176 = smul.u32 2, %s16
      $region28: #{vision_encoder_forward.12} parent=19 // pred_fallthru
        _
    $region20: #{vision_encoder_forward.12} parent=5 // pred_fallthru
      _
    %p177 = scmp.le.s32.totalorder 1, %s9
    %p178 = scmp.lt.s32.totalorder %s9, 3
    %p179 = pnand %p177, %p178
    %p180 = pneg %p179
    // Predicated region
    $region29: #{vision_encoder_forward.12} parent=5 // pred_check
      _
    $region30: #{vision_encoder_forward.12} parent=5 // pred_check_branch
      %182 = sbr.rel (%p179) target = $region32
    $region31: #{vision_encoder_forward.12} parent=5 // pred_region
      %s183 = ssub.s32 %s9, 1
      %s184 = smul.u32 2, %s18
      %p185 = scmp.lt.s32.totalorder %s184, 3
      %s186 = scalar_select %p185, %s184, 3
      %s187 = smul.addr %s186, 2
      %s188 = smul.addr %s187, 8
      %s189 = scalar_lea.vmem %s0, %s188
      %p190 = pneg %p47
      %p191 = pneg %p44
      %p192 = scmp.lt.s32.totalorder %s19, 0
      %s193 = scalar_select %p192, %s19, 0
      %s194 = smul.addr %s193, 8
      %s195 = scalar_lea.vmem %s1, %s194
      %p196 = pneg %p73
      %p197 = pneg %p70
      %s198 = smul.u32 2, %s18
      %p199 = scmp.lt.s32.totalorder %s198, 3
      %s200 = scalar_select %p199, %s198, 3
      %p201 = scmp.lt.s32.totalorder %s19, 0
      %s202 = scalar_select %p201, %s19, 0
      %s203 = sadd.s32 %s202, %s200
      %s204 = smul.addr %s203, 8
      %s205 = scalar_lea.vmem %s2, %s204
      %p206 = pneg %p101
      %p207 = pneg %p98
      %p208 = pneg %p129
      %p209 = pneg %p126
      %s210 = smul.u32 2, %s18
      %p211 = scmp.lt.s32.totalorder %s210, 3
      %s212 = scalar_select %p211, %s210, 3
      %p213 = scmp.lt.s32.totalorder %s19, 0
      %s214 = scalar_select %p213, %s19, 0
      %s215 = sadd.s32 %s214, %s212
      %s216 = smul.addr %s215, 8
      %s217 = scalar_lea.vmem %s3, %s216
      %s218 = smul.u32 2, %s18
      %p219 = scmp.lt.s32.totalorder %s218, 3
      %s220 = scalar_select %p219, %s218, 3
      %s221 = smul.addr %s220, 2
      %s222 = smul.addr %s221, 8
      %s223 = scalar_lea.vmem %s0, %s222
      %s224 = smul.u32 2, %s18
      %p225 = scmp.lt.s32.totalorder %s19, 0
      %s226 = scalar_select %p225, %s19, 0
      %s227 = smul.addr %s226, 8
      %s228 = scalar_lea.vmem %s1, %s227
      %s229 = smul.u32 2, %s18
      %p230 = scmp.lt.s32.totalorder %s229, 3
      %s231 = scalar_select %p230, %s229, 3
      %p232 = scmp.lt.s32.totalorder %s19, 0
      %s233 = scalar_select %p232, %s19, 0
      %s234 = sadd.s32 %s233, %s231
      %s235 = smul.addr %s234, 8
      %s236 = scalar_lea.vmem %s2, %s235
      %s237 = smul.u32 2, %s18
      %s238 = smul.u32 2, %s18
      %p239 = scmp.lt.s32.totalorder %s238, 3
      %s240 = scalar_select %p239, %s238, 3
      %p241 = scmp.lt.s32.totalorder %s19, 0
      %s242 = scalar_select %p241, %s19, 0
      %s243 = sadd.s32 %s242, %s240
      %s244 = smul.addr %s243, 8
      %s245 = scalar_lea.vmem %s3, %s244
      %s246 = smul.u32 2, %s18
      %v247 = vld [vmem:[%s223] sm:$0xff]
      %v248 = vld [vmem:[%s223 + $0x8] sm:$0xff]
      %v249 = vld [vmem:[%s223 + $0x10] sm:$0xff]
      %v250 = vld [vmem:[%s223 + $0x18] sm:$0xff]
      %v251 = vld [vmem:[%s228] sm:$0xff]
      %v252 = vld [vmem:[%s228 + $0x8] sm:$0xff]
      %v253 = vld [vmem:[%s228 + $0x10] sm:$0xff]
      %v254 = vld [vmem:[%s228 + $0x18] sm:$0xff]
      %v255 = vld [vmem:[%s228 + $0x20] sm:$0xff]
      %v256 = vld [vmem:[%s228 + $0x28] sm:$0xff]
      %v257 = vld [vmem:[%s228 + $0x30] sm:$0xff]
      %v258 = vld [vmem:[%s228 + $0x38] sm:$0xff]
      %v259 = vld [vmem:[%s228 + $0x40] sm:$0xff]
      %v260 = vld [vmem:[%s228 + $0x48] sm:$0xff]
      %v261 = vld [vmem:[%s228 + $0x50] sm:$0xff]
      %v262 = vld [vmem:[%s228 + $0x58] sm:$0xff]
      %v263 = vld [vmem:[%s228 + $0x60] sm:$0xff]
      %v264 = vld [vmem:[%s228 + $0x68] sm:$0xff]
      %v265 = vld [vmem:[%s228 + $0x70] sm:$0xff]
      %v266 = vld [vmem:[%s228 + $0x78] sm:$0xff]
      %v267 = vld [vmem:[%s228 + $0x80] sm:$0xff]
      %v268 = vld [vmem:[%s228 + $0x88] sm:$0xff]
      %v269 = vld [vmem:[%s228 + $0x90] sm:$0xff]
      %v270 = vld [vmem:[%s228 + $0x98] sm:$0xff]
      %v271 = vld [vmem:[%s228 + $0xa0] sm:$0xff]
      %v272 = vld [vmem:[%s228 + $0xa8] sm:$0xff]
      %v273 = vld [vmem:[%s228 + $0xb0] sm:$0xff]
      %v274 = vld [vmem:[%s228 + $0xb8] sm:$0xff]
      %v275 = vld [vmem:[%s228 + $0xc0] sm:$0xff]
      %v276 = vld [vmem:[%s228 + $0xc8] sm:$0xff]
      %v277 = vld [vmem:[%s228 + $0xd0] sm:$0xff]
      %v278 = vld [vmem:[%s228 + $0xd8] sm:$0xff]
      %v279 = vld [vmem:[%s228 + $0xe0] sm:$0xff]
      %v280 = vld [vmem:[%s228 + $0xe8] sm:$0xff]
      %v281 = vld [vmem:[%s228 + $0xf0] sm:$0xff]
      %v282 = vld [vmem:[%s228 + $0xf8] sm:$0xff]
      %v283 = vld [vmem:[%s236] sm:$0xff]
      %v284 = vld [vmem:[%s236 + $0x8] sm:$0xff]
      %285 = vmatprep.subr.mxu0 0.0
      %286 = vmatpush1.msra.mxu0 %v251
      %287 = vmatprep.subr.mxu0 0.0
      %288 = vmatpush1.msra.mxu0 %v252
      %289 = vmatprep.subr.mxu0 0.0
      %290 = vmatpush1.msra.mxu0 %v253
      %291 = vmatprep.subr.mxu0 0.0
      %292 = vmatpush1.msra.mxu0 %v254
      %293 = vmatprep.subr.mxu0 0.0
      %294 = vmatpush1.msra.mxu0 %v255
      %295 = vmatprep.subr.mxu0 0.0
      %296 = vmatpush1.msra.mxu0 %v256
      %297 = vmatprep.subr.mxu0 0.0
      %298 = vmatpush1.msra.mxu0 %v257
      %299 = vmatprep.subr.mxu0 0.0
      %300 = vmatpush1.msra.mxu0 %v258
      %301 = vmatprep.subr.mxu0 0.0
      %302 = vmatpush1.msra.mxu0 %v259
      %303 = vmatprep.subr.mxu0 0.0
      %304 = vmatpush1.msra.mxu0 %v260
      %305 = vmatprep.subr.mxu0 0.0
      %306 = vmatpush1.msra.mxu0 %v261
      %307 = vmatprep.subr.mxu0 0.0
      %308 = vmatpush1.msra.mxu0 %v262
      %309 = vmatprep.subr.mxu0 0.0
      %310 = vmatpush1.msra.mxu0 %v263
      %311 = vmatprep.subr.mxu0 0.0
      %312 = vmatpush1.msra.mxu0 %v264
      %313 = vmatprep.subr.mxu0 0.0
      %314 = vmatpush1.msra.mxu0 %v265
      %315 = vmatprep.subr.mxu0 0.0
      %316 = vmatpush1.msra.mxu0 %v266
      %317 = vmatprep.subr.mxu0 0.0
      %318 = vmatpush1.msra.mxu0 %v267
      %319 = vmatprep.subr.mxu0 0.0
      %320 = vmatpush1.msra.mxu0 %v268
      %321 = vmatprep.subr.mxu0 0.0
      %322 = vmatpush1.msra.mxu0 %v269
      %323 = vmatprep.subr.mxu0 0.0
      %324 = vmatpush1.msra.mxu0 %v270
      %325 = vmatprep.subr.mxu0 0.0
      %326 = vmatpush1.msra.mxu0 %v271
      %327 = vmatprep.subr.mxu0 0.0
      %328 = vmatpush1.msra.mxu0 %v272
      %329 = vmatprep.subr.mxu0 0.0
      %330 = vmatpush1.msra.mxu0 %v273
      %331 = vmatprep.subr.mxu0 0.0
      %332 = vmatpush1.msra.mxu0 %v274
      %333 = vmatprep.subr.mxu0 0.0
      %334 = vmatpush1.msra.mxu0 %v275
      %335 = vmatprep.subr.mxu0 0.0
      %336 = vmatpush1.msra.mxu0 %v276
      %337 = vmatprep.subr.mxu0 0.0
      %338 = vmatpush1.msra.mxu0 %v277
      %339 = vmatprep.subr.mxu0 0.0
      %340 = vmatpush1.msra.mxu0 %v278
      %341 = vmatprep.subr.mxu0 0.0
      %342 = vmatpush1.msra.mxu0 %v279
      %343 = vmatprep.subr.mxu0 0.0
      %344 = vmatpush1.msra.mxu0 %v280
      %345 = vmatprep.subr.mxu0 0.0
      %346 = vmatpush1.msra.mxu0 %v281
      %347 = vmatprep.subr.mxu0 0.0
      %348 = vmatpush1.msra.mxu0 %v282
      %349 = vmatprep.mubr.f32.mxu0 %v248
      %350 = vmatmul.mubr.f32.gmra.mrb[0].mxu0 %v247
      %v351 = vpop.f32.mrb[0].mxu0
      %v352 = vadd.f32 %v283, %v351
      %v353 = vpop.f32.mrb[0].mxu0
      %354 = vmatprep.mubr.f32.mxu0 %v250
      %355 = vmatmul.mubr.f32.gmra.mrb[0].mxu0 %v249
      %v356 = vpop.f32.mrb[0].mxu0
      %v357 = vadd.f32 %v284, %v356
      %v358 = vpop.f32.mrb[0].mxu0
      %359 = vdwg.mxu0
      %360 = vst [vmem:[%s245] sm:$0xff] %v352
      %361 = vst [vmem:[%s245 + $0x8] sm:$0xff] %v357
      %s362 = smul.u32 2, %s18
      %p363 = scmp.lt.s32.totalorder %s362, 3
      %s364 = scalar_select %p363, %s362, 3
      %p365 = scmp.lt.s32.totalorder %s19, 0
      %s366 = scalar_select %p365, %s19, 0
      %s367 = sadd.s32 %s366, %s364
      %s368 = smul.addr %s367, 8
      %s369 = scalar_lea.vmem %s3, %s368
      // Predicated region
      $region33: #{vision_encoder_forward.12} parent=31 // pred_check
        %p370 = pneg %p126
      $region34: #{vision_encoder_forward.12} parent=31 // pred_check_branch
        %372 = sbr.rel (%p370) target = $region36
      $region35: #{vision_encoder_forward.12} parent=31 // pred_region
        %s373 = smul.u32 2, %s18
      $region36: #{vision_encoder_forward.12} parent=31 // pred_fallthru
        _
    $region32: #{vision_encoder_forward.12} parent=5 // pred_fallthru
      _
    %p374 = scmp.le.s32.totalorder 2, %s9
    // Predicated region
    $region37: #{vision_encoder_forward.12} parent=5 // pred_check
      %p375 = pneg %p374
    $region38: #{vision_encoder_forward.12} parent=5 // pred_check_branch
      %377 = sbr.rel (%p375) target = $region40
    $region39: #{vision_encoder_forward.12} parent=5 // pred_region
      %s378 = ssub.s32 %s9, 2
      // Predicated region
      $region41: #{vision_encoder_forward.12} parent=39 // pred_check
        %p379 = pneg %p132
      $region42: #{vision_encoder_forward.12} parent=39 // pred_check_branch
        %381 = sbr.rel (%p379) target = $region44
      $region43: #{vision_encoder_forward.12} parent=39 // pred_region
        %s382 = smul.u32 2, %s20
        %p383 = scmp.lt.s32.totalorder %s382, 3
        %s384 = scalar_select %p383, %s382, 3
        %p385 = scmp.lt.s32.totalorder %s21, 0
        %s386 = scalar_select %p385, %s21, 0
        %s387 = sadd.s32 %s386, %s384
        %s388 = smul.addr %s387, 8
        %s389 = scalar_lea.vmem %s3, %s388
      $region44: #{vision_encoder_forward.12} parent=39 // pred_fallthru
        _
    $region40: #{vision_encoder_forward.12} parent=5 // pred_fallthru
      _
  $region6: #{vision_encoder_forward.12} parent=0 // loop_footer
    %s13 = sadd.s32 1, %s9
  $region7: #{vision_encoder_forward.12} parent=0 // loop_footer_branch
    %8 = sbr.rel target = $region3
  $region8: #{vision_encoder_forward.12} parent=0 // loop_exit
    _

// kernel: vision_encoder_forward.14
$region0: #{vision_encoder_forward.14}
  #allocation0 [shape = 'u32[]', space=smem, size = 0x4, offset = 0x4, fixed_abs, tag = 'smem constant byte address 0x4 - core index']
  #allocation1 [shape = 'u32[144,128]{1,0:T(1,128)}', space=vmem, size = 0x12000, scoped, tag = 'internal scratch']
  %s0 = inlined_call_operand.vmem [shape: f32[32,128], index: 0, kind: input, shape index: {}]
  %s1 = inlined_call_operand.vmem [shape: f32[128,512], index: 1, kind: input, shape index: {}]
  %s2 = inlined_call_operand.vmem [shape: f32[1,512], index: 2, kind: input, shape index: {}]
  %s3 = inlined_call_operand.vmem [shape: f32[32,512], index: 3, kind: output, shape index: {}]
  %s4 = sld [smem:[#allocation0]]
  $region45: #{vision_encoder_forward.14} parent=0
    _
  %s6 = ssub.s32 1, %s4
  %s7 = scalar_select 0, %s6, %s4
  loop: start=0, step=1, limit=4
  $region2: #{vision_encoder_forward.14} parent=0 // loop_pre_header
    _
  $region3: #{vision_encoder_forward.14} parent=0 // loop_header
    %s9 = sphi 0, %s13
    %p10 = scmp.ge.s32.totalorder %s9, 4
    %s16 = sphi 0, %s28
    %s17 = sphi 0, %s24
    %s18 = sphi 0, %s16
    %s19 = sphi 0, %s17
    %s20 = sphi 0, %s18
    %s21 = sphi 0, %s19
    %s31 = sphi 0, %s33
    %s34 = sphi 0, %s31
    %s35 = sphi 0, %s34
    %s51 = sphi 0, %s35
    %s57 = sphi 0, %s59
    %s60 = sphi 0, %s57
    %s61 = sphi 0, %s60
    %s77 = sphi 0, %s61
    %s83 = sphi 0, %s85
    %s86 = sphi 0, %s83
    %s87 = sphi 0, %s86
    %s103 = sphi 0, %s87
    %s111 = sphi 0, %s113
    %s114 = sphi 0, %s111
    %s115 = sphi 0, %s114
    %s131 = sphi 0, %s115
  $region4: #{vision_encoder_forward.14} parent=0 // loop_header_branch
    %12 = sbr.rel (%p10) target = $region8
  $region5: #{vision_encoder_forward.14} parent=0 // loop_body
    %s14 = ssub.s32 %s9, 1
    %s15 = ssub.s32 %s9, 2
    %s22 = sadd.s32 1, %s17
    %p23 = scmp.ge.s32.totalorder %s22, 1
    %s24 = scalar_select %p23, 0, %s22
    %s25 = sadd.s32 1, %s16
    %s26 = scalar_select %p23, %s25, %s16
    %p27 = scmp.ge.s32.totalorder %s26, 2
    %s28 = scalar_select %p27, 0, %s26
    %s29 = ssub.s32 %s16, %s28
    %p30 = scmp.eq.s32.totalorder %s29, 0
    %s32 = sadd.s32 %s31, 1
    %s33 = scalar_select %p30, %s31, %s32
    %p36 = pneg %p30
    %p37 = scmp.eq.s32.totalorder %s9, 1
    %p38 = por %p36, %p37
    %p39 = scmp.ne.s32.totalorder %s31, %s34
    %p40 = scmp.eq.s32.totalorder %s9, 0
    %p41 = por %p39, %p40
    %p42 = scmp.ne.s32.totalorder %s31, %s34
    %p43 = scmp.eq.s32.totalorder %s14, 1
    %p44 = por %p42, %p43
    %p45 = scmp.ne.s32.totalorder %s34, %s35
    %p46 = scmp.eq.s32.totalorder %s14, 0
    %p47 = por %p45, %p46
    %p48 = scmp.ne.s32.totalorder %s34, %s35
    %p49 = scmp.eq.s32.totalorder %s15, 1
    %p50 = por %p48, %p49
    %p52 = scmp.ne.s32.totalorder %s35, %s51
    %p53 = scmp.eq.s32.totalorder %s15, 0
    %p54 = por %p52, %p53
    %s55 = ssub.s32 %s17, %s24
    %p56 = scmp.eq.s32.totalorder %s55, 0
    %s58 = sadd.s32 %s57, 1
    %s59 = scalar_select %p56, %s57, %s58
    %p62 = pneg %p56
    %p63 = scmp.eq.s32.totalorder %s9, 1
    %p64 = por %p62, %p63
    %p65 = scmp.ne.s32.totalorder %s57, %s60
    %p66 = scmp.eq.s32.totalorder %s9, 0
    %p67 = por %p65, %p66
    %p68 = scmp.ne.s32.totalorder %s57, %s60
    %p69 = scmp.eq.s32.totalorder %s14, 1
    %p70 = por %p68, %p69
    %p71 = scmp.ne.s32.totalorder %s60, %s61
    %p72 = scmp.eq.s32.totalorder %s14, 0
    %p73 = por %p71, %p72
    %p74 = scmp.ne.s32.totalorder %s60, %s61
    %p75 = scmp.eq.s32.totalorder %s15, 1
    %p76 = por %p74, %p75
    %p78 = scmp.ne.s32.totalorder %s61, %s77
    %p79 = scmp.eq.s32.totalorder %s15, 0
    %p80 = por %p78, %p79
    %s81 = ssub.s32 %s17, %s24
    %p82 = scmp.eq.s32.totalorder %s81, 0
    %s84 = sadd.s32 %s83, 1
    %s85 = scalar_select %p82, %s83, %s84
    %p88 = pneg %p82
    %p89 = scmp.eq.s32.totalorder %s9, 1
    %p90 = por %p88, %p89
    %p91 = scmp.ne.s32.totalorder %s83, %s86
    %p92 = scmp.eq.s32.totalorder %s9, 0
    %p93 = por %p91, %p92
    %p94 = scmp.ne.s32.totalorder %s83, %s86
    %p95 = scmp.eq.s32.totalorder %s14, 1
    %p96 = por %p94, %p95
    %p97 = scmp.ne.s32.totalorder %s86, %s87
    %p98 = scmp.eq.s32.totalorder %s14, 0
    %p99 = por %p97, %p98
    %p100 = scmp.ne.s32.totalorder %s86, %s87
    %p101 = scmp.eq.s32.totalorder %s15, 1
    %p102 = por %p100, %p101
    %p104 = scmp.ne.s32.totalorder %s87, %s103
    %p105 = scmp.eq.s32.totalorder %s15, 0
    %p106 = por %p104, %p105
    %s107 = ssub.s32 %s16, %s28
    %s108 = ssub.s32 %s17, %s24
    %s109 = sor.u32 %s107, %s108
    %p110 = scmp.eq.s32.totalorder %s109, 0
    %s112 = sadd.s32 %s111, 1
    %s113 = scalar_select %p110, %s111, %s112
    %p116 = pneg %p110
    %p117 = scmp.eq.s32.totalorder %s9, 1
    %p118 = por %p116, %p117
    %p119 = scmp.ne.s32.totalorder %s111, %s114
    %p120 = scmp.eq.s32.totalorder %s9, 0
    %p121 = por %p119, %p120
    %p122 = scmp.ne.s32.totalorder %s111, %s114
    %p123 = scmp.eq.s32.totalorder %s14, 1
    %p124 = por %p122, %p123
    %p125 = scmp.ne.s32.totalorder %s114, %s115
    %p126 = scmp.eq.s32.totalorder %s14, 0
    %p127 = por %p125, %p126
    %p128 = scmp.ne.s32.totalorder %s114, %s115
    %p129 = scmp.eq.s32.totalorder %s15, 1
    %p130 = por %p128, %p129
    %p132 = scmp.ne.s32.totalorder %s115, %s131
    %p133 = scmp.eq.s32.totalorder %s15, 0
    %p134 = por %p132, %p133
    %p135 = scmp.le.s32.totalorder 1, %s9
    %p136 = scmp.lt.s32.totalorder %s9, 3
    %p137 = pnand %p135, %p136
    %p138 = pneg %p137
    // Predicated region
    $region9: #{vision_encoder_forward.14} parent=5 // pred_check
      _
    $region10: #{vision_encoder_forward.14} parent=5 // pred_check_branch
      %140 = sbr.rel (%p137) target = $region12
    $region11: #{vision_encoder_forward.14} parent=5 // pred_region
      %s141 = ssub.s32 %s9, 1
      // Predicated region
      $region13: #{vision_encoder_forward.14} parent=11 // pred_check
        %p142 = pneg %p73
      $region14: #{vision_encoder_forward.14} parent=11 // pred_check_branch
        %144 = sbr.rel (%p142) target = $region16
      $region15: #{vision_encoder_forward.14} parent=11 // pred_region
        %s145 = smul.u32 4, %s19
        %p146 = scmp.lt.s32.totalorder %s145, 3
        %s147 = scalar_select %p146, %s145, 3
        %s148 = smul.addr %s147, 8
        %s149 = scalar_lea.vmem %s1, %s148
        %s150 = smul.u32 4, %s19
      $region16: #{vision_encoder_forward.14} parent=11 // pred_fallthru
        _
      // Predicated region
      $region17: #{vision_encoder_forward.14} parent=11 // pred_check
        %p151 = pneg %p99
      $region18: #{vision_encoder_forward.14} parent=11 // pred_check_branch
        %153 = sbr.rel (%p151) target = $region20
      $region19: #{vision_encoder_forward.14} parent=11 // pred_region
        %s154 = smul.u32 4, %s19
        %p155 = scmp.lt.s32.totalorder %s154, 3
        %s156 = scalar_select %p155, %s154, 3
        %s157 = scalar_lea.vmem %s2, %s156
        %s158 = smul.u32 4, %s19
      $region20: #{vision_encoder_forward.14} parent=11 // pred_fallthru
        _
    $region12: #{vision_encoder_forward.14} parent=5 // pred_fallthru
      _
    %p159 = scmp.lt.s32.totalorder %s9, 2
    // Predicated region
    $region21: #{vision_encoder_forward.14} parent=5 // pred_check
      %p160 = pneg %p159
    $region22: #{vision_encoder_forward.14} parent=5 // pred_check_branch
      %162 = sbr.rel (%p160) target = $region24
    $region23: #{vision_encoder_forward.14} parent=5 // pred_region
      // Predicated region
      $region25: #{vision_encoder_forward.14} parent=23 // pred_check
        %p163 = pneg %p41
      $region26: #{vision_encoder_forward.14} parent=23 // pred_check_branch
        %165 = sbr.rel (%p163) target = $region28
      $region27: #{vision_encoder_forward.14} parent=23 // pred_region
        %s166 = smul.u32 2, %s16
        %p167 = scmp.lt.s32.totalorder %s166, 3
        %s168 = scalar_select %p167, %s166, 3
        %s169 = smul.addr %s168, 8
        %s170 = scalar_lea.vmem %s0, %s169
        %s171 = smul.u32 2, %s16
      $region28: #{vision_encoder_forward.14} parent=23 // pred_fallthru
        _
    $region24: #{vision_encoder_forward.14} parent=5 // pred_fallthru
      _
    %p172 = scmp.le.s32.totalorder 1, %s9
    %p173 = scmp.lt.s32.totalorder %s9, 3
    %p174 = pnand %p172, %p173
    %p175 = pneg %p174
    // Predicated region
    $region29: #{vision_encoder_forward.14} parent=5 // pred_check
      _
    $region30: #{vision_encoder_forward.14} parent=5 // pred_check_branch
      %177 = sbr.rel (%p174) target = $region32
    $region31: #{vision_encoder_forward.14} parent=5 // pred_region
      %s178 = ssub.s32 %s9, 1
      %s179 = smul.u32 2, %s18
      %p180 = scmp.lt.s32.totalorder %s179, 3
      %s181 = scalar_select %p180, %s179, 3
      %s182 = smul.addr %s181, 8
      %s183 = scalar_lea.vmem %s0, %s182
      %p184 = pneg %p47
      %p185 = pneg %p44
      %s186 = smul.u32 4, %s19
      %p187 = scmp.lt.s32.totalorder %s186, 3
      %s188 = scalar_select %p187, %s186, 3
      %s189 = smul.addr %s188, 8
      %s190 = scalar_lea.vmem %s1, %s189
      %p191 = pneg %p73
      %p192 = pneg %p70
      %s193 = smul.u32 4, %s19
      %p194 = scmp.lt.s32.totalorder %s193, 3
      %s195 = scalar_select %p194, %s193, 3
      %s196 = scalar_lea.vmem %s2, %s195
      %p197 = pneg %p99
      %p198 = pneg %p96
      %p199 = pneg %p127
      %p200 = pneg %p124
      %s201 = smul.u32 2, %s18
      %s202 = smul.u32 4, %s19
      %p203 = scmp.lt.s32.totalorder %s201, 3
      %s204 = scalar_select %p203, %s201, 3
      %p205 = scmp.lt.s32.totalorder %s202, 3
      %s206 = scalar_select %p205, %s202, 3
      %s207 = smul.addr %s204, 4
      %s208 = sadd.s32 %s206, %s207
      %s209 = smul.addr %s208, 8
      %s210 = scalar_lea.vmem %s3, %s209
      %s211 = smul.u32 2, %s18
      %p212 = scmp.lt.s32.totalorder %s211, 3
      %s213 = scalar_select %p212, %s211, 3
      %s214 = smul.addr %s213, 8
      %s215 = scalar_lea.vmem %s0, %s214
      %s216 = smul.u32 2, %s18
      %s217 = smul.u32 4, %s19
      %p218 = scmp.lt.s32.totalorder %s217, 3
      %s219 = scalar_select %p218, %s217, 3
      %s220 = smul.addr %s219, 8
      %s221 = scalar_lea.vmem %s1, %s220
      %s222 = smul.u32 4, %s19
      %s223 = smul.u32 4, %s19
      %p224 = scmp.lt.s32.totalorder %s223, 3
      %s225 = scalar_select %p224, %s223, 3
      %s226 = scalar_lea.vmem %s2, %s225
      %s227 = smul.u32 4, %s19
      %s228 = smul.u32 2, %s18
      %s229 = smul.u32 4, %s19
      %p230 = scmp.lt.s32.totalorder %s228, 3
      %s231 = scalar_select %p230, %s228, 3
      %p232 = scmp.lt.s32.totalorder %s229, 3
      %s233 = scalar_select %p232, %s229, 3
      %s234 = smul.addr %s231, 4
      %s235 = sadd.s32 %s233, %s234
      %s236 = smul.addr %s235, 8
      %s237 = scalar_lea.vmem %s3, %s236
      %s238 = smul.u32 2, %s18
      %s239 = smul.u32 4, %s19
      %v240 = vld [vmem:[%s215] sm:$0xff]
      %v241 = vld [vmem:[%s215 + $0x8] sm:$0xff]
      %v242 = vld [vmem:[%s221] sm:$0xff]
      %v243 = vld [vmem:[%s221 + $0x8] sm:$0xff]
      %v244 = vld [vmem:[%s221 + $0x10] sm:$0xff]
      %v245 = vld [vmem:[%s221 + $0x18] sm:$0xff]
      %v246 = vld [vmem:[%s221 + $0x20] sm:$0xff]
      %v247 = vld [vmem:[%s221 + $0x28] sm:$0xff]
      %v248 = vld [vmem:[%s221 + $0x30] sm:$0xff]
      %v249 = vld [vmem:[%s221 + $0x38] sm:$0xff]
      %v250 = vld [vmem:[%s221 + $0x40] sm:$0xff]
      %v251 = vld [vmem:[%s221 + $0x48] sm:$0xff]
      %v252 = vld [vmem:[%s221 + $0x50] sm:$0xff]
      %v253 = vld [vmem:[%s221 + $0x58] sm:$0xff]
      %v254 = vld [vmem:[%s221 + $0x60] sm:$0xff]
      %v255 = vld [vmem:[%s221 + $0x68] sm:$0xff]
      %v256 = vld [vmem:[%s221 + $0x70] sm:$0xff]
      %v257 = vld [vmem:[%s221 + $0x78] sm:$0xff]
      %v258 = vld [vmem:[%s221 + $0x80] sm:$0xff]
      %v259 = vld [vmem:[%s221 + $0x88] sm:$0xff]
      %v260 = vld [vmem:[%s221 + $0x90] sm:$0xff]
      %v261 = vld [vmem:[%s221 + $0x98] sm:$0xff]
      %v262 = vld [vmem:[%s221 + $0xa0] sm:$0xff]
      %v263 = vld [vmem:[%s221 + $0xa8] sm:$0xff]
      %v264 = vld [vmem:[%s221 + $0xb0] sm:$0xff]
      %v265 = vld [vmem:[%s221 + $0xb8] sm:$0xff]
      %v266 = vld [vmem:[%s221 + $0xc0] sm:$0xff]
      %v267 = vld [vmem:[%s221 + $0xc8] sm:$0xff]
      %v268 = vld [vmem:[%s221 + $0xd0] sm:$0xff]
      %v269 = vld [vmem:[%s221 + $0xd8] sm:$0xff]
      %v270 = vld [vmem:[%s221 + $0xe0] sm:$0xff]
      %v271 = vld [vmem:[%s221 + $0xe8] sm:$0xff]
      %v272 = vld [vmem:[%s221 + $0xf0] sm:$0xff]
      %v273 = vld [vmem:[%s221 + $0xf8] sm:$0xff]
      %v274 = vld [vmem:[%s221 + $0x100] sm:$0xff]
      %v275 = vld [vmem:[%s221 + $0x108] sm:$0xff]
      %v276 = vld [vmem:[%s221 + $0x110] sm:$0xff]
      %v277 = vld [vmem:[%s221 + $0x118] sm:$0xff]
      %v278 = vld [vmem:[%s221 + $0x120] sm:$0xff]
      %v279 = vld [vmem:[%s221 + $0x128] sm:$0xff]
      %v280 = vld [vmem:[%s221 + $0x130] sm:$0xff]
      %v281 = vld [vmem:[%s221 + $0x138] sm:$0xff]
      %v282 = vld [vmem:[%s221 + $0x140] sm:$0xff]
      %v283 = vld [vmem:[%s221 + $0x148] sm:$0xff]
      %v284 = vld [vmem:[%s221 + $0x150] sm:$0xff]
      %v285 = vld [vmem:[%s221 + $0x158] sm:$0xff]
      %v286 = vld [vmem:[%s221 + $0x160] sm:$0xff]
      %v287 = vld [vmem:[%s221 + $0x168] sm:$0xff]
      %v288 = vld [vmem:[%s221 + $0x170] sm:$0xff]
      %v289 = vld [vmem:[%s221 + $0x178] sm:$0xff]
      %v290 = vld [vmem:[%s221 + $0x180] sm:$0xff]
      %v291 = vld [vmem:[%s221 + $0x188] sm:$0xff]
      %v292 = vld [vmem:[%s221 + $0x190] sm:$0xff]
      %v293 = vld [vmem:[%s221 + $0x198] sm:$0xff]
      %v294 = vld [vmem:[%s221 + $0x1a0] sm:$0xff]
      %v295 = vld [vmem:[%s221 + $0x1a8] sm:$0xff]
      %v296 = vld [vmem:[%s221 + $0x1b0] sm:$0xff]
      %v297 = vld [vmem:[%s221 + $0x1b8] sm:$0xff]
      %v298 = vld [vmem:[%s221 + $0x1c0] sm:$0xff]
      %v299 = vld [vmem:[%s221 + $0x1c8] sm:$0xff]
      %v300 = vld [vmem:[%s221 + $0x1d0] sm:$0xff]
      %v301 = vld [vmem:[%s221 + $0x1d8] sm:$0xff]
      %v302 = vld [vmem:[%s221 + $0x1e0] sm:$0xff]
      %v303 = vld [vmem:[%s221 + $0x1e8] sm:$0xff]
      %v304 = vld [vmem:[%s221 + $0x1f0] sm:$0xff]
      %v305 = vld [vmem:[%s221 + $0x1f8] sm:$0xff]
      %v306 = vld [vmem:[%s226] sm:$0xf]
      %v308 = vlaneseq
      %v309 = vshrl.u32 %v308, 7
      %v310 = vsub.s32 0, %v309
      %v311 = vrot.slane %v306, %v310
      %v312 = vlaneseq
      %v313 = vshrl.u32 %v312, 7
      %v314 = vsub.s32 1, %v313
      %v315 = vrot.slane %v306, %v314
      %v316 = vlaneseq
      %v317 = vshrl.u32 %v316, 7
      %v318 = vsub.s32 2, %v317
      %v319 = vrot.slane %v306, %v318
      %v320 = vlaneseq
      %v321 = vshrl.u32 %v320, 7
      %v322 = vsub.s32 3, %v321
      %v323 = vrot.slane %v306, %v322
      %328 = vmatprep.subr.mxu0 %v243
      %329 = vmatpush1.msra.mxu0 %v242
      %330 = vmatprep.subr.mxu0 %v247
      %331 = vmatpush1.msra.mxu0 %v246
      %332 = vmatprep.subr.mxu0 %v251
      %333 = vmatpush1.msra.mxu0 %v250
      %334 = vmatprep.subr.mxu0 %v255
      %335 = vmatpush1.msra.mxu0 %v254
      %336 = vmatprep.subr.mxu0 %v259
      %337 = vmatpush1.msra.mxu0 %v258
      %338 = vmatprep.subr.mxu0 %v263
      %339 = vmatpush1.msra.mxu0 %v262
      %340 = vmatprep.subr.mxu0 %v267
      %341 = vmatpush1.msra.mxu0 %v266
      %342 = vmatprep.subr.mxu0 %v271
      %343 = vmatpush1.msra.mxu0 %v270
      %344 = vmatprep.subr.mxu0 %v275
      %345 = vmatpush1.msra.mxu0 %v274
      %346 = vmatprep.subr.mxu0 %v279
      %347 = vmatpush1.msra.mxu0 %v278
      %348 = vmatprep.subr.mxu0 %v283
      %349 = vmatpush1.msra.mxu0 %v282
      %350 = vmatprep.subr.mxu0 %v287
      %351 = vmatpush1.msra.mxu0 %v286
      %352 = vmatprep.subr.mxu0 %v291
      %353 = vmatpush1.msra.mxu0 %v290
      %354 = vmatprep.subr.mxu0 %v295
      %355 = vmatpush1.msra.mxu0 %v294
      %356 = vmatprep.subr.mxu0 %v299
      %357 = vmatpush1.msra.mxu0 %v298
      %358 = vmatprep.subr.mxu0 %v303
      %359 = vmatpush1.msra.mxu0 %v302
      %360 = vmatprep.subr.mxu0 0.0
      %361 = vmatpush1.msra.mxu0 0.0
      %362 = vmatprep.subr.mxu0 0.0
      %363 = vmatpush1.msra.mxu0 0.0
      %364 = vmatprep.subr.mxu0 0.0
      %365 = vmatpush1.msra.mxu0 0.0
      %366 = vmatprep.subr.mxu0 0.0
      %367 = vmatpush1.msra.mxu0 0.0
      %368 = vmatprep.subr.mxu0 0.0
      %369 = vmatpush1.msra.mxu0 0.0
      %370 = vmatprep.subr.mxu0 0.0
      %371 = vmatpush1.msra.mxu0 0.0
      %372 = vmatprep.subr.mxu0 0.0
      %373 = vmatpush1.msra.mxu0 0.0
      %374 = vmatprep.subr.mxu0 0.0
      %375 = vmatpush1.msra.mxu0 0.0
      %376 = vmatprep.subr.mxu0 0.0
      %377 = vmatpush1.msra.mxu0 0.0
      %378 = vmatprep.subr.mxu0 0.0
      %379 = vmatpush1.msra.mxu0 0.0
      %380 = vmatprep.subr.mxu0 0.0
      %381 = vmatpush1.msra.mxu0 0.0
      %382 = vmatprep.subr.mxu0 0.0
      %383 = vmatpush1.msra.mxu0 0.0
      %384 = vmatprep.subr.mxu0 0.0
      %385 = vmatpush1.msra.mxu0 0.0
      %386 = vmatprep.subr.mxu0 0.0
      %387 = vmatpush1.msra.mxu0 0.0
      %388 = vmatprep.subr.mxu0 0.0
      %389 = vmatpush1.msra.mxu0 0.0
      %390 = vmatprep.subr.mxu0 0.0
      %391 = vmatpush1.msra.mxu0 0.0
      %392 = vmatprep.mubr.f32.mxu0 0.0
      %393 = vmatmul.mubr.f32.gmra.mrb[0].mxu0 %v240
      %v394 = vpop.f32.mrb[0].mxu0
      %v395 = vadd.f32 %v311, %v394
      %v396 = vpop.f32.mrb[0].mxu0
      %v397 = vadd.f32 %v315, %v396
      %398 = vmatprep.mubr.f32.mxu0 0.0
      %399 = vmatmul.mubr.f32.gmra.mrb[0].mxu0 %v241
      %v400 = vpop.f32.mrb[0].mxu0
      %v401 = vadd.f32 %v311, %v400
      %v402 = vpop.f32.mrb[0].mxu0
      %v403 = vadd.f32 %v315, %v402
      %404 = vdwg.mxu0
      %405 = vmatprep.subr.mxu0 %v245
      %406 = vmatpush1.msra.mxu0 %v244
      %407 = vmatprep.subr.mxu0 %v249
      %408 = vmatpush1.msra.mxu0 %v248
      %409 = vmatprep.subr.mxu0 %v253
      %410 = vmatpush1.msra.mxu0 %v252
      %411 = vmatprep.subr.mxu0 %v257
      %412 = vmatpush1.msra.mxu0 %v256
      %413 = vmatprep.subr.mxu0 %v261
      %414 = vmatpush1.msra.mxu0 %v260
      %415 = vmatprep.subr.mxu0 %v265
      %416 = vmatpush1.msra.mxu0 %v264
      %417 = vmatprep.subr.mxu0 %v269
      %418 = vmatpush1.msra.mxu0 %v268
      %419 = vmatprep.subr.mxu0 %v273
      %420 = vmatpush1.msra.mxu0 %v272
      %421 = vmatprep.subr.mxu0 %v277
      %422 = vmatpush1.msra.mxu0 %v276
      %423 = vmatprep.subr.mxu0 %v281
      %424 = vmatpush1.msra.mxu0 %v280
      %425 = vmatprep.subr.mxu0 %v285
      %426 = vmatpush1.msra.mxu0 %v284
      %427 = vmatprep.subr.mxu0 %v289
      %428 = vmatpush1.msra.mxu0 %v288
      %429 = vmatprep.subr.mxu0 %v293
      %430 = vmatpush1.msra.mxu0 %v292
      %431 = vmatprep.subr.mxu0 %v297
      %432 = vmatpush1.msra.mxu0 %v296
      %433 = vmatprep.subr.mxu0 %v301
      %434 = vmatpush1.msra.mxu0 %v300
      %435 = vmatprep.subr.mxu0 %v305
      %436 = vmatpush1.msra.mxu0 %v304
      %437 = vmatprep.subr.mxu0 0.0
      %438 = vmatpush1.msra.mxu0 0.0
      %439 = vmatprep.subr.mxu0 0.0
      %440 = vmatpush1.msra.mxu0 0.0
      %441 = vmatprep.subr.mxu0 0.0
      %442 = vmatpush1.msra.mxu0 0.0
      %443 = vmatprep.subr.mxu0 0.0
      %444 = vmatpush1.msra.mxu0 0.0
      %445 = vmatprep.subr.mxu0 0.0
      %446 = vmatpush1.msra.mxu0 0.0
      %447 = vmatprep.subr.mxu0 0.0
      %448 = vmatpush1.msra.mxu0 0.0
      %449 = vmatprep.subr.mxu0 0.0
      %450 = vmatpush1.msra.mxu0 0.0
      %451 = vmatprep.subr.mxu0 0.0
      %452 = vmatpush1.msra.mxu0 0.0
      %453 = vmatprep.subr.mxu0 0.0
      %454 = vmatpush1.msra.mxu0 0.0
      %455 = vmatprep.subr.mxu0 0.0
      %456 = vmatpush1.msra.mxu0 0.0
      %457 = vmatprep.subr.mxu0 0.0
      %458 = vmatpush1.msra.mxu0 0.0
      %459 = vmatprep.subr.mxu0 0.0
      %460 = vmatpush1.msra.mxu0 0.0
      %461 = vmatprep.subr.mxu0 0.0
      %462 = vmatpush1.msra.mxu0 0.0
      %463 = vmatprep.subr.mxu0 0.0
      %464 = vmatpush1.msra.mxu0 0.0
      %465 = vmatprep.subr.mxu0 0.0
      %466 = vmatpush1.msra.mxu0 0.0
      %467 = vmatprep.subr.mxu0 0.0
      %468 = vmatpush1.msra.mxu0 0.0
      %469 = vmatprep.mubr.f32.mxu0 0.0
      %470 = vmatmul.mubr.f32.gmra.mrb[0].mxu0 %v240
      %v471 = vpop.f32.mrb[0].mxu0
      %v472 = vadd.f32 %v319, %v471
      %v473 = vpop.f32.mrb[0].mxu0
      %v474 = vadd.f32 %v323, %v473
      %475 = vmatprep.mubr.f32.mxu0 0.0
      %476 = vmatmul.mubr.f32.gmra.mrb[0].mxu0 %v241
      %v477 = vpop.f32.mrb[0].mxu0
      %v478 = vadd.f32 %v319, %v477
      %v479 = vpop.f32.mrb[0].mxu0
      %v480 = vadd.f32 %v323, %v479
      %481 = vdwg.mxu0
      %v482 = vmul.f32 %v395, 0.5
      %v483 = vmul.f32 %v397, 0.5
      %v484 = vmul.f32 %v472, 0.5
      %v485 = vmul.f32 %v474, 0.5
      %v486 = vmul.f32 %v401, 0.5
      %v487 = vmul.f32 %v403, 0.5
      %v488 = vmul.f32 %v478, 0.5
      %v489 = vmul.f32 %v480, 0.5
      %v490 = vmul.f32 %v395, 0.70710677
      %v491 = vmul.f32 %v397, 0.70710677
      %v492 = vmul.f32 %v472, 0.70710677
      %v493 = vmul.f32 %v474, 0.70710677
      %v494 = vmul.f32 %v401, 0.70710677
      %v495 = vmul.f32 %v403, 0.70710677
      %v496 = vmul.f32 %v478, 0.70710677
      %v497 = vmul.f32 %v480, 0.70710677
      %v498 = verf.f32.pop %v490
      %v499 = verf.f32.pop %v491
      %v500 = verf.f32.pop %v492
      %v501 = verf.f32.pop %v493
      %v502 = verf.f32.pop %v494
      %v503 = verf.f32.pop %v495
      %v504 = verf.f32.pop %v496
      %v505 = verf.f32.pop %v497
      %v506 = vadd.f32 %v498, 1.0
      %v507 = vadd.f32 %v499, 1.0
      %v508 = vadd.f32 %v500, 1.0
      %v509 = vadd.f32 %v501, 1.0
      %v510 = vadd.f32 %v502, 1.0
      %v511 = vadd.f32 %v503, 1.0
      %v512 = vadd.f32 %v504, 1.0
      %v513 = vadd.f32 %v505, 1.0
      %v514 = vmul.f32 %v482, %v506
      %v515 = vmul.f32 %v483, %v507
      %v516 = vmul.f32 %v484, %v508
      %v517 = vmul.f32 %v485, %v509
      %v518 = vmul.f32 %v486, %v510
      %v519 = vmul.f32 %v487, %v511
      %v520 = vmul.f32 %v488, %v512
      %v521 = vmul.f32 %v489, %v513
      %522 = vst [vmem:[%s237] sm:$0xff] %v514
      %523 = vst [vmem:[%s237 + $0x8] sm:$0xff] %v515
      %524 = vst [vmem:[%s237 + $0x10] sm:$0xff] %v516
      %525 = vst [vmem:[%s237 + $0x18] sm:$0xff] %v517
      %526 = vst [vmem:[%s237 + $0x20] sm:$0xff] %v518
      %527 = vst [vmem:[%s237 + $0x28] sm:$0xff] %v519
      %528 = vst [vmem:[%s237 + $0x30] sm:$0xff] %v520
      %529 = vst [vmem:[%s237 + $0x38] sm:$0xff] %v521
      %s530 = smul.u32 2, %s18
      %s531 = smul.u32 4, %s19
      %p532 = scmp.lt.s32.totalorder %s530, 3
      %s533 = scalar_select %p532, %s530, 3
      %p534 = scmp.lt.s32.totalorder %s531, 3
      %s535 = scalar_select %p534, %s531, 3
      %s536 = smul.addr %s533, 4
      %s537 = sadd.s32 %s535, %s536
      %s538 = smul.addr %s537, 8
      %s539 = scalar_lea.vmem %s3, %s538
      // Predicated region
      $region33: #{vision_encoder_forward.14} parent=31 // pred_check
        %p540 = pneg %p124
      $region34: #{vision_encoder_forward.14} parent=31 // pred_check_branch
        %542 = sbr.rel (%p540) target = $region36
      $region35: #{vision_encoder_forward.14} parent=31 // pred_region
        %s543 = smul.u32 2, %s18
        %s544 = smul.u32 4, %s19
      $region36: #{vision_encoder_forward.14} parent=31 // pred_fallthru
        _
    $region32: #{vision_encoder_forward.14} parent=5 // pred_fallthru
      _
    %p545 = scmp.le.s32.totalorder 2, %s9
    // Predicated region
    $region37: #{vision_encoder_forward.14} parent=5 // pred_check
      %p546 = pneg %p545
    $region38: #{vision_encoder_forward.14} parent=5 // pred_check_branch
      %548 = sbr.rel (%p546) target = $region40
    $region39: #{vision_encoder_forward.14} parent=5 // pred_region
      %s549 = ssub.s32 %s9, 2
      // Predicated region
      $region41: #{vision_encoder_forward.14} parent=39 // pred_check
        %p550 = pneg %p130
      $region42: #{vision_encoder_forward.14} parent=39 // pred_check_branch
        %552 = sbr.rel (%p550) target = $region44
      $region43: #{vision_encoder_forward.14} parent=39 // pred_region
        %s553 = smul.u32 2, %s20
        %s554 = smul.u32 4, %s21
        %p555 = scmp.lt.s32.totalorder %s553, 3
        %s556 = scalar_select %p555, %s553, 3
        %p557 = scmp.lt.s32.totalorder %s554, 3
        %s558 = scalar_select %p557, %s554, 3
        %s559 = smul.addr %s556, 4
        %s560 = sadd.s32 %s558, %s559
        %s561 = smul.addr %s560, 8
        %s562 = scalar_lea.vmem %s3, %s561
      $region44: #{vision_encoder_forward.14} parent=39 // pred_fallthru
        _
    $region40: #{vision_encoder_forward.14} parent=5 // pred_fallthru
      _
  $region6: #{vision_encoder_forward.14} parent=0 // loop_footer
    %s13 = sadd.s32 1, %s9
  $region7: #{vision_encoder_forward.14} parent=0 // loop_footer_branch
    %8 = sbr.rel target = $region3
  $region8: #{vision_encoder_forward.14} parent=0 // loop_exit
    _

// kernel: vision_encoder_forward.11
$region0: #{vision_encoder_forward.11}
  #allocation0 [shape = 'u32[]', space=smem, size = 0x4, offset = 0x4, fixed_abs, tag = 'smem constant byte address 0x4 - core index']
  #allocation1 [shape = 'u32[144,128]{1,0:T(1,128)}', space=vmem, size = 0x12000, scoped, tag = 'internal scratch']
  #allocation2 [shape = 'f32[16,1]{1,0:T(8,128)}', space=vmem, size = 0x2000, scoped, tag = 'scratch operand']
  #allocation3 [shape = 'f32[16,1]{1,0:T(8,128)}', space=vmem, size = 0x2000, scoped, tag = 'scratch operand']
  #allocation4 [shape = 'f32[16,128]{1,0:T(8,128)}', space=vmem, size = 0x2000, scoped, tag = 'scratch operand']
  %s0 = inlined_call_operand.vmem [shape: f32[2,2,16,128], index: 0, kind: input, shape index: {}]
  %s1 = inlined_call_operand.vmem [shape: f32[2,2,16,128], index: 1, kind: input, shape index: {}]
  %s2 = inlined_call_operand.vmem [shape: f32[2,2,16,128], index: 2, kind: input, shape index: {}]
  %s3 = inlined_call_operand.vmem [shape: f32[2,1,16], index: 3, kind: input, shape index: {}]
  %s4 = inlined_call_operand.vmem [shape: f32[2,16,256], index: 4, kind: output, shape index: {}]
  %s5 = sld [smem:[#allocation0]]
  $region91: #{vision_encoder_forward.11} parent=0
    _
  %s7 = ssub.s32 1, %s5
  %s8 = scalar_select 0, %s7, %s5
  $region1: #{vision_encoder_forward.11} parent=0
    #allocation5 [shape = 'u8[16384]{0}', space=vmem, size = 0x4000, scoped, tag = 'output window, operand 0']
    loop: start=0, step=1, limit=6
    $region2: #{vision_encoder_forward.11} parent=1 // loop_pre_header
      _
    $region3: #{vision_encoder_forward.11} parent=1 // loop_header
      %s10 = sphi 0, %s14
      %p11 = scmp.ge.s32.totalorder %s10, 6
      %s17 = sphi 0, %s36
      %s18 = sphi 0, %s32
      %s19 = sphi 0, %s28
      %s20 = sphi 0, %s17
      %s21 = sphi 0, %s18
      %s22 = sphi 0, %s19
      %s23 = sphi 0, %s20
      %s24 = sphi 0, %s21
      %s25 = sphi 0, %s22
      %s41 = sphi 0, %s43
      %s44 = sphi 0, %s41
      %s45 = sphi 0, %s44
      %s61 = sphi 0, %s45
      %s71 = sphi 0, %s73
      %s74 = sphi 0, %s71
      %s75 = sphi 0, %s74
      %s91 = sphi 0, %s75
      %s101 = sphi 0, %s103
      %s104 = sphi 0, %s101
      %s105 = sphi 0, %s104
      %s121 = sphi 0, %s105
      %s129 = sphi 0, %s131
      %s132 = sphi 0, %s129
      %s133 = sphi 0, %s132
      %s149 = sphi 0, %s133
      %s157 = sphi 0, %s159
      %s160 = sphi 0, %s157
      %s161 = sphi 0, %s160
      %s177 = sphi 0, %s161
    $region4: #{vision_encoder_forward.11} parent=1 // loop_header_branch
      %13 = sbr.rel (%p11) target = $region8
    $region5: #{vision_encoder_forward.11} parent=1 // loop_body
      %s15 = ssub.s32 %s10, 1
      %s16 = ssub.s32 %s10, 2
      %s26 = sadd.s32 1, %s19
      %p27 = scmp.ge.s32.totalorder %s26, 1
      %s28 = scalar_select %p27, 0, %s26
      %s29 = sadd.s32 1, %s18
      %s30 = scalar_select %p27, %s29, %s18
      %p31 = scmp.ge.s32.totalorder %s30, 2
      %s32 = scalar_select %p31, 0, %s30
      %s33 = sadd.s32 1, %s17
      %s34 = scalar_select %p31, %s33, %s17
      %p35 = scmp.ge.s32.totalorder %s34, 2
      %s36 = scalar_select %p35, 0, %s34
      %s37 = ssub.s32 %s17, %s36
      %s38 = ssub.s32 %s18, %s32
      %s39 = sor.u32 %s37, %s38
      %p40 = scmp.eq.s32.totalorder %s39, 0
      %s42 = sadd.s32 %s41, 1
      %s43 = scalar_select %p40, %s41, %s42
      %p46 = pneg %p40
      %p47 = scmp.eq.s32.totalorder %s10, 3
      %p48 = por %p46, %p47
      %p49 = scmp.ne.s32.totalorder %s41, %s44
      %p50 = scmp.eq.s32.totalorder %s10, 0
      %p51 = por %p49, %p50
      %p52 = scmp.ne.s32.totalorder %s41, %s44
      %p53 = scmp.eq.s32.totalorder %s15, 3
      %p54 = por %p52, %p53
      %p55 = scmp.ne.s32.totalorder %s44, %s45
      %p56 = scmp.eq.s32.totalorder %s15, 0
      %p57 = por %p55, %p56
      %p58 = scmp.ne.s32.totalorder %s44, %s45
      %p59 = scmp.eq.s32.totalorder %s16, 3
      %p60 = por %p58, %p59
      %p62 = scmp.ne.s32.totalorder %s45, %s61
      %p63 = scmp.eq.s32.totalorder %s16, 0
      %p64 = por %p62, %p63
      %s65 = ssub.s32 %s17, %s36
      %s66 = ssub.s32 %s18, %s32
      %s67 = sor.u32 %s65, %s66
      %s68 = ssub.s32 %s19, %s28
      %s69 = sor.u32 %s67, %s68
      %p70 = scmp.eq.s32.totalorder %s69, 0
      %s72 = sadd.s32 %s71, 1
      %s73 = scalar_select %p70, %s71, %s72
      %p76 = pneg %p70
      %p77 = scmp.eq.s32.totalorder %s10, 3
      %p78 = por %p76, %p77
      %p79 = scmp.ne.s32.totalorder %s71, %s74
      %p80 = scmp.eq.s32.totalorder %s10, 0
      %p81 = por %p79, %p80
      %p82 = scmp.ne.s32.totalorder %s71, %s74
      %p83 = scmp.eq.s32.totalorder %s15, 3
      %p84 = por %p82, %p83
      %p85 = scmp.ne.s32.totalorder %s74, %s75
      %p86 = scmp.eq.s32.totalorder %s15, 0
      %p87 = por %p85, %p86
      %p88 = scmp.ne.s32.totalorder %s74, %s75
      %p89 = scmp.eq.s32.totalorder %s16, 3
      %p90 = por %p88, %p89
      %p92 = scmp.ne.s32.totalorder %s75, %s91
      %p93 = scmp.eq.s32.totalorder %s16, 0
      %p94 = por %p92, %p93
      %s95 = ssub.s32 %s17, %s36
      %s96 = ssub.s32 %s18, %s32
      %s97 = sor.u32 %s95, %s96
      %s98 = ssub.s32 %s19, %s28
      %s99 = sor.u32 %s97, %s98
      %p100 = scmp.eq.s32.totalorder %s99, 0
      %s102 = sadd.s32 %s101, 1
      %s103 = scalar_select %p100, %s101, %s102
      %p106 = pneg %p100
      %p107 = scmp.eq.s32.totalorder %s10, 3
      %p108 = por %p106, %p107
      %p109 = scmp.ne.s32.totalorder %s101, %s104
      %p110 = scmp.eq.s32.totalorder %s10, 0
      %p111 = por %p109, %p110
      %p112 = scmp.ne.s32.totalorder %s101, %s104
      %p113 = scmp.eq.s32.totalorder %s15, 3
      %p114 = por %p112, %p113
      %p115 = scmp.ne.s32.totalorder %s104, %s105
      %p116 = scmp.eq.s32.totalorder %s15, 0
      %p117 = por %p115, %p116
      %p118 = scmp.ne.s32.totalorder %s104, %s105
      %p119 = scmp.eq.s32.totalorder %s16, 3
      %p120 = por %p118, %p119
      %p122 = scmp.ne.s32.totalorder %s105, %s121
      %p123 = scmp.eq.s32.totalorder %s16, 0
      %p124 = por %p122, %p123
      %s125 = ssub.s32 %s17, %s36
      %s126 = ssub.s32 %s19, %s28
      %s127 = sor.u32 %s125, %s126
      %p128 = scmp.eq.s32.totalorder %s127, 0
      %s130 = sadd.s32 %s129, 1
      %s131 = scalar_select %p128, %s129, %s130
      %p134 = pneg %p128
      %p135 = scmp.eq.s32.totalorder %s10, 3
      %p136 = por %p134, %p135
      %p137 = scmp.ne.s32.totalorder %s129, %s132
      %p138 = scmp.eq.s32.totalorder %s10, 0
      %p139 = por %p137, %p138
      %p140 = scmp.ne.s32.totalorder %s129, %s132
      %p141 = scmp.eq.s32.totalorder %s15, 3
      %p142 = por %p140, %p141
      %p143 = scmp.ne.s32.totalorder %s132, %s133
      %p144 = scmp.eq.s32.totalorder %s15, 0
      %p145 = por %p143, %p144
      %p146 = scmp.ne.s32.totalorder %s132, %s133
      %p147 = scmp.eq.s32.totalorder %s16, 3
      %p148 = por %p146, %p147
      %p150 = scmp.ne.s32.totalorder %s133, %s149
      %p151 = scmp.eq.s32.totalorder %s16, 0
      %p152 = por %p150, %p151
      %s153 = ssub.s32 %s17, %s36
      %s154 = ssub.s32 %s18, %s32
      %s155 = sor.u32 %s153, %s154
      %p156 = scmp.eq.s32.totalorder %s155, 0
      %s158 = sadd.s32 %s157, 1
      %s159 = scalar_select %p156, %s157, %s158
      %p162 = pneg %p156
      %p163 = scmp.eq.s32.totalorder %s10, 3
      %p164 = por %p162, %p163
      %p165 = scmp.ne.s32.totalorder %s157, %s160
      %p166 = scmp.eq.s32.totalorder %s10, 0
      %p167 = por %p165, %p166
      %p168 = scmp.ne.s32.totalorder %s157, %s160
      %p169 = scmp.eq.s32.totalorder %s15, 3
      %p170 = por %p168, %p169
      %p171 = scmp.ne.s32.totalorder %s160, %s161
      %p172 = scmp.eq.s32.totalorder %s15, 0
      %p173 = por %p171, %p172
      %p174 = scmp.ne.s32.totalorder %s160, %s161
      %p175 = scmp.eq.s32.totalorder %s16, 3
      %p176 = por %p174, %p175
      %p178 = scmp.ne.s32.totalorder %s161, %s177
      %p179 = scmp.eq.s32.totalorder %s16, 0
      %p180 = por %p178, %p179
      %p181 = scmp.le.s32.totalorder 1, %s10
      %p182 = scmp.lt.s32.totalorder %s10, 5
      %p183 = pnand %p181, %p182
      %p184 = pneg %p183
      // Predicated region
      $region9: #{vision_encoder_forward.11} parent=5 // pred_check
        _
      $region10: #{vision_encoder_forward.11} parent=5 // pred_check_branch
        %186 = sbr.rel (%p183) target = $region12
      $region11: #{vision_encoder_forward.11} parent=5 // pred_region
        %s187 = ssub.s32 %s10, 1
      $region12: #{vision_encoder_forward.11} parent=5 // pred_fallthru
        _
      %p188 = scmp.lt.s32.totalorder %s10, 4
      // Predicated region
      $region13: #{vision_encoder_forward.11} parent=5 // pred_check
        %p189 = pneg %p188
      $region14: #{vision_encoder_forward.11} parent=5 // pred_check_branch
        %191 = sbr.rel (%p189) target = $region16
      $region15: #{vision_encoder_forward.11} parent=5 // pred_region
        // Predicated region
        $region17: #{vision_encoder_forward.11} parent=15 // pred_check
          %p192 = pneg %p51
        $region18: #{vision_encoder_forward.11} parent=15 // pred_check_branch
          %194 = sbr.rel (%p192) target = $region20
        $region19: #{vision_encoder_forward.11} parent=15 // pred_region
          %p195 = scmp.lt.s32.totalorder %s17, 1
          %s196 = scalar_select %p195, %s17, 1
          %p197 = scmp.lt.s32.totalorder %s18, 1
          %s198 = scalar_select %p197, %s18, 1
          %s199 = smul.addr %s198, 2
          %s200 = smul.addr %s196, 4
          %s201 = sadd.s32 %s199, %s200
          %s202 = smul.addr %s201, 8
          %s203 = scalar_lea.vmem %s0, %s202
        $region20: #{vision_encoder_forward.11} parent=15 // pred_fallthru
          _
        // Predicated region
        $region21: #{vision_encoder_forward.11} parent=15 // pred_check
          %p204 = pneg %p81
        $region22: #{vision_encoder_forward.11} parent=15 // pred_check_branch
          %206 = sbr.rel (%p204) target = $region24
        $region23: #{vision_encoder_forward.11} parent=15 // pred_region
          %s207 = smul.u32 2, %s19
          %p208 = scmp.lt.s32.totalorder %s17, 1
          %s209 = scalar_select %p208, %s17, 1
          %p210 = scmp.lt.s32.totalorder %s18, 1
          %s211 = scalar_select %p210, %s18, 1
          %p212 = scmp.lt.s32.totalorder %s207, 1
          %s213 = scalar_select %p212, %s207, 1
          %s214 = smul.addr %s211, 2
          %s215 = sadd.s32 %s213, %s214
          %s216 = smul.addr %s209, 4
          %s217 = sadd.s32 %s215, %s216
          %s218 = smul.addr %s217, 8
          %s219 = scalar_lea.vmem %s1, %s218
          %s220 = smul.u32 2, %s19
        $region24: #{vision_encoder_forward.11} parent=15 // pred_fallthru
          _
        // Predicated region
        $region25: #{vision_encoder_forward.11} parent=15 // pred_check
          %p221 = pneg %p111
        $region26: #{vision_encoder_forward.11} parent=15 // pred_check_branch
          %223 = sbr.rel (%p221) target = $region28
        $region27: #{vision_encoder_forward.11} parent=15 // pred_region
          %s224 = smul.u32 2, %s19
          %p225 = scmp.lt.s32.totalorder %s17, 1
          %s226 = scalar_select %p225, %s17, 1
          %p227 = scmp.lt.s32.totalorder %s18, 1
          %s228 = scalar_select %p227, %s18, 1
          %p229 = scmp.lt.s32.totalorder %s224, 1
          %s230 = scalar_select %p229, %s224, 1
          %s231 = smul.addr %s228, 2
          %s232 = sadd.s32 %s230, %s231
          %s233 = smul.addr %s226, 4
          %s234 = sadd.s32 %s232, %s233
          %s235 = smul.addr %s234, 8
          %s236 = scalar_lea.vmem %s2, %s235
          %s237 = smul.u32 2, %s19
        $region28: #{vision_encoder_forward.11} parent=15 // pred_fallthru
          _
        // Predicated region
        $region29: #{vision_encoder_forward.11} parent=15 // pred_check
          %p238 = pneg %p139
        $region30: #{vision_encoder_forward.11} parent=15 // pred_check_branch
          %240 = sbr.rel (%p238) target = $region32
        $region31: #{vision_encoder_forward.11} parent=15 // pred_region
          %p241 = scmp.lt.s32.totalorder %s17, 1
          %s242 = scalar_select %p241, %s17, 1
          %p243 = scmp.lt.s32.totalorder %s19, 0
          %s244 = scalar_select %p243, %s19, 0
          %s245 = sadd.s32 %s244, %s242
          %s246 = scalar_lea.vmem %s3, %s245
        $region32: #{vision_encoder_forward.11} parent=15 // pred_fallthru
          _
      $region16: #{vision_encoder_forward.11} parent=5 // pred_fallthru
        _
      %p247 = scmp.le.s32.totalorder 1, %s10
      %p248 = scmp.lt.s32.totalorder %s10, 5
      %p249 = pnand %p247, %p248
      %p250 = pneg %p249
      // Predicated region
      $region33: #{vision_encoder_forward.11} parent=5 // pred_check
        _
      $region34: #{vision_encoder_forward.11} parent=5 // pred_check_branch
        %252 = sbr.rel (%p249) target = $region36
      $region35: #{vision_encoder_forward.11} parent=5 // pred_region
        %s253 = ssub.s32 %s10, 1
        %p254 = scmp.lt.s32.totalorder %s20, 1
        %s255 = scalar_select %p254, %s20, 1
        %p256 = scmp.lt.s32.totalorder %s21, 1
        %s257 = scalar_select %p256, %s21, 1
        %s258 = smul.addr %s257, 2
        %s259 = smul.addr %s255, 4
        %s260 = sadd.s32 %s258, %s259
        %s261 = smul.addr %s260, 8
        %s262 = scalar_lea.vmem %s0, %s261
        %p263 = pneg %p57
        %p264 = pneg %p54
        %s265 = smul.u32 2, %s22
        %p266 = scmp.lt.s32.totalorder %s20, 1
        %s267 = scalar_select %p266, %s20, 1
        %p268 = scmp.lt.s32.totalorder %s21, 1
        %s269 = scalar_select %p268, %s21, 1
        %p270 = scmp.lt.s32.totalorder %s265, 1
        %s271 = scalar_select %p270, %s265, 1
        %s272 = smul.addr %s269, 2
        %s273 = sadd.s32 %s271, %s272
        %s274 = smul.addr %s267, 4
        %s275 = sadd.s32 %s273, %s274
        %s276 = smul.addr %s275, 8
        %s277 = scalar_lea.vmem %s1, %s276
        %p278 = pneg %p87
        %p279 = pneg %p84
        %s280 = smul.u32 2, %s22
        %p281 = scmp.lt.s32.totalorder %s20, 1
        %s282 = scalar_select %p281, %s20, 1
        %p283 = scmp.lt.s32.totalorder %s21, 1
        %s284 = scalar_select %p283, %s21, 1
        %p285 = scmp.lt.s32.totalorder %s280, 1
        %s286 = scalar_select %p285, %s280, 1
        %s287 = smul.addr %s284, 2
        %s288 = sadd.s32 %s286, %s287
        %s289 = smul.addr %s282, 4
        %s290 = sadd.s32 %s288, %s289
        %s291 = smul.addr %s290, 8
        %s292 = scalar_lea.vmem %s2, %s291
        %p293 = pneg %p117
        %p294 = pneg %p114
        %p295 = scmp.lt.s32.totalorder %s20, 1
        %s296 = scalar_select %p295, %s20, 1
        %p297 = scmp.lt.s32.totalorder %s22, 0
        %s298 = scalar_select %p297, %s22, 0
        %s299 = sadd.s32 %s298, %s296
        %s300 = scalar_lea.vmem %s3, %s299
        %p301 = pneg %p145
        %p302 = pneg %p142
        %p303 = pneg %p173
        %p304 = pneg %p170
        %s305 = sand.u32 %s160, 1
        %s306 = sand.u32 %s160, 1
        %s307 = smul.addr %s306, 16
        %s308 = scalar_lea.vmem [#allocation5], %s307
        %p309 = scmp.lt.s32.totalorder %s20, 1
        %s310 = scalar_select %p309, %s20, 1
        %p311 = scmp.lt.s32.totalorder %s21, 1
        %s312 = scalar_select %p311, %s21, 1
        %s313 = smul.addr %s312, 2
        %s314 = smul.addr %s310, 4
        %s315 = sadd.s32 %s313, %s314
        %s316 = smul.addr %s315, 8
        %s317 = scalar_lea.vmem %s0, %s316
        %s318 = smul.u32 2, %s22
        %p319 = scmp.lt.s32.totalorder %s20, 1
        %s320 = scalar_select %p319, %s20, 1
        %p321 = scmp.lt.s32.totalorder %s21, 1
        %s322 = scalar_select %p321, %s21, 1
        %p323 = scmp.lt.s32.totalorder %s318, 1
        %s324 = scalar_select %p323, %s318, 1
        %s325 = smul.addr %s322, 2
        %s326 = sadd.s32 %s324, %s325
        %s327 = smul.addr %s320, 4
        %s328 = sadd.s32 %s326, %s327
        %s329 = smul.addr %s328, 8
        %s330 = scalar_lea.vmem %s1, %s329
        %s331 = smul.u32 2, %s22
        %s332 = smul.u32 2, %s22
        %p333 = scmp.lt.s32.totalorder %s20, 1
        %s334 = scalar_select %p333, %s20, 1
        %p335 = scmp.lt.s32.totalorder %s21, 1
        %s336 = scalar_select %p335, %s21, 1
        %p337 = scmp.lt.s32.totalorder %s332, 1
        %s338 = scalar_select %p337, %s332, 1
        %s339 = smul.addr %s336, 2
        %s340 = sadd.s32 %s338, %s339
        %s341 = smul.addr %s334, 4
        %s342 = sadd.s32 %s340, %s341
        %s343 = smul.addr %s342, 8
        %s344 = scalar_lea.vmem %s2, %s343
        %s345 = smul.u32 2, %s22
        %p346 = scmp.lt.s32.totalorder %s20, 1
        %s347 = scalar_select %p346, %s20, 1
        %p348 = scmp.lt.s32.totalorder %s22, 0
        %s349 = scalar_select %p348, %s22, 0
        %s350 = sadd.s32 %s349, %s347
        %s351 = scalar_lea.vmem %s3, %s350
        %p352 = scmp.eq.s32.totalorder %s22, 0
        // Predicated region
        $region37: #{vision_encoder_forward.11} parent=35 // pred_check
          %p353 = pneg %p352
        $region38: #{vision_encoder_forward.11} parent=35 // pred_check_branch
          %355 = sbr.rel (%p353) target = $region40
        $region39: #{vision_encoder_forward.11} parent=35 // pred_region
          %vm356 = vcmask 7168
          %357 = vst.msk [vmem:[#allocation2] sm:$0xff] %vm356, -1e+30
          %358 = vst.msk [vmem:[#allocation2 + $0x8] sm:$0xff] %vm356, -1e+30
          %359 = vst.msk [vmem:[#allocation3] sm:$0xff] %vm356, 0.0
          %360 = vst.msk [vmem:[#allocation3 + $0x8] sm:$0xff] %vm356, 0.0
          %361 = vst [vmem:[#allocation4] sm:$0xff] 0.0
          %362 = vst [vmem:[#allocation4 + $0x8] sm:$0xff] 0.0
        $region40: #{vision_encoder_forward.11} parent=35 // pred_fallthru
          _
        %v363 = vld [vmem:[%s317] sm:$0xff]
        %v364 = vld [vmem:[%s317 + $0x8] sm:$0xff]
        %v365 = vld [vmem:[%s330] sm:$0xff]
        %v366 = vld [vmem:[%s330 + $0x8] sm:$0xff]
        %v367 = vld [vmem:[%s344] sm:$0xff]
        %v368 = vld [vmem:[%s344 + $0x8] sm:$0xff]
        %v369 = vld [vmem:[%s351] sm:$0x1]
        %v371 = vlaneseq
        %v372 = vshrl.u32 %v371, 7
        %v373 = vsub.s32 0, %v372
        %v374 = vrot.slane %v369, %v373
        %376 = vmatprep.subr.mxu0 0.0
        %377 = vmatpush1.xpose.msra.mxu0 %v365
        %378 = vmatprep.subr.mxu0 0.0
        %379 = vmatpush1.xpose.msra.mxu0 %v366
        %380 = vmatprep.subr.mxu0 0.0
        %381 = vmatpush1.xpose.msra.mxu0 0.0
        %382 = vmatprep.subr.mxu0 0.0
        %383 = vmatpush1.xpose.msra.mxu0 0.0
        %384 = vmatprep.subr.mxu0 0.0
        %385 = vmatpush1.xpose.msra.mxu0 0.0
        %386 = vmatprep.subr.mxu0 0.0
        %387 = vmatpush1.xpose.msra.mxu0 0.0
        %388 = vmatprep.subr.mxu0 0.0
        %389 = vmatpush1.xpose.msra.mxu0 0.0
        %390 = vmatprep.subr.mxu0 0.0
        %391 = vmatpush1.xpose.msra.mxu0 0.0
        %392 = vmatprep.subr.mxu0 0.0
        %393 = vmatpush1.xpose.msra.mxu0 0.0
        %394 = vmatprep.subr.mxu0 0.0
        %395 = vmatpush1.xpose.msra.mxu0 0.0
        %396 = vmatprep.subr.mxu0 0.0
        %397 = vmatpush1.xpose.msra.mxu0 0.0
        %398 = vmatprep.subr.mxu0 0.0
        %399 = vmatpush1.xpose.msra.mxu0 0.0
        %400 = vmatprep.subr.mxu0 0.0
        %401 = vmatpush1.xpose.msra.mxu0 0.0
        %402 = vmatprep.subr.mxu0 0.0
        %403 = vmatpush1.xpose.msra.mxu0 0.0
        %404 = vmatprep.subr.mxu0 0.0
        %405 = vmatpush1.xpose.msra.mxu0 0.0
        %406 = vmatprep.subr.mxu0 0.0
        %407 = vmatpush1.xpose.msra.mxu0 0.0
        %408 = vmatprep.subr.mxu0 0.0
        %409 = vmatpush1.xpose.msra.mxu0 0.0
        %410 = vmatprep.subr.mxu0 0.0
        %411 = vmatpush1.xpose.msra.mxu0 0.0
        %412 = vmatprep.subr.mxu0 0.0
        %413 = vmatpush1.xpose.msra.mxu0 0.0
        %414 = vmatprep.subr.mxu0 0.0
        %415 = vmatpush1.xpose.msra.mxu0 0.0
        %416 = vmatprep.subr.mxu0 0.0
        %417 = vmatpush1.xpose.msra.mxu0 0.0
        %418 = vmatprep.subr.mxu0 0.0
        %419 = vmatpush1.xpose.msra.mxu0 0.0
        %420 = vmatprep.subr.mxu0 0.0
        %421 = vmatpush1.xpose.msra.mxu0 0.0
        %422 = vmatprep.subr.mxu0 0.0
        %423 = vmatpush1.xpose.msra.mxu0 0.0
        %424 = vmatprep.subr.mxu0 0.0
        %425 = vmatpush1.xpose.msra.mxu0 0.0
        %426 = vmatprep.subr.mxu0 0.0
        %427 = vmatpush1.xpose.msra.mxu0 0.0
        %428 = vmatprep.subr.mxu0 0.0
        %429 = vmatpush1.xpose.msra.mxu0 0.0
        %430 = vmatprep.subr.mxu0 0.0
        %431 = vmatpush1.xpose.msra.mxu0 0.0
        %432 = vmatprep.subr.mxu0 0.0
        %433 = vmatpush1.xpose.msra.mxu0 0.0
        %434 = vmatprep.subr.mxu0 0.0
        %435 = vmatpush1.xpose.msra.mxu0 0.0
        %436 = vmatprep.subr.mxu0 0.0
        %437 = vmatpush1.xpose.msra.mxu0 0.0
        %438 = vmatprep.subr.mxu0 0.0
        %439 = vmatpush1.xpose.msra.mxu0 0.0
        %440 = vmatprep.mubr.f32.mxu0 0.0
        %441 = vmatmul.mubr.f32.gmra.mrb[0].mxu0 %v363
        %v442 = vpop.f32.mrb[0].mxu0
        %v443 = vadd.f32 %v374, %v442
        %v444 = vpop.f32.mrb[0].mxu0
        %445 = vmatprep.mubr.f32.mxu0 0.0
        %446 = vmatmul.mubr.f32.gmra.mrb[0].mxu0 %v364
        %v447 = vpop.f32.mrb[0].mxu0
        %v448 = vadd.f32 %v374, %v447
        %v449 = vpop.f32.mrb[0].mxu0
        %450 = vdwg.mxu0
        %v451 = vld [vmem:[#allocation2] sm:$0xff]
        %v452 = vld [vmem:[#allocation2 + $0x8] sm:$0xff]
        %vm453 = vcmask 130048
        %v454 = vsel %vm453, %v443, -inf
        %455 = vmax.xlane.f32.xlu0 %v454
        %v456 = vpop.xlane.xlu0 %455
        %v457 = vsel %vm453, %v448, -inf
        %458 = vmax.xlane.f32.xlu0 %v457
        %v459 = vpop.xlane.xlu0 %458
        %v460 = vmax.f32 %v451, %v456
        %v461 = vmax.f32 %v452, %v459
        %v462 = vsub.f32 %v451, %v460
        %v463 = vsub.f32 %v452, %v461
        %v464 = vmul.f32 %v462, 1.442695
        %v465 = vpow.pop %v464
        %v466 = vmul.f32 %v463, 1.442695
        %v467 = vpow.pop %v466
        %469 = vset.pattern.permute.xlu0 0
        %470 = vperm.xlu0 %469, %v460
        %v471 = vpop.permute.xlu0 %470
        %474 = vset.pattern.permute.xlu0 0
        %475 = vperm.xlu0 %474, %v461
        %v476 = vpop.permute.xlu0 %475
        %v478 = vsub.f32 %v443, %v471
        %v479 = vsub.f32 %v448, %v476
        %v480 = vmul.f32 %v478, 1.442695
        %v481 = vpow.pop %v480
        %v482 = vmul.f32 %v479, 1.442695
        %v483 = vpow.pop %v482
        %v484 = vld [vmem:[#allocation3] sm:$0xff]
        %v485 = vld [vmem:[#allocation3 + $0x8] sm:$0xff]
        %v486 = vmul.f32 %v465, %v484
        %v487 = vmul.f32 %v467, %v485
        %v488 = vsel %vm453, %v481, 0.0
        %489 = vadd.xlane.f32.xlu0 %v488
        %v490 = vpop.xlane.xlu0 %489
        %v491 = vsel %vm453, %v483, 0.0
        %492 = vadd.xlane.f32.xlu0 %v491
        %v493 = vpop.xlane.xlu0 %492
        %v494 = vadd.f32 %v486, %v490
        %v495 = vadd.f32 %v487, %v493
        %vm496 = vcmask 7168
        %497 = vst.msk [vmem:[#allocation3] sm:$0xff] %vm496, %v494
        %498 = vst.msk [vmem:[#allocation3 + $0x8] sm:$0xff] %vm496, %v495
        %v499 = vld [vmem:[#allocation4] sm:$0xff]
        %v500 = vld [vmem:[#allocation4 + $0x8] sm:$0xff]
        %502 = vset.pattern.permute.xlu0 0
        %503 = vperm.xlu0 %502, %v465
        %v504 = vpop.permute.xlu0 %503
        %507 = vset.pattern.permute.xlu0 0
        %508 = vperm.xlu0 %507, %v467
        %v509 = vpop.permute.xlu0 %508
        %v511 = vmul.f32 %v504, %v499
        %v512 = vmul.f32 %v509, %v500
        %v514 = vsel %vm453, %v481, 0
        %v517 = vsel %vm453, %v483, 0
        %519 = vmatprep.subr.mxu0 0.0
        %520 = vmatpush1.msra.mxu0 %v367
        %521 = vmatprep.subr.mxu0 0.0
        %522 = vmatpush1.msra.mxu0 %v368
        %523 = vmatprep.subr.mxu0 0.0
        %524 = vmatpush1.msra.mxu0 0.0
        %525 = vmatprep.subr.mxu0 0.0
        %526 = vmatpush1.msra.mxu0 0.0
        %527 = vmatprep.subr.mxu0 0.0
        %528 = vmatpush1.msra.mxu0 0.0
        %529 = vmatprep.subr.mxu0 0.0
        %530 = vmatpush1.msra.mxu0 0.0
        %531 = vmatprep.subr.mxu0 0.0
        %532 = vmatpush1.msra.mxu0 0.0
        %533 = vmatprep.subr.mxu0 0.0
        %534 = vmatpush1.msra.mxu0 0.0
        %535 = vmatprep.subr.mxu0 0.0
        %536 = vmatpush1.msra.mxu0 0.0
        %537 = vmatprep.subr.mxu0 0.0
        %538 = vmatpush1.msra.mxu0 0.0
        %539 = vmatprep.subr.mxu0 0.0
        %540 = vmatpush1.msra.mxu0 0.0
        %541 = vmatprep.subr.mxu0 0.0
        %542 = vmatpush1.msra.mxu0 0.0
        %543 = vmatprep.subr.mxu0 0.0
        %544 = vmatpush1.msra.mxu0 0.0
        %545 = vmatprep.subr.mxu0 0.0
        %546 = vmatpush1.msra.mxu0 0.0
        %547 = vmatprep.subr.mxu0 0.0
        %548 = vmatpush1.msra.mxu0 0.0
        %549 = vmatprep.subr.mxu0 0.0
        %550 = vmatpush1.msra.mxu0 0.0
        %551 = vmatprep.subr.mxu0 0.0
        %552 = vmatpush1.msra.mxu0 0.0
        %553 = vmatprep.subr.mxu0 0.0
        %554 = vmatpush1.msra.mxu0 0.0
        %555 = vmatprep.subr.mxu0 0.0
        %556 = vmatpush1.msra.mxu0 0.0
        %557 = vmatprep.subr.mxu0 0.0
        %558 = vmatpush1.msra.mxu0 0.0
        %559 = vmatprep.subr.mxu0 0.0
        %560 = vmatpush1.msra.mxu0 0.0
        %561 = vmatprep.subr.mxu0 0.0
        %562 = vmatpush1.msra.mxu0 0.0
        %563 = vmatprep.subr.mxu0 0.0
        %564 = vmatpush1.msra.mxu0 0.0
        %565 = vmatprep.subr.mxu0 0.0
        %566 = vmatpush1.msra.mxu0 0.0
        %567 = vmatprep.subr.mxu0 0.0
        %568 = vmatpush1.msra.mxu0 0.0
        %569 = vmatprep.subr.mxu0 0.0
        %570 = vmatpush1.msra.mxu0 0.0
        %571 = vmatprep.subr.mxu0 0.0
        %572 = vmatpush1.msra.mxu0 0.0
        %573 = vmatprep.subr.mxu0 0.0
        %574 = vmatpush1.msra.mxu0 0.0
        %575 = vmatprep.subr.mxu0 0.0
        %576 = vmatpush1.msra.mxu0 0.0
        %577 = vmatprep.subr.mxu0 0.0
        %578 = vmatpush1.msra.mxu0 0.0
        %579 = vmatprep.subr.mxu0 0.0
        %580 = vmatpush1.msra.mxu0 0.0
        %581 = vmatprep.subr.mxu0 0.0
        %582 = vmatpush1.msra.mxu0 0.0
        %583 = vmatprep.mubr.f32.mxu0 0.0
        %584 = vmatmul.mubr.f32.gmra.mrb[0].mxu0 %v514
        %v585 = vpop.f32.mrb[0].mxu0
        %v586 = vadd.f32 0.0, %v585
        %v587 = vpop.f32.mrb[0].mxu0
        %588 = vmatprep.mubr.f32.mxu0 0.0
        %589 = vmatmul.mubr.f32.gmra.mrb[0].mxu0 %v517
        %v590 = vpop.f32.mrb[0].mxu0
        %v591 = vadd.f32 0.0, %v590
        %v592 = vpop.f32.mrb[0].mxu0
        %593 = vdwg.mxu0
        %v594 = vadd.f32 %v511, %v586
        %v595 = vadd.f32 %v512, %v591
        %596 = vst [vmem:[#allocation4] sm:$0xff] %v594
        %597 = vst [vmem:[#allocation4 + $0x8] sm:$0xff] %v595
        %598 = vst.msk [vmem:[#allocation2] sm:$0xff] %vm496, %v460
        %599 = vst.msk [vmem:[#allocation2 + $0x8] sm:$0xff] %vm496, %v461
        // Predicated region
        $region41: #{vision_encoder_forward.11} parent=35 // pred_check
          %p600 = pneg %p352
        $region42: #{vision_encoder_forward.11} parent=35 // pred_check_branch
          %602 = sbr.rel (%p600) target = $region44
        $region43: #{vision_encoder_forward.11} parent=35 // pred_region
          %v603 = vld [vmem:[#allocation3] sm:$0xff]
          %v604 = vld [vmem:[#allocation3 + $0x8] sm:$0xff]
          %v605 = vrcp.pop %v603
          %v606 = vrcp.pop %v604
          %v607 = vld [vmem:[#allocation4] sm:$0xff]
          %v608 = vld [vmem:[#allocation4 + $0x8] sm:$0xff]
          %610 = vset.pattern.permute.xlu0 0
          %611 = vperm.xlu0 %610, %v605
          %v612 = vpop.permute.xlu0 %611
          %615 = vset.pattern.permute.xlu0 0
          %616 = vperm.xlu0 %615, %v606
          %v617 = vpop.permute.xlu0 %616
          %v619 = vmul.f32 %v607, %v612
          %v620 = vmul.f32 %v608, %v617
          %621 = vst [vmem:[%s308] sm:$0xff] %v619
          %622 = vst [vmem:[%s308 + $0x8] sm:$0xff] %v620
        $region44: #{vision_encoder_forward.11} parent=35 // pred_fallthru
          _
        %s623 = sand.u32 %s160, 1
        %s624 = sand.u32 %s160, 1
        %s625 = smul.addr %s624, 16
        %s626 = scalar_lea.vmem [#allocation5], %s625
        // Predicated region
        $region45: #{vision_encoder_forward.11} parent=35 // pred_check
          %p627 = pneg %p170
        $region46: #{vision_encoder_forward.11} parent=35 // pred_check_branch
          %629 = sbr.rel (%p627) target = $region48
        $region47: #{vision_encoder_forward.11} parent=35 // pred_region
          %s630 = smul.addr %s20, 4
          %s631 = sadd.s32 %s21, %s630
          %s632 = smul.addr %s631, 8
          %s633 = scalar_lea.vmem %s4, %s632
          // Predicated region
          $region49: #{vision_encoder_forward.11} parent=47 // pred_check
            _
          $region50: #{vision_encoder_forward.11} parent=47 // pred_check_branch
            %635 = sbr.rel (0) target = $region52
          $region51: #{vision_encoder_forward.11} parent=47 // pred_region
            // Predicated region
            $region53: #{vision_encoder_forward.11} parent=51 // pred_check
              _
            $region54: #{vision_encoder_forward.11} parent=51 // pred_check_branch
              %637 = sbr.rel (0) target = $region56
            $region55: #{vision_encoder_forward.11} parent=51 // pred_region
              // Predicated region
              $region68: #{vision_encoder_forward.11} parent=55 // pred_check
                _
              $region69: #{vision_encoder_forward.11} parent=55 // pred_check_branch
                %654 = sbr.rel (0) target = $region71
              $region70: #{vision_encoder_forward.11} parent=55 // pred_region
                loop: start=0, step=1, limit=1
                $region72: #{vision_encoder_forward.11} parent=70 // loop_pre_header
                  _
                $region73: #{vision_encoder_forward.11} parent=70 // loop_header
                  %s656 = sphi 0, %s660
                  %p657 = scmp.ge.s32.totalorder %s656, 1
                  %s661 = sphi %s626, %s626
                  %s662 = sphi %s633, %s633
                $region74: #{vision_encoder_forward.11} parent=70 // loop_header_branch
                  %659 = sbr.rel (%p657) target = $region78
                $region75: #{vision_encoder_forward.11} parent=70 // loop_body
                  %v663 = vld [vmem:[%s661] sm:$0xff]
                  %664 = vst [vmem:[%s662] sm:$0xff] %v663
                  %v665 = vld [vmem:[%s661 + $0x8] sm:$0xff]
                  %666 = vst [vmem:[%s662 + $0x10] sm:$0xff] %v665
                $region76: #{vision_encoder_forward.11} parent=70 // loop_footer
                  %s660 = sadd.s32 1, %s656
                $region77: #{vision_encoder_forward.11} parent=70 // loop_footer_branch
                  %655 = sbr.rel target = $region73
                $region78: #{vision_encoder_forward.11} parent=70 // loop_exit
                  _
              $region71: #{vision_encoder_forward.11} parent=55 // pred_fallthru
                _
              // Predicated region
              $region79: #{vision_encoder_forward.11} parent=55 // pred_check
                _
              $region80: #{vision_encoder_forward.11} parent=55 // pred_check_branch
                %668 = sbr.rel target = $region82
              $region81: #{vision_encoder_forward.11} parent=55 // pred_region
                _
              $region82: #{vision_encoder_forward.11} parent=55 // pred_fallthru
                _
            $region56: #{vision_encoder_forward.11} parent=51 // pred_fallthru
              _
            // Predicated region
            $region57: #{vision_encoder_forward.11} parent=51 // pred_check
              _
            $region58: #{vision_encoder_forward.11} parent=51 // pred_check_branch
              %639 = sbr.rel target = $region60
            $region59: #{vision_encoder_forward.11} parent=51 // pred_region
              loop: start=0, step=1, limit=1
              $region61: #{vision_encoder_forward.11} parent=59 // loop_pre_header
                _
              $region62: #{vision_encoder_forward.11} parent=59 // loop_header
                %s642 = sphi 0, %s646
                %p643 = scmp.ge.s32.totalorder %s642, 1
                %s647 = sphi %s626, %s626
                %s648 = sphi %s633, %s633
              $region63: #{vision_encoder_forward.11} parent=59 // loop_header_branch
                %645 = sbr.rel (%p643) target = $region67
              $region64: #{vision_encoder_forward.11} parent=59 // loop_body
                %v649 = vld [vmem:[%s647] sm:$0xff]
                %650 = vst [vmem:[%s648] sm:$0xff] %v649
                %v651 = vld [vmem:[%s647 + $0x8] sm:$0xff]
                %652 = vst [vmem:[%s648 + $0x10] sm:$0xff] %v651
              $region65: #{vision_encoder_forward.11} parent=59 // loop_footer
                %s646 = sadd.s32 1, %s642
              $region66: #{vision_encoder_forward.11} parent=59 // loop_footer_branch
                %641 = sbr.rel target = $region62
              $region67: #{vision_encoder_forward.11} parent=59 // loop_exit
                _
            $region60: #{vision_encoder_forward.11} parent=51 // pred_fallthru
              _
          $region52: #{vision_encoder_forward.11} parent=47 // pred_fallthru
            _
          %669 = vnop
        $region48: #{vision_encoder_forward.11} parent=35 // pred_fallthru
          _
      $region36: #{vision_encoder_forward.11} parent=5 // pred_fallthru
        _
      %p670 = scmp.le.s32.totalorder 2, %s10
      // Predicated region
      $region83: #{vision_encoder_forward.11} parent=5 // pred_check
        %p671 = pneg %p670
      $region84: #{vision_encoder_forward.11} parent=5 // pred_check_branch
        %673 = sbr.rel (%p671) target = $region86
      $region85: #{vision_encoder_forward.11} parent=5 // pred_region
        %s674 = ssub.s32 %s10, 2
        // Predicated region
        $region87: #{vision_encoder_forward.11} parent=85 // pred_check
          %p675 = pneg %p176
        $region88: #{vision_encoder_forward.11} parent=85 // pred_check_branch
          %677 = sbr.rel (%p675) target = $region90
        $region89: #{vision_encoder_forward.11} parent=85 // pred_region
          %s678 = sand.u32 %s161, 1
          %s679 = sand.u32 %s161, 1
          %s680 = smul.addr %s679, 16
          %s681 = scalar_lea.vmem [#allocation5], %s680
        $region90: #{vision_encoder_forward.11} parent=85 // pred_fallthru
          _
      $region86: #{vision_encoder_forward.11} parent=5 // pred_fallthru
        _
    $region6: #{vision_encoder_forward.11} parent=1 // loop_footer
      %s14 = sadd.s32 1, %s10
    $region7: #{vision_encoder_forward.11} parent=1 // loop_footer_branch
      %9 = sbr.rel target = $region3
    $region8: #{vision_encoder_forward.11} parent=1 // loop_exit
      _

// kernel: vision_encoder_forward.15
$region0: #{vision_encoder_forward.15}
  #allocation0 [shape = 'u32[]', space=smem, size = 0x4, offset = 0x4, fixed_abs, tag = 'smem constant byte address 0x4 - core index']
  #allocation1 [shape = 'u32[144,128]{1,0:T(1,128)}', space=vmem, size = 0x12000, scoped, tag = 'internal scratch']
  %s0 = inlined_call_operand.vmem [shape: f32[32,512], index: 0, kind: input, shape index: {}]
  %s1 = inlined_call_operand.vmem [shape: f32[512,128], index: 1, kind: input, shape index: {}]
  %s2 = inlined_call_operand.vmem [shape: f32[1,128], index: 2, kind: input, shape index: {}]
  %s3 = inlined_call_operand.vmem [shape: f32[32,128], index: 3, kind: input, shape index: {}]
  %s4 = inlined_call_operand.hbm [shape: f32[32,128], index: 4, kind: output, shape index: {}]
  %s5 = sld [smem:[#allocation0]]
  $region49: #{vision_encoder_forward.15} parent=0
    _
  %s7 = ssub.s32 1, %s5
  %s8 = scalar_select 0, %s7, %s5
  $region1: #{vision_encoder_forward.15} parent=0
    #allocation2 [shape = 'u8[16384]{0}', space=vmem, size = 0x4000, scoped, tag = 'output window, operand 0']
    #allocation3 [shape = 's32[2]{0}', space=sflag, size = 0x8, scoped, tag = 'scoped memory for vision_encoder_forward.15']
    %9 = vsyncpa [#allocation3], 0
    %s10 = scalar_lea.sflag [#allocation3], 1
    %11 = vsyncpa %s10, 0
    loop: start=0, step=1, limit=4
    $region2: #{vision_encoder_forward.15} parent=1 // loop_pre_header
      _
    $region3: #{vision_encoder_forward.15} parent=1 // loop_header
      %s13 = sphi 0, %s17
      %p14 = scmp.ge.s32.totalorder %s13, 4
      %s20 = sphi 0, %s32
      %s21 = sphi 0, %s28
      %s22 = sphi 0, %s20
      %s23 = sphi 0, %s21
      %s24 = sphi 0, %s22
      %s25 = sphi 0, %s23
      %s35 = sphi 0, %s37
      %s38 = sphi 0, %s35
      %s39 = sphi 0, %s38
      %s55 = sphi 0, %s39
      %s61 = sphi 0, %s63
      %s64 = sphi 0, %s61
      %s65 = sphi 0, %s64
      %s81 = sphi 0, %s65
      %s87 = sphi 0, %s89
      %s90 = sphi 0, %s87
      %s91 = sphi 0, %s90
      %s107 = sphi 0, %s91
      %s115 = sphi 0, %s117
      %s118 = sphi 0, %s115
      %s119 = sphi 0, %s118
      %s135 = sphi 0, %s119
      %s143 = sphi 0, %s145
      %s146 = sphi 0, %s143
      %s147 = sphi 0, %s146
      %s163 = sphi 0, %s147
    $region4: #{vision_encoder_forward.15} parent=1 // loop_header_branch
      %16 = sbr.rel (%p14) target = $region8
    $region5: #{vision_encoder_forward.15} parent=1 // loop_body
      %s18 = ssub.s32 %s13, 1
      %s19 = ssub.s32 %s13, 2
      %s26 = sadd.s32 1, %s21
      %p27 = scmp.ge.s32.totalorder %s26, 1
      %s28 = scalar_select %p27, 0, %s26
      %s29 = sadd.s32 1, %s20
      %s30 = scalar_select %p27, %s29, %s20
      %p31 = scmp.ge.s32.totalorder %s30, 2
      %s32 = scalar_select %p31, 0, %s30
      %s33 = ssub.s32 %s20, %s32
      %p34 = scmp.eq.s32.totalorder %s33, 0
      %s36 = sadd.s32 %s35, 1
      %s37 = scalar_select %p34, %s35, %s36
      %p40 = pneg %p34
      %p41 = scmp.eq.s32.totalorder %s13, 1
      %p42 = por %p40, %p41
      %p43 = scmp.ne.s32.totalorder %s35, %s38
      %p44 = scmp.eq.s32.totalorder %s13, 0
      %p45 = por %p43, %p44
      %p46 = scmp.ne.s32.totalorder %s35, %s38
      %p47 = scmp.eq.s32.totalorder %s18, 1
      %p48 = por %p46, %p47
      %p49 = scmp.ne.s32.totalorder %s38, %s39
      %p50 = scmp.eq.s32.totalorder %s18, 0
      %p51 = por %p49, %p50
      %p52 = scmp.ne.s32.totalorder %s38, %s39
      %p53 = scmp.eq.s32.totalorder %s19, 1
      %p54 = por %p52, %p53
      %p56 = scmp.ne.s32.totalorder %s39, %s55
      %p57 = scmp.eq.s32.totalorder %s19, 0
      %p58 = por %p56, %p57
      %s59 = ssub.s32 %s21, %s28
      %p60 = scmp.eq.s32.totalorder %s59, 0
      %s62 = sadd.s32 %s61, 1
      %s63 = scalar_select %p60, %s61, %s62
      %p66 = pneg %p60
      %p67 = scmp.eq.s32.totalorder %s13, 1
      %p68 = por %p66, %p67
      %p69 = scmp.ne.s32.totalorder %s61, %s64
      %p70 = scmp.eq.s32.totalorder %s13, 0
      %p71 = por %p69, %p70
      %p72 = scmp.ne.s32.totalorder %s61, %s64
      %p73 = scmp.eq.s32.totalorder %s18, 1
      %p74 = por %p72, %p73
      %p75 = scmp.ne.s32.totalorder %s64, %s65
      %p76 = scmp.eq.s32.totalorder %s18, 0
      %p77 = por %p75, %p76
      %p78 = scmp.ne.s32.totalorder %s64, %s65
      %p79 = scmp.eq.s32.totalorder %s19, 1
      %p80 = por %p78, %p79
      %p82 = scmp.ne.s32.totalorder %s65, %s81
      %p83 = scmp.eq.s32.totalorder %s19, 0
      %p84 = por %p82, %p83
      %s85 = ssub.s32 %s21, %s28
      %p86 = scmp.eq.s32.totalorder %s85, 0
      %s88 = sadd.s32 %s87, 1
      %s89 = scalar_select %p86, %s87, %s88
      %p92 = pneg %p86
      %p93 = scmp.eq.s32.totalorder %s13, 1
      %p94 = por %p92, %p93
      %p95 = scmp.ne.s32.totalorder %s87, %s90
      %p96 = scmp.eq.s32.totalorder %s13, 0
      %p97 = por %p95, %p96
      %p98 = scmp.ne.s32.totalorder %s87, %s90
      %p99 = scmp.eq.s32.totalorder %s18, 1
      %p100 = por %p98, %p99
      %p101 = scmp.ne.s32.totalorder %s90, %s91
      %p102 = scmp.eq.s32.totalorder %s18, 0
      %p103 = por %p101, %p102
      %p104 = scmp.ne.s32.totalorder %s90, %s91
      %p105 = scmp.eq.s32.totalorder %s19, 1
      %p106 = por %p104, %p105
      %p108 = scmp.ne.s32.totalorder %s91, %s107
      %p109 = scmp.eq.s32.totalorder %s19, 0
      %p110 = por %p108, %p109
      %s111 = ssub.s32 %s20, %s32
      %s112 = ssub.s32 %s21, %s28
      %s113 = sor.u32 %s111, %s112
      %p114 = scmp.eq.s32.totalorder %s113, 0
      %s116 = sadd.s32 %s115, 1
      %s117 = scalar_select %p114, %s115, %s116
      %p120 = pneg %p114
      %p121 = scmp.eq.s32.totalorder %s13, 1
      %p122 = por %p120, %p121
      %p123 = scmp.ne.s32.totalorder %s115, %s118
      %p124 = scmp.eq.s32.totalorder %s13, 0
      %p125 = por %p123, %p124
      %p126 = scmp.ne.s32.totalorder %s115, %s118
      %p127 = scmp.eq.s32.totalorder %s18, 1
      %p128 = por %p126, %p127
      %p129 = scmp.ne.s32.totalorder %s118, %s119
      %p130 = scmp.eq.s32.totalorder %s18, 0
      %p131 = por %p129, %p130
      %p132 = scmp.ne.s32.totalorder %s118, %s119
      %p133 = scmp.eq.s32.totalorder %s19, 1
      %p134 = por %p132, %p133
      %p136 = scmp.ne.s32.totalorder %s119, %s135
      %p137 = scmp.eq.s32.totalorder %s19, 0
      %p138 = por %p136, %p137
      %s139 = ssub.s32 %s20, %s32
      %s140 = ssub.s32 %s21, %s28
      %s141 = sor.u32 %s139, %s140
      %p142 = scmp.eq.s32.totalorder %s141, 0
      %s144 = sadd.s32 %s143, 1
      %s145 = scalar_select %p142, %s143, %s144
      %p148 = pneg %p142
      %p149 = scmp.eq.s32.totalorder %s13, 1
      %p150 = por %p148, %p149
      %p151 = scmp.ne.s32.totalorder %s143, %s146
      %p152 = scmp.eq.s32.totalorder %s13, 0
      %p153 = por %p151, %p152
      %p154 = scmp.ne.s32.totalorder %s143, %s146
      %p155 = scmp.eq.s32.totalorder %s18, 1
      %p156 = por %p154, %p155
      %p157 = scmp.ne.s32.totalorder %s146, %s147
      %p158 = scmp.eq.s32.totalorder %s18, 0
      %p159 = por %p157, %p158
      %p160 = scmp.ne.s32.totalorder %s146, %s147
      %p161 = scmp.eq.s32.totalorder %s19, 1
      %p162 = por %p160, %p161
      %p164 = scmp.ne.s32.totalorder %s147, %s163
      %p165 = scmp.eq.s32.totalorder %s19, 0
      %p166 = por %p164, %p165
      %p167 = scmp.le.s32.totalorder 1, %s13
      %p168 = scmp.lt.s32.totalorder %s13, 3
      %p169 = pnand %p167, %p168
      %p170 = pneg %p169
      // Predicated region
      $region9: #{vision_encoder_forward.15} parent=5 // pred_check
        _
      $region10: #{vision_encoder_forward.15} parent=5 // pred_check_branch
        %172 = sbr.rel (%p169) target = $region12
      $region11: #{vision_encoder_forward.15} parent=5 // pred_region
        %s173 = ssub.s32 %s13, 1
        // Predicated region
        $region13: #{vision_encoder_forward.15} parent=11 // pred_check
          %p174 = pneg %p77
        $region14: #{vision_encoder_forward.15} parent=11 // pred_check_branch
          %176 = sbr.rel (%p174) target = $region16
        $region15: #{vision_encoder_forward.15} parent=11 // pred_region
          %p177 = scmp.lt.s32.totalorder %s23, 0
          %s178 = scalar_select %p177, %s23, 0
          %s179 = smul.addr %s178, 8
          %s180 = scalar_lea.vmem %s1, %s179
        $region16: #{vision_encoder_forward.15} parent=11 // pred_fallthru
          _
        // Predicated region
        $region17: #{vision_encoder_forward.15} parent=11 // pred_check
          %p181 = pneg %p103
        $region18: #{vision_encoder_forward.15} parent=11 // pred_check_branch
          %183 = sbr.rel (%p181) target = $region20
        $region19: #{vision_encoder_forward.15} parent=11 // pred_region
          %p184 = scmp.lt.s32.totalorder %s23, 0
          %s185 = scalar_select %p184, %s23, 0
          %s186 = scalar_lea.vmem %s2, %s185
        $region20: #{vision_encoder_forward.15} parent=11 // pred_fallthru
          _
      $region12: #{vision_encoder_forward.15} parent=5 // pred_fallthru
        _
      %p187 = scmp.lt.s32.totalorder %s13, 2
      // Predicated region
      $region21: #{vision_encoder_forward.15} parent=5 // pred_check
        %p188 = pneg %p187
      $region22: #{vision_encoder_forward.15} parent=5 // pred_check_branch
        %190 = sbr.rel (%p188) target = $region24
      $region23: #{vision_encoder_forward.15} parent=5 // pred_region
        // Predicated region
        $region25: #{vision_encoder_forward.15} parent=23 // pred_check
          %p191 = pneg %p45
        $region26: #{vision_encoder_forward.15} parent=23 // pred_check_branch
          %193 = sbr.rel (%p191) target = $region28
        $region27: #{vision_encoder_forward.15} parent=23 // pred_region
          %s194 = smul.u32 2, %s20
          %p195 = scmp.lt.s32.totalorder %s194, 3
          %s196 = scalar_select %p195, %s194, 3
          %s197 = smul.addr %s196, 4
          %s198 = smul.addr %s197, 8
          %s199 = scalar_lea.vmem %s0, %s198
          %s200 = smul.u32 2, %s20
        $region28: #{vision_encoder_forward.15} parent=23 // pred_fallthru
          _
        // Predicated region
        $region29: #{vision_encoder_forward.15} parent=23 // pred_check
          %p201 = pneg %p125
        $region30: #{vision_encoder_forward.15} parent=23 // pred_check_branch
          %203 = sbr.rel (%p201) target = $region32
        $region31: #{vision_encoder_forward.15} parent=23 // pred_region
          %s204 = smul.u32 2, %s20
          %p205 = scmp.lt.s32.totalorder %s204, 3
          %s206 = scalar_select %p205, %s204, 3
          %p207 = scmp.lt.s32.totalorder %s21, 0
          %s208 = scalar_select %p207, %s21, 0
          %s209 = sadd.s32 %s208, %s206
          %s210 = smul.addr %s209, 8
          %s211 = scalar_lea.vmem %s3, %s210
          %s212 = smul.u32 2, %s20
        $region32: #{vision_encoder_forward.15} parent=23 // pred_fallthru
          _
      $region24: #{vision_encoder_forward.15} parent=5 // pred_fallthru
        _
      %p213 = scmp.le.s32.totalorder 1, %s13
      %p214 = scmp.lt.s32.totalorder %s13, 3
      %p215 = pnand %p213, %p214
      %p216 = pneg %p215
      // Predicated region
      $region33: #{vision_encoder_forward.15} parent=5 // pred_check
        _
      $region34: #{vision_encoder_forward.15} parent=5 // pred_check_branch
        %218 = sbr.rel (%p215) target = $region36
      $region35: #{vision_encoder_forward.15} parent=5 // pred_region
        %s219 = ssub.s32 %s13, 1
        %s220 = smul.u32 2, %s22
        %p221 = scmp.lt.s32.totalorder %s220, 3
        %s222 = scalar_select %p221, %s220, 3
        %s223 = smul.addr %s222, 4
        %s224 = smul.addr %s223, 8
        %s225 = scalar_lea.vmem %s0, %s224
        %p226 = pneg %p51
        %p227 = pneg %p48
        %p228 = scmp.lt.s32.totalorder %s23, 0
        %s229 = scalar_select %p228, %s23, 0
        %s230 = smul.addr %s229, 8
        %s231 = scalar_lea.vmem %s1, %s230
        %p232 = pneg %p77
        %p233 = pneg %p74
        %p234 = scmp.lt.s32.totalorder %s23, 0
        %s235 = scalar_select %p234, %s23, 0
        %s236 = scalar_lea.vmem %s2, %s235
        %p237 = pneg %p103
        %p238 = pneg %p100
        %s239 = smul.u32 2, %s22
        %p240 = scmp.lt.s32.totalorder %s239, 3
        %s241 = scalar_select %p240, %s239, 3
        %p242 = scmp.lt.s32.totalorder %s23, 0
        %s243 = scalar_select %p242, %s23, 0
        %s244 = sadd.s32 %s243, %s241
        %s245 = smul.addr %s244, 8
        %s246 = scalar_lea.vmem %s3, %s245
        %p247 = pneg %p131
        %p248 = pneg %p128
        %p249 = pneg %p159
        %p250 = pneg %p156
        %s251 = sand.u32 %s146, 1
        %s252 = scalar_lea.sflag [#allocation3], %s251
        %s253 = sand.u32 %s146, 1
        %s254 = smul.addr %s253, 16
        %s255 = scalar_lea.vmem [#allocation2], %s254
        %s256 = smul.u32 2, %s22
        %p257 = scmp.lt.s32.totalorder %s256, 3
        %s258 = scalar_select %p257, %s256, 3
        %s259 = smul.addr %s258, 4
        %s260 = smul.addr %s259, 8
        %s261 = scalar_lea.vmem %s0, %s260
        %s262 = smul.u32 2, %s22
        %p263 = scmp.lt.s32.totalorder %s23, 0
        %s264 = scalar_select %p263, %s23, 0
        %s265 = smul.addr %s264, 8
        %s266 = scalar_lea.vmem %s1, %s265
        %p267 = scmp.lt.s32.totalorder %s23, 0
        %s268 = scalar_select %p267, %s23, 0
        %s269 = scalar_lea.vmem %s2, %s268
        %s270 = smul.u32 2, %s22
        %p271 = scmp.lt.s32.totalorder %s270, 3
        %s272 = scalar_select %p271, %s270, 3
        %p273 = scmp.lt.s32.totalorder %s23, 0
        %s274 = scalar_select %p273, %s23, 0
        %s275 = sadd.s32 %s274, %s272
        %s276 = smul.addr %s275, 8
        %s277 = scalar_lea.vmem %s3, %s276
        %s278 = smul.u32 2, %s22
        %s279 = smul.u32 2, %s22
        %v280 = vld [vmem:[%s261] sm:$0xff]
        %v281 = vld [vmem:[%s261 + $0x8] sm:$0xff]
        %v282 = vld [vmem:[%s261 + $0x10] sm:$0xff]
        %v283 = vld [vmem:[%s261 + $0x18] sm:$0xff]
        %v284 = vld [vmem:[%s261 + $0x20] sm:$0xff]
        %v285 = vld [vmem:[%s261 + $0x28] sm:$0xff]
        %v286 = vld [vmem:[%s261 + $0x30] sm:$0xff]
        %v287 = vld [vmem:[%s261 + $0x38] sm:$0xff]
        %v288 = vld [vmem:[%s266] sm:$0xff]
        %v289 = vld [vmem:[%s266 + $0x8] sm:$0xff]
        %v290 = vld [vmem:[%s266 + $0x10] sm:$0xff]
        %v291 = vld [vmem:[%s266 + $0x18] sm:$0xff]
        %v292 = vld [vmem:[%s266 + $0x20] sm:$0xff]
        %v293 = vld [vmem:[%s266 + $0x28] sm:$0xff]
        %v294 = vld [vmem:[%s266 + $0x30] sm:$0xff]
        %v295 = vld [vmem:[%s266 + $0x38] sm:$0xff]
        %v296 = vld [vmem:[%s266 + $0x40] sm:$0xff]
        %v297 = vld [vmem:[%s266 + $0x48] sm:$0xff]
        %v298 = vld [vmem:[%s266 + $0x50] sm:$0xff]
        %v299 = vld [vmem:[%s266 + $0x58] sm:$0xff]
        %v300 = vld [vmem:[%s266 + $0x60] sm:$0xff]
        %v301 = vld [vmem:[%s266 + $0x68] sm:$0xff]
        %v302 = vld [vmem:[%s266 + $0x70] sm:$0xff]
        %v303 = vld [vmem:[%s266 + $0x78] sm:$0xff]
        %v304 = vld [vmem:[%s266 + $0x80] sm:$0xff]
        %v305 = vld [vmem:[%s266 + $0x88] sm:$0xff]
        %v306 = vld [vmem:[%s266 + $0x90] sm:$0xff]
        %v307 = vld [vmem:[%s266 + $0x98] sm:$0xff]
        %v308 = vld [vmem:[%s266 + $0xa0] sm:$0xff]
        %v309 = vld [vmem:[%s266 + $0xa8] sm:$0xff]
        %v310 = vld [vmem:[%s266 + $0xb0] sm:$0xff]
        %v311 = vld [vmem:[%s266 + $0xb8] sm:$0xff]
        %v312 = vld [vmem:[%s266 + $0xc0] sm:$0xff]
        %v313 = vld [vmem:[%s266 + $0xc8] sm:$0xff]
        %v314 = vld [vmem:[%s266 + $0xd0] sm:$0xff]
        %v315 = vld [vmem:[%s266 + $0xd8] sm:$0xff]
        %v316 = vld [vmem:[%s266 + $0xe0] sm:$0xff]
        %v317 = vld [vmem:[%s266 + $0xe8] sm:$0xff]
        %v318 = vld [vmem:[%s266 + $0xf0] sm:$0xff]
        %v319 = vld [vmem:[%s266 + $0xf8] sm:$0xff]
        %v320 = vld [vmem:[%s266 + $0x100] sm:$0xff]
        %v321 = vld [vmem:[%s266 + $0x108] sm:$0xff]
        %v322 = vld [vmem:[%s266 + $0x110] sm:$0xff]
        %v323 = vld [vmem:[%s266 + $0x118] sm:$0xff]
        %v324 = vld [vmem:[%s266 + $0x120] sm:$0xff]
        %v325 = vld [vmem:[%s266 + $0x128] sm:$0xff]
        %v326 = vld [vmem:[%s266 + $0x130] sm:$0xff]
        %v327 = vld [vmem:[%s266 + $0x138] sm:$0xff]
        %v328 = vld [vmem:[%s266 + $0x140] sm:$0xff]
        %v329 = vld [vmem:[%s266 + $0x148] sm:$0xff]
        %v330 = vld [vmem:[%s266 + $0x150] sm:$0xff]
        %v331 = vld [vmem:[%s266 + $0x158] sm:$0xff]
        %v332 = vld [vmem:[%s266 + $0x160] sm:$0xff]
        %v333 = vld [vmem:[%s266 + $0x168] sm:$0xff]
        %v334 = vld [vmem:[%s266 + $0x170] sm:$0xff]
        %v335 = vld [vmem:[%s266 + $0x178] sm:$0xff]
        %v336 = vld [vmem:[%s266 + $0x180] sm:$0xff]
        %v337 = vld [vmem:[%s266 + $0x188] sm:$0xff]
        %v338 = vld [vmem:[%s266 + $0x190] sm:$0xff]
        %v339 = vld [vmem:[%s266 + $0x198] sm:$0xff]
        %v340 = vld [vmem:[%s266 + $0x1a0] sm:$0xff]
        %v341 = vld [vmem:[%s266 + $0x1a8] sm:$0xff]
        %v342 = vld [vmem:[%s266 + $0x1b0] sm:$0xff]
        %v343 = vld [vmem:[%s266 + $0x1b8] sm:$0xff]
        %v344 = vld [vmem:[%s266 + $0x1c0] sm:$0xff]
        %v345 = vld [vmem:[%s266 + $0x1c8] sm:$0xff]
        %v346 = vld [vmem:[%s266 + $0x1d0] sm:$0xff]
        %v347 = vld [vmem:[%s266 + $0x1d8] sm:$0xff]
        %v348 = vld [vmem:[%s266 + $0x1e0] sm:$0xff]
        %v349 = vld [vmem:[%s266 + $0x1e8] sm:$0xff]
        %v350 = vld [vmem:[%s266 + $0x1f0] sm:$0xff]
        %v351 = vld [vmem:[%s266 + $0x1f8] sm:$0xff]
        %v352 = vld [vmem:[%s269] sm:$0x1]
        %v354 = vlaneseq
        %v355 = vshrl.u32 %v354, 7
        %v356 = vsub.s32 0, %v355
        %v357 = vrot.slane %v352, %v356
        %359 = vmatprep.subr.mxu0 0.0
        %360 = vmatpush1.msra.mxu0 %v288
        %361 = vmatprep.subr.mxu0 0.0
        %362 = vmatpush1.msra.mxu0 %v289
        %363 = vmatprep.subr.mxu0 0.0
        %364 = vmatpush1.msra.mxu0 %v290
        %365 = vmatprep.subr.mxu0 0.0
        %366 = vmatpush1.msra.mxu0 %v291
        %367 = vmatprep.subr.mxu0 0.0
        %368 = vmatpush1.msra.mxu0 %v292
        %369 = vmatprep.subr.mxu0 0.0
        %370 = vmatpush1.msra.mxu0 %v293
        %371 = vmatprep.subr.mxu0 0.0
        %372 = vmatpush1.msra.mxu0 %v294
        %373 = vmatprep.subr.mxu0 0.0
        %374 = vmatpush1.msra.mxu0 %v295
        %375 = vmatprep.subr.mxu0 0.0
        %376 = vmatpush1.msra.mxu0 %v296
        %377 = vmatprep.subr.mxu0 0.0
        %378 = vmatpush1.msra.mxu0 %v297
        %379 = vmatprep.subr.mxu0 0.0
        %380 = vmatpush1.msra.mxu0 %v298
        %381 = vmatprep.subr.mxu0 0.0
        %382 = vmatpush1.msra.mxu0 %v299
        %383 = vmatprep.subr.mxu0 0.0
        %384 = vmatpush1.msra.mxu0 %v300
        %385 = vmatprep.subr.mxu0 0.0
        %386 = vmatpush1.msra.mxu0 %v301
        %387 = vmatprep.subr.mxu0 0.0
        %388 = vmatpush1.msra.mxu0 %v302
        %389 = vmatprep.subr.mxu0 0.0
        %390 = vmatpush1.msra.mxu0 %v303
        %391 = vmatprep.subr.mxu0 0.0
        %392 = vmatpush1.msra.mxu0 %v304
        %393 = vmatprep.subr.mxu0 0.0
        %394 = vmatpush1.msra.mxu0 %v305
        %395 = vmatprep.subr.mxu0 0.0
        %396 = vmatpush1.msra.mxu0 %v306
        %397 = vmatprep.subr.mxu0 0.0
        %398 = vmatpush1.msra.mxu0 %v307
        %399 = vmatprep.subr.mxu0 0.0
        %400 = vmatpush1.msra.mxu0 %v308
        %401 = vmatprep.subr.mxu0 0.0
        %402 = vmatpush1.msra.mxu0 %v309
        %403 = vmatprep.subr.mxu0 0.0
        %404 = vmatpush1.msra.mxu0 %v310
        %405 = vmatprep.subr.mxu0 0.0
        %406 = vmatpush1.msra.mxu0 %v311
        %407 = vmatprep.subr.mxu0 0.0
        %408 = vmatpush1.msra.mxu0 %v312
        %409 = vmatprep.subr.mxu0 0.0
        %410 = vmatpush1.msra.mxu0 %v313
        %411 = vmatprep.subr.mxu0 0.0
        %412 = vmatpush1.msra.mxu0 %v314
        %413 = vmatprep.subr.mxu0 0.0
        %414 = vmatpush1.msra.mxu0 %v315
        %415 = vmatprep.subr.mxu0 0.0
        %416 = vmatpush1.msra.mxu0 %v316
        %417 = vmatprep.subr.mxu0 0.0
        %418 = vmatpush1.msra.mxu0 %v317
        %419 = vmatprep.subr.mxu0 0.0
        %420 = vmatpush1.msra.mxu0 %v318
        %421 = vmatprep.subr.mxu0 0.0
        %422 = vmatpush1.msra.mxu0 %v319
        %423 = vmatprep.mubr.f32.mxu0 %v281
        %424 = vmatmul.mubr.f32.gmra.mrb[0].mxu0 %v280
        %v425 = vpop.f32.mrb[0].mxu0
        %v426 = vadd.f32 %v357, %v425
        %v427 = vpop.f32.mrb[0].mxu0
        %428 = vmatprep.mubr.f32.mxu0 %v285
        %429 = vmatmul.mubr.f32.gmra.mrb[0].mxu0 %v284
        %v430 = vpop.f32.mrb[0].mxu0
        %v431 = vadd.f32 %v357, %v430
        %v432 = vpop.f32.mrb[0].mxu0
        %433 = vdwg.mxu0
        %434 = vmatprep.subr.mxu0 0.0
        %435 = vmatpush1.msra.mxu0 %v320
        %436 = vmatprep.subr.mxu0 0.0
        %437 = vmatpush1.msra.mxu0 %v321
        %438 = vmatprep.subr.mxu0 0.0
        %439 = vmatpush1.msra.mxu0 %v322
        %440 = vmatprep.subr.mxu0 0.0
        %441 = vmatpush1.msra.mxu0 %v323
        %442 = vmatprep.subr.mxu0 0.0
        %443 = vmatpush1.msra.mxu0 %v324
        %444 = vmatprep.subr.mxu0 0.0
        %445 = vmatpush1.msra.mxu0 %v325
        %446 = vmatprep.subr.mxu0 0.0
        %447 = vmatpush1.msra.mxu0 %v326
        %448 = vmatprep.subr.mxu0 0.0
        %449 = vmatpush1.msra.mxu0 %v327
        %450 = vmatprep.subr.mxu0 0.0
        %451 = vmatpush1.msra.mxu0 %v328
        %452 = vmatprep.subr.mxu0 0.0
        %453 = vmatpush1.msra.mxu0 %v329
        %454 = vmatprep.subr.mxu0 0.0
        %455 = vmatpush1.msra.mxu0 %v330
        %456 = vmatprep.subr.mxu0 0.0
        %457 = vmatpush1.msra.mxu0 %v331
        %458 = vmatprep.subr.mxu0 0.0
        %459 = vmatpush1.msra.mxu0 %v332
        %460 = vmatprep.subr.mxu0 0.0
        %461 = vmatpush1.msra.mxu0 %v333
        %462 = vmatprep.subr.mxu0 0.0
        %463 = vmatpush1.msra.mxu0 %v334
        %464 = vmatprep.subr.mxu0 0.0
        %465 = vmatpush1.msra.mxu0 %v335
        %466 = vmatprep.subr.mxu0 0.0
        %467 = vmatpush1.msra.mxu0 %v336
        %468 = vmatprep.subr.mxu0 0.0
        %469 = vmatpush1.msra.mxu0 %v337
        %470 = vmatprep.subr.mxu0 0.0
        %471 = vmatpush1.msra.mxu0 %v338
        %472 = vmatprep.subr.mxu0 0.0
        %473 = vmatpush1.msra.mxu0 %v339
        %474 = vmatprep.subr.mxu0 0.0
        %475 = vmatpush1.msra.mxu0 %v340
        %476 = vmatprep.subr.mxu0 0.0
        %477 = vmatpush1.msra.mxu0 %v341
        %478 = vmatprep.subr.mxu0 0.0
        %479 = vmatpush1.msra.mxu0 %v342
        %480 = vmatprep.subr.mxu0 0.0
        %481 = vmatpush1.msra.mxu0 %v343
        %482 = vmatprep.subr.mxu0 0.0
        %483 = vmatpush1.msra.mxu0 %v344
        %484 = vmatprep.subr.mxu0 0.0
        %485 = vmatpush1.msra.mxu0 %v345
        %486 = vmatprep.subr.mxu0 0.0
        %487 = vmatpush1.msra.mxu0 %v346
        %488 = vmatprep.subr.mxu0 0.0
        %489 = vmatpush1.msra.mxu0 %v347
        %490 = vmatprep.subr.mxu0 0.0
        %491 = vmatpush1.msra.mxu0 %v348
        %492 = vmatprep.subr.mxu0 0.0
        %493 = vmatpush1.msra.mxu0 %v349
        %494 = vmatprep.subr.mxu0 0.0
        %495 = vmatpush1.msra.mxu0 %v350
        %496 = vmatprep.subr.mxu0 0.0
        %497 = vmatpush1.msra.mxu0 %v351
        %498 = vmatprep.mubr.f32.mxu0 %v283
        %499 = vmatmul.mubr.f32.gmra.mrb[0].mxu0 %v282
        %v500 = vpop.f32.mrb[0].mxu0
        %v501 = vadd.f32 %v426, %v500
        %v502 = vpop.f32.mrb[0].mxu0
        %503 = vmatprep.mubr.f32.mxu0 %v287
        %504 = vmatmul.mubr.f32.gmra.mrb[0].mxu0 %v286
        %v505 = vpop.f32.mrb[0].mxu0
        %v506 = vadd.f32 %v431, %v505
        %v507 = vpop.f32.mrb[0].mxu0
        %508 = vdwg.mxu0
        %v509 = vld [vmem:[%s277] sm:$0xff]
        %v510 = vld [vmem:[%s277 + $0x8] sm:$0xff]
        %v511 = vadd.f32 %v501, %v509
        %v512 = vadd.f32 %v506, %v510
        %513 = vst [vmem:[%s255] sm:$0xff] %v511
        %514 = vst [vmem:[%s255 + $0x8] sm:$0xff] %v512
        %s515 = sand.u32 %s146, 1
        %s516 = scalar_lea.sflag [#allocation3], %s515
        %s517 = sand.u32 %s146, 1
        %s518 = smul.addr %s517, 16
        %s519 = scalar_lea.vmem [#allocation2], %s518
        // Predicated region
        $region37: #{vision_encoder_forward.15} parent=35 // pred_check
          %p520 = pneg %p156
        $region38: #{vision_encoder_forward.15} parent=35 // pred_check_branch
          %522 = sbr.rel (%p520) target = $region40
        $region39: #{vision_encoder_forward.15} parent=35 // pred_region
          %s523 = smul.u32 2, %s22
          %s525 = ssub.s32 256, 256
          %526 = vsyncadd %s516, %s525
          %s527 = sadd.s32 %s23, %s523
          %s528 = smul.addr %s527, 128
          %s529 = scalar_lea.hbm %s4, %s528
          %s530 = sshll.u32 %s519, 4
          %s531 = int_to_ptr.vmem [resolvable:$true] %s530
          %536 = dma.vmem_to_hbm [thread:$0]  %s531, 256, %s529, %s516, 128, 128, 8
        $region40: #{vision_encoder_forward.15} parent=35 // pred_fallthru
          _
      $region36: #{vision_encoder_forward.15} parent=5 // pred_fallthru
        _
      %p537 = scmp.le.s32.totalorder 2, %s13
      // Predicated region
      $region41: #{vision_encoder_forward.15} parent=5 // pred_check
        %p538 = pneg %p537
      $region42: #{vision_encoder_forward.15} parent=5 // pred_check_branch
        %540 = sbr.rel (%p538) target = $region44
      $region43: #{vision_encoder_forward.15} parent=5 // pred_region
        %s541 = ssub.s32 %s13, 2
        // Predicated region
        $region45: #{vision_encoder_forward.15} parent=43 // pred_check
          %p542 = pneg %p162
        $region46: #{vision_encoder_forward.15} parent=43 // pred_check_branch
          %544 = sbr.rel (%p542) target = $region48
        $region47: #{vision_encoder_forward.15} parent=43 // pred_region
          %s545 = sand.u32 %s147, 1
          %s546 = scalar_lea.sflag [#allocation3], %s545
          %s547 = sand.u32 %s147, 1
          %s548 = smul.addr %s547, 16
          %s549 = scalar_lea.vmem [#allocation2], %s548
          %550 = dma.done %s546, 256
        $region48: #{vision_encoder_forward.15} parent=43 // pred_fallthru
          _
      $region44: #{vision_encoder_forward.15} parent=5 // pred_fallthru
        _
    $region6: #{vision_encoder_forward.15} parent=1 // loop_footer
      %s17 = sadd.s32 1, %s13
    $region7: #{vision_encoder_forward.15} parent=1 // loop_footer_branch
      %12 = sbr.rel target = $region3
    $region8: #{vision_encoder_forward.15} parent=1 // loop_exit
      _
    %551 = vsyncpa [#allocation3], 1
    %s552 = scalar_lea.sflag [#allocation3], 1
    %553 = vsyncpa %s552, 1

</llo_original>
